<compile_context>
chip_gen: v6e
topology: v6e:2x2x1
jax: 0.10.0
libtpu: 0.0.40
codegen_flags: <defaults>
</compile_context>

<pallas_src>
import functools

import jax
import jax.numpy as jnp
import numpy as np
from jax.experimental import pallas as pl
from jax.experimental.pallas import tpu as pltpu


# ----------------------------------------------------------------------------
# Fused kernel: im2col -> encoder -> mask token -> decoder -> col2im -> L1
# ----------------------------------------------------------------------------
def _mim_fused_kernel(
    mcol_ref,    # (1, hb*Wf, 1)     coarse mask, one value per token (row order ih,wf)
    x_ref,       # (1, C, hb*s, W)   NCHW image slab
    wpe_ref,     # (s*C*s, F)        patch-embed weight, rows ordered (j, c, i)
    bpe_ref,     # (1, F)
    mtok_ref,    # (1, F)            learnable mask token
    wdec_ref,    # (F, s*C*s)        decoder 1x1-conv weight, cols ordered (j, c, i)
    bdec_ref,    # (1, s*C*s)
    xrec_ref,    # (1, C, hb*s, W)   out: reconstruction slab (NCHW)
    loss_ref,    # (1, 1, 1, 128)    out: per-(b,hr) masked-L1 partial sum
    stage_scr,   # (hb*Wf, s, C*s)   VMEM: im2col / col2im staging
    tok_scr,     # (hb*Wf, s*C*s)    VMEM: assembled token matrix
    *,
    s,
    hb,
    C,
    F,
    Wf,
):
    CS = C * s
    K = s * CS
    W = Wf * s
    M = hb * Wf

    # ---- 1) im2col: NCHW slab -> (M, K) token matrix, columns ordered (j,c,i)
    for ih in range(hb):                                  # static, layout-only (hb <= 8)
        xs = x_ref[0, :, ih * s:(ih + 1) * s, :]          # (C, s, W)
        xt = xs.reshape(CS, W).T                          # (W, CS): rows (wf,j), cols (c,i)
        stage_scr[ih * Wf:(ih + 1) * Wf] = xt.reshape(Wf, s, CS)
    for j in range(s):                                    # merge j into the K (lane) dim
        tok_scr[:, j * CS:(j + 1) * CS] = stage_scr[:, j, :]
    tok = tok_scr[...]                                    # (M, K) single dense load

    # ---- 2) encoder: ONE MXU contraction (K = s*C*s), bias added once -------
    z = jnp.dot(tok, wpe_ref[...], preferred_element_type=jnp.float32) + bpe_ref[...]

    # ---- 3) SimMIM mask-token blend ------------------------------------------
    m = mcol_ref[0]                                       # (M, 1)
    z = z * (1.0 - m) + mtok_ref[...] * m

    # ---- 4) decoder 1x1 conv: ONE MXU contraction ----------------------------
    r = jnp.dot(z, wdec_ref[...], preferred_element_type=jnp.float32) + bdec_ref[...]

    # ---- 5) masked-L1 partial sum (per grid step -> parallel-friendly) -------
    part = jnp.sum(jnp.abs(tok - r) * m)
    loss_ref[...] = jnp.full((1, 1, 1, 128), part, dtype=jnp.float32)

    # ---- 6) col2im / PixelShuffle: token layout -> NCHW slab, single store ---
    tok_scr[...] = r                                      # stage decoder output
    for j in range(s):
        stage_scr[:, j, :] = tok_scr[:, j * CS:(j + 1) * CS]
    slabs = []
    for ih in range(hb):
        rt = stage_scr[ih * Wf:(ih + 1) * Wf]             # (Wf, s, CS)
        slabs.append(rt.reshape(W, CS).T.reshape(C, s, W))
    xrec_ref[0] = jnp.concatenate(slabs, axis=1)          # (C, hb*s, W)


# ----------------------------------------------------------------------------
# Wrapper
# ----------------------------------------------------------------------------
def _pick_rows_per_step(Hf, bytes_per_patch_row, *, cap_bytes=2 << 20, max_rows=8):
    """Largest divisor of Hf whose slab stays small enough for every TPU gen."""
    best = 1
    for d in range(1, Hf + 1):
        if Hf % d == 0 and d <= max_rows and d * bytes_per_patch_row <= cap_bytes:
            best = d
    return best


def mim_forward(
    x_nchw,
    mask,
    params,
    *,
    encoder_stride=8,
    patch_size=8,
    rows_per_step=None,
):
    B, C, H, W = x_nchw.shape
    s = encoder_stride
    assert patch_size == s, "stand-in encoder assumes patch_size == encoder_stride"
    assert H % s == 0 and W % s == 0
    Hf, Wf = H // s, W // s
    F = params["w_pe"].shape[1]
    CS = C * s
    K = s * CS

    # patch-rows per grid step: bounded so (x + x_rec) slabs with double
    # buffering stay well under the scoped VMEM limit on v5e/v6e/v7x.
    if rows_per_step is None:
        hb = _pick_rows_per_step(Hf, C * s * W * 4)
    else:
        hb = rows_per_step
    assert Hf % hb == 0
    HR = Hf // hb

    x = x_nchw.astype(jnp.float32)
    maskf = mask.astype(jnp.float32)

    # One-time tiny weight reorders (token column order is (j, c, i)).
    # PyTorch conv-weight flattening convention: k = c*s*s + i*s + j.
    w_pe = params["w_pe"].astype(jnp.float32)
    wpe_flat = w_pe.reshape(C, s, s, F).transpose(2, 0, 1, 3).reshape(K, F)
    bpe = params["b_pe"].astype(jnp.float32).reshape(1, F)
    mtok = params["mask_token"].astype(jnp.float32).reshape(1, F)
    w_dec = params["w_dec"].astype(jnp.float32)
    wdec_flat = w_dec.reshape(F, C, s, s).transpose(0, 3, 1, 2).reshape(F, K)
    bdec_flat = (
        params["b_dec"].astype(jnp.float32)
        .reshape(C, s, s).transpose(2, 0, 1).reshape(1, K)
    )

    # Coarse mask as one tiny per-step column (token-row order (ih, wf)); the
    # full-resolution broadcast mask never goes through the kernel.
    mask_col = maskf.reshape(B * HR, hb * Wf, 1)

    kernel = functools.partial(_mim_fused_kernel, s=s, hb=hb, C=C, F=F, Wf=Wf)

    flops = 4 * B * Hf * Wf * K * F  # encoder + decoder matmuls
    bytes_accessed = (2 * x.size + mask_col.size + wpe_flat.size
                      + wdec_flat.size + B * HR * 128) * 4
    cost = pl.CostEstimate(
        flops=int(flops), transcendentals=0, bytes_accessed=int(bytes_accessed)
    )

    x_rec, loss_parts = pl.pallas_call(
        kernel,
        out_shape=(
            jax.ShapeDtypeStruct((B, C, H, W), jnp.float32),
            jax.ShapeDtypeStruct((B, HR, 1, 128), jnp.float32),
        ),
        grid=(B, HR),
        in_specs=[
            pl.BlockSpec((1, hb * Wf, 1), lambda b, hr: (b * HR + hr, 0, 0)),
            pl.BlockSpec((1, C, hb * s, W), lambda b, hr: (b, 0, hr, 0)),
            pl.BlockSpec((K, F), lambda b, hr: (0, 0)),      # resident weights
            pl.BlockSpec((1, F), lambda b, hr: (0, 0)),      # resident
            pl.BlockSpec((1, F), lambda b, hr: (0, 0)),      # resident
            pl.BlockSpec((F, K), lambda b, hr: (0, 0)),      # resident
            pl.BlockSpec((1, K), lambda b, hr: (0, 0)),      # resident
        ],
        out_specs=(
            pl.BlockSpec((1, C, hb * s, W), lambda b, hr: (b, 0, hr, 0)),
            pl.BlockSpec((1, 1, 1, 128), lambda b, hr: (b, hr, 0, 0)),
        ),
        scratch_shapes=[
            pltpu.VMEM((hb * Wf, s, CS), jnp.float32),
            pltpu.VMEM((hb * Wf, K), jnp.float32),
        ],
        compiler_params=pltpu.CompilerParams(
            # no cross-step state any more -> both axes can be megacore-sharded
            dimension_semantics=("parallel", "parallel"),
            vmem_limit_bytes=32 * 1024 * 1024,
        ),
        cost_estimate=cost,
    )(mask_col, x, wpe_flat, bpe, mtok, wdec_flat, bdec_flat)

    loss_sum = jnp.sum(loss_parts[:, :, 0, 0])
    denom = jnp.sum(maskf) * float(patch_size * patch_size) + 1e-5
    loss = loss_sum / denom / C

    # Full-resolution mask returned by the module: trivial XLA broadcast,
    # deliberately kept out of the kernel to cut kernel store traffic.
    mask_out = jnp.repeat(
        jnp.repeat(maskf, patch_size, axis=1), patch_size, axis=2
    )[:, None, :, :]
    return loss, x_rec, mask_out


# ----------------------------------------------------------------------------
# Pure-JAX reference (mirrors the PyTorch module with the stand-in encoder)
# ----------------------------------------------------------------------------
def mim_reference(x, mask, params, *, encoder_stride=8):
    s = encoder_stride
    B, C, H, W = x.shape
    Hf, Wf = H // s, W // s
    p = (
        x.reshape(B, C, Hf, s, Wf, s)
        .transpose(0, 2, 4, 1, 3, 5)
        .reshape(B, Hf, Wf, C * s * s)
    )
    z = p @ params["w_pe"] + params["b_pe"]
    m = mask[..., None]
    z = z * (1.0 - m) + params["mask_token"][None, None, None, :] * m
    y = z @ params["w_dec"] + params["b_dec"]
    y = y.reshape(B, Hf, Wf, C, s, s)
    x_rec = y.transpose(0, 3, 1, 4, 2, 5).reshape(B, C, H, W)
    mask_up = jnp.repeat(jnp.repeat(mask, s, axis=1), s, axis=2)[:, None, :, :]
    loss = (jnp.abs(x - x_rec) * mask_up).sum() / (mask_up.sum() + 1e-5) / C
    return loss, x_rec, mask_up


# ----------------------------------------------------------------------------
# Deterministic parameter init
# ----------------------------------------------------------------------------
def init_params(key, *, encoder_stride=8, in_chans=3, num_features=32):
    s = encoder_stride
    k1, k2, k3, k4 = jax.random.split(key, 4)
    return {
        # patch-embed conv weight, rows ordered like PyTorch Conv2d weight
        # (F, C, s, s) flattened: k = c*s*s + i*s + j
        "w_pe": jax.random.normal(k1, (s * s * in_chans, num_features), jnp.float32) * 0.02,
        "b_pe": jnp.zeros((num_features,), jnp.float32),
        "mask_token": jax.random.normal(k2, (num_features,), jnp.float32) * 0.02,
        # decoder 1x1 conv: cols ordered (c, i, j) to match PixelShuffle
        "w_dec": jax.random.normal(k3, (num_features, s * s * in_chans), jnp.float32) * 0.02,
        "b_dec": jax.random.normal(k4, (s * s * in_chans,), jnp.float32) * 0.01,
    }


if __name__ == "__main__":
    B, C, H, W = 2, 3, 32, 32
    s = 8
    num_features = 32
    Hf, Wf = H // s, W // s

    key = jax.random.PRNGKey(0)
    kx, km, kp = jax.random.split(key, 3)
    x = jax.random.normal(kx, (B, C, H, W), jnp.float32)
    mask = (jax.random.uniform(km, (B, Hf, Wf)) < 0.5).astype(jnp.float32)
    params = init_params(kp, encoder_stride=s, in_chans=C, num_features=num_features)

    fwd = jax.jit(functools.partial(mim_forward, encoder_stride=s, patch_size=8))
    loss, x_rec, mask_out = fwd(x, mask, params)
    jax.block_until_ready((loss, x_rec, mask_out))

    # correctness check against a pure-JAX reference (loose tol: MXU f32 paths)
    loss_r, xrec_r, mask_r = mim_reference(x, mask, params, encoder_stride=s)
    np.testing.assert_allclose(np.asarray(x_rec), np.asarray(xrec_r), rtol=2e-2, atol=2e-3)
    np.testing.assert_allclose(np.asarray(mask_out), np.asarray(mask_r), rtol=0, atol=0)
    np.testing.assert_allclose(float(loss), float(loss_r), rtol=2e-2, atol=1e-4)

    assert x_rec.shape == (B, C, H, W)
    assert mask_out.shape == (B, 1, H, W)
    assert loss.shape == ()
    print("KERNEL_OK")
</pallas_src>

<mosaic_0001>
module attributes {stable_mosaic.version = 11 : i64} {
  func.func @_mim_fused_kernel(%arg0: i32, %arg1: i32, %arg2: memref<1x16x1xf32, #tpu.memory_space<vmem>>, %arg3: memref<1x3x32x32xf32, #tpu.memory_space<vmem>>, %arg4: memref<192x32xf32, #tpu.memory_space<vmem>>, %arg5: memref<1x32xf32, #tpu.memory_space<vmem>>, %arg6: memref<1x32xf32, #tpu.memory_space<vmem>>, %arg7: memref<32x192xf32, #tpu.memory_space<vmem>>, %arg8: memref<1x192xf32, #tpu.memory_space<vmem>>, %arg9: memref<1x3x32x32xf32, #tpu.memory_space<vmem>>, %arg10: memref<1x1x1x128xf32, #tpu.memory_space<vmem>>, %arg11: memref<16x8x24xf32, #tpu.memory_space<vmem>>, %arg12: memref<16x192xf32, #tpu.memory_space<vmem>>) attributes {dimension_semantics = [#tpu.dimension_semantics<parallel>, #tpu.dimension_semantics<parallel>], iteration_bounds = array<i64: 2, 1>, scalar_prefetch = 0 : i64, scratch_operands = 2 : i64, tpu.core_type = #tpu.core_type<tc>, window_params = [{transform_indices = @transform_0, window_bounds = array<i64: 1, 16, 1>}, {transform_indices = @transform_1, window_bounds = array<i64: 1, 3, 32, 32>}, {pipeline_mode = #tpu.pipeline_mode<synchronous>, transform_indices = @transform_2, window_bounds = array<i64: 192, 32>}, {pipeline_mode = #tpu.pipeline_mode<synchronous>, transform_indices = @transform_3, window_bounds = array<i64: 1, 32>}, {pipeline_mode = #tpu.pipeline_mode<synchronous>, transform_indices = @transform_4, window_bounds = array<i64: 1, 32>}, {pipeline_mode = #tpu.pipeline_mode<synchronous>, transform_indices = @transform_5, window_bounds = array<i64: 32, 192>}, {pipeline_mode = #tpu.pipeline_mode<synchronous>, transform_indices = @transform_6, window_bounds = array<i64: 1, 192>}, {transform_indices = @transform_7, window_bounds = array<i64: 1, 3, 32, 32>}, {transform_indices = @transform_8, window_bounds = array<i64: 1, 1, 1, 128>}]} {
    %c0 = arith.constant 0 : index
    %c0_0 = arith.constant 0 : index
    %c0_1 = arith.constant 0 : index
    %c0_2 = arith.constant 0 : index
    %0 = vector.load %arg3[%c0, %c0_0, %c0_1, %c0_2] : memref<1x3x32x32xf32, #tpu.memory_space<vmem>>, vector<1x3x8x32xf32>
    %1 = vector.shape_cast %0 : vector<1x3x8x32xf32> to vector<3x8x32xf32>
    %2 = vector.shape_cast %1 : vector<3x8x32xf32> to vector<24x32xf32>
    %3 = tpu.transpose %2, [1, 0] : vector<24x32xf32> -> vector<32x24xf32>
    %4 = vector.shape_cast %3 : vector<32x24xf32> to vector<4x8x24xf32>
    %c0_3 = arith.constant 0 : index
    %c0_4 = arith.constant 0 : index
    %c0_5 = arith.constant 0 : index
    %5 = vector.load %arg11[%c0_3, %c0_4, %c0_5] : memref<16x8x24xf32, #tpu.memory_space<vmem>>, vector<4x8x24xf32>
    tpu.vector_store %arg11[%c0_3, %c0_4, %c0_5], %4 {strides = array<i32>} : memref<16x8x24xf32, #tpu.memory_space<vmem>>, vector<4x8x24xf32>,
    %c0_6 = arith.constant 0 : index
    %c0_7 = arith.constant 0 : index
    %c8 = arith.constant 8 : index
    %c0_8 = arith.constant 0 : index
    %6 = vector.load %arg3[%c0_6, %c0_7, %c8, %c0_8] : memref<1x3x32x32xf32, #tpu.memory_space<vmem>>, vector<1x3x8x32xf32>
    %7 = vector.shape_cast %6 : vector<1x3x8x32xf32> to vector<3x8x32xf32>
    %8 = vector.shape_cast %7 : vector<3x8x32xf32> to vector<24x32xf32>
    %9 = tpu.transpose %8, [1, 0] : vector<24x32xf32> -> vector<32x24xf32>
    %10 = vector.shape_cast %9 : vector<32x24xf32> to vector<4x8x24xf32>
    %c4 = arith.constant 4 : index
    %c0_9 = arith.constant 0 : index
    %c0_10 = arith.constant 0 : index
    %11 = vector.load %arg11[%c4, %c0_9, %c0_10] : memref<16x8x24xf32, #tpu.memory_space<vmem>>, vector<4x8x24xf32>
    tpu.vector_store %arg11[%c4, %c0_9, %c0_10], %10 {strides = array<i32>} : memref<16x8x24xf32, #tpu.memory_space<vmem>>, vector<4x8x24xf32>,
    %c0_11 = arith.constant 0 : index
    %c0_12 = arith.constant 0 : index
    %c16 = arith.constant 16 : index
    %c0_13 = arith.constant 0 : index
    %12 = vector.load %arg3[%c0_11, %c0_12, %c16, %c0_13] : memref<1x3x32x32xf32, #tpu.memory_space<vmem>>, vector<1x3x8x32xf32>
    %13 = vector.shape_cast %12 : vector<1x3x8x32xf32> to vector<3x8x32xf32>
    %14 = vector.shape_cast %13 : vector<3x8x32xf32> to vector<24x32xf32>
    %15 = tpu.transpose %14, [1, 0] : vector<24x32xf32> -> vector<32x24xf32>
    %16 = vector.shape_cast %15 : vector<32x24xf32> to vector<4x8x24xf32>
    %c8_14 = arith.constant 8 : index
    %c0_15 = arith.constant 0 : index
    %c0_16 = arith.constant 0 : index
    %17 = vector.load %arg11[%c8_14, %c0_15, %c0_16] : memref<16x8x24xf32, #tpu.memory_space<vmem>>, vector<4x8x24xf32>
    tpu.vector_store %arg11[%c8_14, %c0_15, %c0_16], %16 {strides = array<i32>} : memref<16x8x24xf32, #tpu.memory_space<vmem>>, vector<4x8x24xf32>,
    %c0_17 = arith.constant 0 : index
    %c0_18 = arith.constant 0 : index
    %c24 = arith.constant 24 : index
    %c0_19 = arith.constant 0 : index
    %18 = vector.load %arg3[%c0_17, %c0_18, %c24, %c0_19] : memref<1x3x32x32xf32, #tpu.memory_space<vmem>>, vector<1x3x8x32xf32>
    %19 = vector.shape_cast %18 : vector<1x3x8x32xf32> to vector<3x8x32xf32>
    %20 = vector.shape_cast %19 : vector<3x8x32xf32> to vector<24x32xf32>
    %21 = tpu.transpose %20, [1, 0] : vector<24x32xf32> -> vector<32x24xf32>
    %22 = vector.shape_cast %21 : vector<32x24xf32> to vector<4x8x24xf32>
    %c12 = arith.constant 12 : index
    %c0_20 = arith.constant 0 : index
    %c0_21 = arith.constant 0 : index
    %23 = vector.load %arg11[%c12, %c0_20, %c0_21] : memref<16x8x24xf32, #tpu.memory_space<vmem>>, vector<4x8x24xf32>
    tpu.vector_store %arg11[%c12, %c0_20, %c0_21], %22 {strides = array<i32>} : memref<16x8x24xf32, #tpu.memory_space<vmem>>, vector<4x8x24xf32>,
    %c0_22 = arith.constant 0 : index
    %c0_23 = arith.constant 0 : index
    %c0_24 = arith.constant 0 : index
    %24 = vector.load %arg11[%c0_22, %c0_23, %c0_24] : memref<16x8x24xf32, #tpu.memory_space<vmem>>, vector<16x1x24xf32>
    %25 = vector.shape_cast %24 : vector<16x1x24xf32> to vector<16x24xf32>
    %c0_25 = arith.constant 0 : index
    %c0_26 = arith.constant 0 : index
    %26 = vector.load %arg12[%c0_25, %c0_26] : memref<16x192xf32, #tpu.memory_space<vmem>>, vector<16x24xf32>
    tpu.vector_store %arg12[%c0_25, %c0_26], %25 {strides = array<i32>} : memref<16x192xf32, #tpu.memory_space<vmem>>, vector<16x24xf32>,
    %c0_27 = arith.constant 0 : index
    %c1 = arith.constant 1 : index
    %c0_28 = arith.constant 0 : index
    %27 = vector.load %arg11[%c0_27, %c1, %c0_28] : memref<16x8x24xf32, #tpu.memory_space<vmem>>, vector<16x1x24xf32>
    %28 = vector.shape_cast %27 : vector<16x1x24xf32> to vector<16x24xf32>
    %c0_29 = arith.constant 0 : index
    %c24_30 = arith.constant 24 : index
    %29 = vector.load %arg12[%c0_29, %c24_30] : memref<16x192xf32, #tpu.memory_space<vmem>>, vector<16x24xf32>
    tpu.vector_store %arg12[%c0_29, %c24_30], %28 {strides = array<i32>} : memref<16x192xf32, #tpu.memory_space<vmem>>, vector<16x24xf32>,
    %c0_31 = arith.constant 0 : index
    %c2 = arith.constant 2 : index
    %c0_32 = arith.constant 0 : index
    %30 = vector.load %arg11[%c0_31, %c2, %c0_32] : memref<16x8x24xf32, #tpu.memory_space<vmem>>, vector<16x1x24xf32>
    %31 = vector.shape_cast %30 : vector<16x1x24xf32> to vector<16x24xf32>
    %c0_33 = arith.constant 0 : index
    %c48 = arith.constant 48 : index
    %32 = vector.load %arg12[%c0_33, %c48] : memref<16x192xf32, #tpu.memory_space<vmem>>, vector<16x24xf32>
    tpu.vector_store %arg12[%c0_33, %c48], %31 {strides = array<i32>} : memref<16x192xf32, #tpu.memory_space<vmem>>, vector<16x24xf32>,
    %c0_34 = arith.constant 0 : index
    %c3 = arith.constant 3 : index
    %c0_35 = arith.constant 0 : index
    %33 = vector.load %arg11[%c0_34, %c3, %c0_35] : memref<16x8x24xf32, #tpu.memory_space<vmem>>, vector<16x1x24xf32>
    %34 = vector.shape_cast %33 : vector<16x1x24xf32> to vector<16x24xf32>
    %c0_36 = arith.constant 0 : index
    %c72 = arith.constant 72 : index
    %35 = vector.load %arg12[%c0_36, %c72] : memref<16x192xf32, #tpu.memory_space<vmem>>, vector<16x24xf32>
    tpu.vector_store %arg12[%c0_36, %c72], %34 {strides = array<i32>} : memref<16x192xf32, #tpu.memory_space<vmem>>, vector<16x24xf32>,
    %c0_37 = arith.constant 0 : index
    %c4_38 = arith.constant 4 : index
    %c0_39 = arith.constant 0 : index
    %36 = vector.load %arg11[%c0_37, %c4_38, %c0_39] : memref<16x8x24xf32, #tpu.memory_space<vmem>>, vector<16x1x24xf32>
    %37 = vector.shape_cast %36 : vector<16x1x24xf32> to vector<16x24xf32>
    %c0_40 = arith.constant 0 : index
    %c96 = arith.constant 96 : index
    %38 = vector.load %arg12[%c0_40, %c96] : memref<16x192xf32, #tpu.memory_space<vmem>>, vector<16x24xf32>
    tpu.vector_store %arg12[%c0_40, %c96], %37 {strides = array<i32>} : memref<16x192xf32, #tpu.memory_space<vmem>>, vector<16x24xf32>,
    %c0_41 = arith.constant 0 : index
    %c5 = arith.constant 5 : index
    %c0_42 = arith.constant 0 : index
    %39 = vector.load %arg11[%c0_41, %c5, %c0_42] : memref<16x8x24xf32, #tpu.memory_space<vmem>>, vector<16x1x24xf32>
    %40 = vector.shape_cast %39 : vector<16x1x24xf32> to vector<16x24xf32>
    %c0_43 = arith.constant 0 : index
    %c120 = arith.constant 120 : index
    %41 = vector.load %arg12[%c0_43, %c120] : memref<16x192xf32, #tpu.memory_space<vmem>>, vector<16x24xf32>
    tpu.vector_store %arg12[%c0_43, %c120], %40 {strides = array<i32>} : memref<16x192xf32, #tpu.memory_space<vmem>>, vector<16x24xf32>,
    %c0_44 = arith.constant 0 : index
    %c6 = arith.constant 6 : index
    %c0_45 = arith.constant 0 : index
    %42 = vector.load %arg11[%c0_44, %c6, %c0_45] : memref<16x8x24xf32, #tpu.memory_space<vmem>>, vector<16x1x24xf32>
    %43 = vector.shape_cast %42 : vector<16x1x24xf32> to vector<16x24xf32>
    %c0_46 = arith.constant 0 : index
    %c144 = arith.constant 144 : index
    %44 = vector.load %arg12[%c0_46, %c144] : memref<16x192xf32, #tpu.memory_space<vmem>>, vector<16x24xf32>
    tpu.vector_store %arg12[%c0_46, %c144], %43 {strides = array<i32>} : memref<16x192xf32, #tpu.memory_space<vmem>>, vector<16x24xf32>,
    %c0_47 = arith.constant 0 : index
    %c7 = arith.constant 7 : index
    %c0_48 = arith.constant 0 : index
    %45 = vector.load %arg11[%c0_47, %c7, %c0_48] : memref<16x8x24xf32, #tpu.memory_space<vmem>>, vector<16x1x24xf32>
    %46 = vector.shape_cast %45 : vector<16x1x24xf32> to vector<16x24xf32>
    %c0_49 = arith.constant 0 : index
    %c168 = arith.constant 168 : index
    %47 = vector.load %arg12[%c0_49, %c168] : memref<16x192xf32, #tpu.memory_space<vmem>>, vector<16x24xf32>
    tpu.vector_store %arg12[%c0_49, %c168], %46 {strides = array<i32>} : memref<16x192xf32, #tpu.memory_space<vmem>>, vector<16x24xf32>,
    %c0_50 = arith.constant 0 : index
    %c0_51 = arith.constant 0 : index
    %48 = vector.load %arg12[%c0_50, %c0_51] : memref<16x192xf32, #tpu.memory_space<vmem>>, vector<16x192xf32>
    %c0_52 = arith.constant 0 : index
    %c0_53 = arith.constant 0 : index
    %49 = vector.load %arg4[%c0_52, %c0_53] : memref<192x32xf32, #tpu.memory_space<vmem>>, vector<192x32xf32>
    %cst = arith.constant dense<0.000000e+00> : vector<16x32xf32>
    %50 = tpu.matmul %48, %49, %cst {dimension_numbers = #tpu.dot_dimension_numbers<[1], [0], [0], [1], [0, 0, 1, 1], [], []>} : vector<16x192xf32>, vector<192x32xf32>, vector<16x32xf32> -> vector<16x32xf32>
    %c0_54 = arith.constant 0 : index
    %c0_55 = arith.constant 0 : index
    %51 = vector.load %arg5[%c0_54, %c0_55] : memref<1x32xf32, #tpu.memory_space<vmem>>, vector<1x32xf32>
    %52 = vector.broadcast %51 : vector<1x32xf32> to vector<16x32xf32>
    %53 = arith.addf %50, %52 : vector<16x32xf32>
    %c0_56 = arith.constant 0 : index
    %c0_57 = arith.constant 0 : index
    %c0_58 = arith.constant 0 : index
    %54 = vector.load %arg2[%c0_56, %c0_57, %c0_58] : memref<1x16x1xf32, #tpu.memory_space<vmem>>, vector<1x16x1xf32>
    %55 = vector.shape_cast %54 : vector<1x16x1xf32> to vector<16x1xf32>
    %cst_59 = arith.constant 1.000000e+00 : f32
    %56 = vector.broadcast %cst_59 : f32 to vector<16x1xf32>
    %57 = arith.subf %56, %55 : vector<16x1xf32>
    %58 = vector.broadcast %57 : vector<16x1xf32> to vector<16x32xf32>
    %59 = arith.mulf %53, %58 : vector<16x32xf32>
    %c0_60 = arith.constant 0 : index
    %c0_61 = arith.constant 0 : index
    %60 = vector.load %arg6[%c0_60, %c0_61] : memref<1x32xf32, #tpu.memory_space<vmem>>, vector<1x32xf32>
    %61 = vector.broadcast %60 : vector<1x32xf32> to vector<16x32xf32>
    %62 = vector.broadcast %55 : vector<16x1xf32> to vector<16x32xf32>
    %63 = arith.mulf %61, %62 : vector<16x32xf32>
    %64 = arith.addf %59, %63 : vector<16x32xf32>
    %c0_62 = arith.constant 0 : index
    %c0_63 = arith.constant 0 : index
    %65 = vector.load %arg7[%c0_62, %c0_63] : memref<32x192xf32, #tpu.memory_space<vmem>>, vector<32x192xf32>
    %cst_64 = arith.constant dense<0.000000e+00> : vector<16x192xf32>
    %66 = tpu.matmul %64, %65, %cst_64 {dimension_numbers = #tpu.dot_dimension_numbers<[1], [0], [0], [1], [0, 0, 1, 1], [], []>} : vector<16x32xf32>, vector<32x192xf32>, vector<16x192xf32> -> vector<16x192xf32>
    %c0_65 = arith.constant 0 : index
    %c0_66 = arith.constant 0 : index
    %67 = vector.load %arg8[%c0_65, %c0_66] : memref<1x192xf32, #tpu.memory_space<vmem>>, vector<1x192xf32>
    %68 = vector.broadcast %67 : vector<1x192xf32> to vector<16x192xf32>
    %69 = arith.addf %66, %68 : vector<16x192xf32>
    %70 = arith.subf %48, %69 : vector<16x192xf32>
    %71 = math.absf %70 : vector<16x192xf32>
    %72 = vector.broadcast %55 : vector<16x1xf32> to vector<16x192xf32>
    %73 = arith.mulf %71, %72 : vector<16x192xf32>
    %74 = vector.shape_cast %73 : vector<16x192xf32> to vector<1x16x192xf32>
    %cst_67 = arith.constant dense<0.000000e+00> : vector<1xf32>
    %75 = vector.multi_reduction <add>, %74, %cst_67 [1, 2] : vector<1x16x192xf32> to vector<1xf32>
    %76 = vector.shape_cast %75 : vector<1xf32> to vector<1x1x1xf32>
    %77 = vector.extract %76[0, 0, 0] : f32 from vector<1x1x1xf32>
    %78 = vector.broadcast %77 : f32 to vector<1x1x1x128xf32>
    %c0_68 = arith.constant 0 : index
    %c0_69 = arith.constant 0 : index
    %c0_70 = arith.constant 0 : index
    %c0_71 = arith.constant 0 : index
    %79 = vector.load %arg10[%c0_68, %c0_69, %c0_70, %c0_71] : memref<1x1x1x128xf32, #tpu.memory_space<vmem>>, vector<1x1x1x128xf32>
    tpu.vector_store %arg10[%c0_68, %c0_69, %c0_70, %c0_71], %78 {strides = array<i32>} : memref<1x1x1x128xf32, #tpu.memory_space<vmem>>, vector<1x1x1x128xf32>,
    %c0_72 = arith.constant 0 : index
    %c0_73 = arith.constant 0 : index
    %80 = vector.load %arg12[%c0_72, %c0_73] : memref<16x192xf32, #tpu.memory_space<vmem>>, vector<16x192xf32>
    tpu.vector_store %arg12[%c0_72, %c0_73], %69 {strides = array<i32>} : memref<16x192xf32, #tpu.memory_space<vmem>>, vector<16x192xf32>,
    %c0_74 = arith.constant 0 : index
    %c0_75 = arith.constant 0 : index
    %81 = vector.load %arg12[%c0_74, %c0_75] : memref<16x192xf32, #tpu.memory_space<vmem>>, vector<16x24xf32>
    %c0_76 = arith.constant 0 : index
    %c0_77 = arith.constant 0 : index
    %c0_78 = arith.constant 0 : index
    %82 = vector.load %arg11[%c0_76, %c0_77, %c0_78] : memref<16x8x24xf32, #tpu.memory_space<vmem>>, vector<16x1x24xf32>
    %83 = vector.shape_cast %82 : vector<16x1x24xf32> to vector<16x24xf32>
    %84 = vector.shape_cast %81 : vector<16x24xf32> to vector<16x1x24xf32>
    tpu.vector_store %arg11[%c0_76, %c0_77, %c0_78], %84 {strides = array<i32>} : memref<16x8x24xf32, #tpu.memory_space<vmem>>, vector<16x1x24xf32>,
    %c0_79 = arith.constant 0 : index
    %c24_80 = arith.constant 24 : index
    %85 = vector.load %arg12[%c0_79, %c24_80] : memref<16x192xf32, #tpu.memory_space<vmem>>, vector<16x24xf32>
    %c0_81 = arith.constant 0 : index
    %c1_82 = arith.constant 1 : index
    %c0_83 = arith.constant 0 : index
    %86 = vector.load %arg11[%c0_81, %c1_82, %c0_83] : memref<16x8x24xf32, #tpu.memory_space<vmem>>, vector<16x1x24xf32>
    %87 = vector.shape_cast %86 : vector<16x1x24xf32> to vector<16x24xf32>
    %88 = vector.shape_cast %85 : vector<16x24xf32> to vector<16x1x24xf32>
    tpu.vector_store %arg11[%c0_81, %c1_82, %c0_83], %88 {strides = array<i32>} : memref<16x8x24xf32, #tpu.memory_space<vmem>>, vector<16x1x24xf32>,
    %c0_84 = arith.constant 0 : index
    %c48_85 = arith.constant 48 : index
    %89 = vector.load %arg12[%c0_84, %c48_85] : memref<16x192xf32, #tpu.memory_space<vmem>>, vector<16x24xf32>
    %c0_86 = arith.constant 0 : index
    %c2_87 = arith.constant 2 : index
    %c0_88 = arith.constant 0 : index
    %90 = vector.load %arg11[%c0_86, %c2_87, %c0_88] : memref<16x8x24xf32, #tpu.memory_space<vmem>>, vector<16x1x24xf32>
    %91 = vector.shape_cast %90 : vector<16x1x24xf32> to vector<16x24xf32>
    %92 = vector.shape_cast %89 : vector<16x24xf32> to vector<16x1x24xf32>
    tpu.vector_store %arg11[%c0_86, %c2_87, %c0_88], %92 {strides = array<i32>} : memref<16x8x24xf32, #tpu.memory_space<vmem>>, vector<16x1x24xf32>,
    %c0_89 = arith.constant 0 : index
    %c72_90 = arith.constant 72 : index
    %93 = vector.load %arg12[%c0_89, %c72_90] : memref<16x192xf32, #tpu.memory_space<vmem>>, vector<16x24xf32>
    %c0_91 = arith.constant 0 : index
    %c3_92 = arith.constant 3 : index
    %c0_93 = arith.constant 0 : index
    %94 = vector.load %arg11[%c0_91, %c3_92, %c0_93] : memref<16x8x24xf32, #tpu.memory_space<vmem>>, vector<16x1x24xf32>
    %95 = vector.shape_cast %94 : vector<16x1x24xf32> to vector<16x24xf32>
    %96 = vector.shape_cast %93 : vector<16x24xf32> to vector<16x1x24xf32>
    tpu.vector_store %arg11[%c0_91, %c3_92, %c0_93], %96 {strides = array<i32>} : memref<16x8x24xf32, #tpu.memory_space<vmem>>, vector<16x1x24xf32>,
    %c0_94 = arith.constant 0 : index
    %c96_95 = arith.constant 96 : index
    %97 = vector.load %arg12[%c0_94, %c96_95] : memref<16x192xf32, #tpu.memory_space<vmem>>, vector<16x24xf32>
    %c0_96 = arith.constant 0 : index
    %c4_97 = arith.constant 4 : index
    %c0_98 = arith.constant 0 : index
    %98 = vector.load %arg11[%c0_96, %c4_97, %c0_98] : memref<16x8x24xf32, #tpu.memory_space<vmem>>, vector<16x1x24xf32>
    %99 = vector.shape_cast %98 : vector<16x1x24xf32> to vector<16x24xf32>
    %100 = vector.shape_cast %97 : vector<16x24xf32> to vector<16x1x24xf32>
    tpu.vector_store %arg11[%c0_96, %c4_97, %c0_98], %100 {strides = array<i32>} : memref<16x8x24xf32, #tpu.memory_space<vmem>>, vector<16x1x24xf32>,
    %c0_99 = arith.constant 0 : index
    %c120_100 = arith.constant 120 : index
    %101 = vector.load %arg12[%c0_99, %c120_100] : memref<16x192xf32, #tpu.memory_space<vmem>>, vector<16x24xf32>
    %c0_101 = arith.constant 0 : index
    %c5_102 = arith.constant 5 : index
    %c0_103 = arith.constant 0 : index
    %102 = vector.load %arg11[%c0_101, %c5_102, %c0_103] : memref<16x8x24xf32, #tpu.memory_space<vmem>>, vector<16x1x24xf32>
    %103 = vector.shape_cast %102 : vector<16x1x24xf32> to vector<16x24xf32>
    %104 = vector.shape_cast %101 : vector<16x24xf32> to vector<16x1x24xf32>
    tpu.vector_store %arg11[%c0_101, %c5_102, %c0_103], %104 {strides = array<i32>} : memref<16x8x24xf32, #tpu.memory_space<vmem>>, vector<16x1x24xf32>,
    %c0_104 = arith.constant 0 : index
    %c144_105 = arith.constant 144 : index
    %105 = vector.load %arg12[%c0_104, %c144_105] : memref<16x192xf32, #tpu.memory_space<vmem>>, vector<16x24xf32>
    %c0_106 = arith.constant 0 : index
    %c6_107 = arith.constant 6 : index
    %c0_108 = arith.constant 0 : index
    %106 = vector.load %arg11[%c0_106, %c6_107, %c0_108] : memref<16x8x24xf32, #tpu.memory_space<vmem>>, vector<16x1x24xf32>
    %107 = vector.shape_cast %106 : vector<16x1x24xf32> to vector<16x24xf32>
    %108 = vector.shape_cast %105 : vector<16x24xf32> to vector<16x1x24xf32>
    tpu.vector_store %arg11[%c0_106, %c6_107, %c0_108], %108 {strides = array<i32>} : memref<16x8x24xf32, #tpu.memory_space<vmem>>, vector<16x1x24xf32>,
    %c0_109 = arith.constant 0 : index
    %c168_110 = arith.constant 168 : index
    %109 = vector.load %arg12[%c0_109, %c168_110] : memref<16x192xf32, #tpu.memory_space<vmem>>, vector<16x24xf32>
    %c0_111 = arith.constant 0 : index
    %c7_112 = arith.constant 7 : index
    %c0_113 = arith.constant 0 : index
    %110 = vector.load %arg11[%c0_111, %c7_112, %c0_113] : memref<16x8x24xf32, #tpu.memory_space<vmem>>, vector<16x1x24xf32>
    %111 = vector.shape_cast %110 : vector<16x1x24xf32> to vector<16x24xf32>
    %112 = vector.shape_cast %109 : vector<16x24xf32> to vector<16x1x24xf32>
    tpu.vector_store %arg11[%c0_111, %c7_112, %c0_113], %112 {strides = array<i32>} : memref<16x8x24xf32, #tpu.memory_space<vmem>>, vector<16x1x24xf32>,
    %c0_114 = arith.constant 0 : index
    %c0_115 = arith.constant 0 : index
    %c0_116 = arith.constant 0 : index
    %113 = vector.load %arg11[%c0_114, %c0_115, %c0_116] : memref<16x8x24xf32, #tpu.memory_space<vmem>>, vector<4x8x24xf32>
    %114 = vector.shape_cast %113 : vector<4x8x24xf32> to vector<32x24xf32>
    %115 = tpu.transpose %114, [1, 0] : vector<32x24xf32> -> vector<24x32xf32>
    %116 = vector.shape_cast %115 : vector<24x32xf32> to vector<3x8x32xf32>
    %c4_117 = arith.constant 4 : index
    %c0_118 = arith.constant 0 : index
    %c0_119 = arith.constant 0 : index
    %117 = vector.load %arg11[%c4_117, %c0_118, %c0_119] : memref<16x8x24xf32, #tpu.memory_space<vmem>>, vector<4x8x24xf32>
    %118 = vector.shape_cast %117 : vector<4x8x24xf32> to vector<32x24xf32>
    %119 = tpu.transpose %118, [1, 0] : vector<32x24xf32> -> vector<24x32xf32>
    %120 = vector.shape_cast %119 : vector<24x32xf32> to vector<3x8x32xf32>
    %c8_120 = arith.constant 8 : index
    %c0_121 = arith.constant 0 : index
    %c0_122 = arith.constant 0 : index
    %121 = vector.load %arg11[%c8_120, %c0_121, %c0_122] : memref<16x8x24xf32, #tpu.memory_space<vmem>>, vector<4x8x24xf32>
    %122 = vector.shape_cast %121 : vector<4x8x24xf32> to vector<32x24xf32>
    %123 = tpu.transpose %122, [1, 0] : vector<32x24xf32> -> vector<24x32xf32>
    %124 = vector.shape_cast %123 : vector<24x32xf32> to vector<3x8x32xf32>
    %c12_123 = arith.constant 12 : index
    %c0_124 = arith.constant 0 : index
    %c0_125 = arith.constant 0 : index
    %125 = vector.load %arg11[%c12_123, %c0_124, %c0_125] : memref<16x8x24xf32, #tpu.memory_space<vmem>>, vector<4x8x24xf32>
    %126 = vector.shape_cast %125 : vector<4x8x24xf32> to vector<32x24xf32>
    %127 = tpu.transpose %126, [1, 0] : vector<32x24xf32> -> vector<24x32xf32>
    %128 = vector.shape_cast %127 : vector<24x32xf32> to vector<3x8x32xf32>
    %129 = tpu.concatenate %116, %120, %124, %128 in 1 : vector<3x8x32xf32>, vector<3x8x32xf32>, vector<3x8x32xf32>, vector<3x8x32xf32> -> vector<3x32x32xf32>
    %c0_126 = arith.constant 0 : index
    %c0_127 = arith.constant 0 : index
    %c0_128 = arith.constant 0 : index
    %c0_129 = arith.constant 0 : index
    %130 = vector.load %arg9[%c0_126, %c0_127, %c0_128, %c0_129] : memref<1x3x32x32xf32, #tpu.memory_space<vmem>>, vector<1x3x32x32xf32>
    %131 = vector.shape_cast %130 : vector<1x3x32x32xf32> to vector<3x32x32xf32>
    %132 = vector.shape_cast %129 : vector<3x32x32xf32> to vector<1x3x32x32xf32>
    tpu.vector_store %arg9[%c0_126, %c0_127, %c0_128, %c0_129], %132 {strides = array<i32>} : memref<1x3x32x32xf32, #tpu.memory_space<vmem>>, vector<1x3x32x32xf32>,
    return
  }
  func.func @transform_0(%arg0: i32, %arg1: i32) -> (i32, i32, i32) {
    %c1_i32 = arith.constant 1 : i32
    %0 = arith.muli %arg0, %c1_i32 : i32
    %1 = arith.addi %0, %arg1 : i32
    %c0_i32 = arith.constant 0 : i32
    %c0_i32_0 = arith.constant 0 : i32
    %c0_i32_1 = arith.constant 0 : i32
    return %1, %c0_i32, %c0_i32_0 : i32, i32, i32
  }
  func.func @transform_1(%arg0: i32, %arg1: i32) -> (i32, i32, i32, i32) {
    %c0_i32 = arith.constant 0 : i32
    %c0_i32_0 = arith.constant 0 : i32
    %c0_i32_1 = arith.constant 0 : i32
    return %arg0, %c0_i32, %arg1, %c0_i32_0 : i32, i32, i32, i32
  }
  func.func @transform_2(%arg0: i32, %arg1: i32) -> (i32, i32) {
    %c0_i32 = arith.constant 0 : i32
    %c0_i32_0 = arith.constant 0 : i32
    %c0_i32_1 = arith.constant 0 : i32
    return %c0_i32, %c0_i32_0 : i32, i32
  }
  func.func @transform_3(%arg0: i32, %arg1: i32) -> (i32, i32) {
    %c0_i32 = arith.constant 0 : i32
    %c0_i32_0 = arith.constant 0 : i32
    %c0_i32_1 = arith.constant 0 : i32
    return %c0_i32, %c0_i32_0 : i32, i32
  }
  func.func @transform_4(%arg0: i32, %arg1: i32) -> (i32, i32) {
    %c0_i32 = arith.constant 0 : i32
    %c0_i32_0 = arith.constant 0 : i32
    %c0_i32_1 = arith.constant 0 : i32
    return %c0_i32, %c0_i32_0 : i32, i32
  }
  func.func @transform_5(%arg0: i32, %arg1: i32) -> (i32, i32) {
    %c0_i32 = arith.constant 0 : i32
    %c0_i32_0 = arith.constant 0 : i32
    %c0_i32_1 = arith.constant 0 : i32
    return %c0_i32, %c0_i32_0 : i32, i32
  }
  func.func @transform_6(%arg0: i32, %arg1: i32) -> (i32, i32) {
    %c0_i32 = arith.constant 0 : i32
    %c0_i32_0 = arith.constant 0 : i32
    %c0_i32_1 = arith.constant 0 : i32
    return %c0_i32, %c0_i32_0 : i32, i32
  }
  func.func @transform_7(%arg0: i32, %arg1: i32) -> (i32, i32, i32, i32) {
    %c0_i32 = arith.constant 0 : i32
    %c0_i32_0 = arith.constant 0 : i32
    %c0_i32_1 = arith.constant 0 : i32
    return %arg0, %c0_i32, %arg1, %c0_i32_0 : i32, i32, i32, i32
  }
  func.func @transform_8(%arg0: i32, %arg1: i32) -> (i32, i32, i32, i32) {
    %c0_i32 = arith.constant 0 : i32
    %c0_i32_0 = arith.constant 0 : i32
    %c0_i32_1 = arith.constant 0 : i32
    return %arg0, %arg1, %c0_i32, %c0_i32_0 : i32, i32, i32, i32
  }
}

</mosaic_0001>

<llo_original>
// kernel: mim_forward.1
$region0: #{mim_forward.1}
  #allocation0 [shape = 'u32[]', space=smem, size = 0x4, offset = 0x4, fixed_abs, tag = 'smem constant byte address 0x4 - core index']
  #allocation1 [shape = 'u32[144,128]{1,0:T(1,128)}', space=vmem, size = 0x12000, scoped, tag = 'internal scratch']
  #allocation2 [shape = 'f32[16,8,24]{2,1,0:T(8,128)}', space=vmem, size = 0x10000, scoped, tag = 'scratch operand']
  #allocation3 [shape = 'f32[16,192]{1,0:T(8,128)}', space=vmem, size = 0x4000, scoped, tag = 'scratch operand']
  %s0 = inlined_call_operand.vmem [shape: f32[2,16,1], index: 0, kind: input, shape index: {}]
  %s1 = inlined_call_operand.vmem [shape: f32[2,3,32,32], index: 1, kind: input, shape index: {}]
  %s2 = inlined_call_operand.vmem [shape: f32[192,32], index: 2, kind: input, shape index: {}]
  %s3 = inlined_call_operand.vmem [shape: f32[1,32], index: 3, kind: input, shape index: {}]
  %s4 = inlined_call_operand.vmem [shape: f32[1,32], index: 4, kind: input, shape index: {}]
  %s5 = inlined_call_operand.vmem [shape: f32[32,192], index: 5, kind: input, shape index: {}]
  %s6 = inlined_call_operand.vmem [shape: f32[1,192], index: 6, kind: input, shape index: {}]
  %s7 = inlined_call_operand.hbm [shape: f32[2,3,32,32], index: 7, kind: output, shape index: {0}]
  %s8 = inlined_call_operand.vmem [shape: f32[2,1,1,128], index: 8, kind: output, shape index: {1}]
  %9 = xla_tuple %s7, %s8
  %s10 = sld [smem:[#allocation0]]
  $region69: #{mim_forward.1} parent=0
    _
  %s12 = ssub.s32 1, %s10
  %s13 = scalar_select 0, %s12, %s10
  $region1: #{mim_forward.1} parent=0
    #allocation4 [shape = 'u8[98304]{0}', space=vmem, size = 0x18000, scoped, tag = 'output window, operand 0']
    #allocation5 [shape = 's32[2]{0}', space=sflag, size = 0x8, scoped, tag = 'scoped memory for mim_forward.1']
    %14 = vsyncpa [#allocation5], 0
    %s15 = scalar_lea.sflag [#allocation5], 1
    %16 = vsyncpa %s15, 0
    loop: start=0, step=1, limit=4
    $region2: #{mim_forward.1} parent=1 // loop_pre_header
      _
    $region3: #{mim_forward.1} parent=1 // loop_header
      %s18 = sphi 0, %s22
      %p19 = scmp.ge.s32.totalorder %s18, 4
      %s25 = sphi 0, %s37
      %s26 = sphi 0, %s33
      %s27 = sphi 0, %s25
      %s28 = sphi 0, %s26
      %s29 = sphi 0, %s27
      %s30 = sphi 0, %s28
      %s42 = sphi 0, %s44
      %s45 = sphi 0, %s42
      %s46 = sphi 0, %s45
      %s62 = sphi 0, %s46
      %s70 = sphi 0, %s72
      %s73 = sphi 0, %s70
      %s74 = sphi 0, %s73
      %s90 = sphi 0, %s74
      %s94 = sphi 0, %s94
      %s96 = sphi 0, %s94
      %s97 = sphi 0, %s96
      %s111 = sphi 0, %s97
      %s115 = sphi 0, %s115
      %s117 = sphi 0, %s115
      %s118 = sphi 0, %s117
      %s132 = sphi 0, %s118
      %s136 = sphi 0, %s136
      %s138 = sphi 0, %s136
      %s139 = sphi 0, %s138
      %s153 = sphi 0, %s139
      %s157 = sphi 0, %s157
      %s159 = sphi 0, %s157
      %s160 = sphi 0, %s159
      %s174 = sphi 0, %s160
      %s178 = sphi 0, %s178
      %s180 = sphi 0, %s178
      %s181 = sphi 0, %s180
      %s195 = sphi 0, %s181
      %s203 = sphi 0, %s205
      %s206 = sphi 0, %s203
      %s207 = sphi 0, %s206
      %s223 = sphi 0, %s207
      %s231 = sphi 0, %s233
      %s234 = sphi 0, %s231
      %s235 = sphi 0, %s234
      %s251 = sphi 0, %s235
    $region4: #{mim_forward.1} parent=1 // loop_header_branch
      %21 = sbr.rel (%p19) target = $region8
    $region5: #{mim_forward.1} parent=1 // loop_body
      %s23 = ssub.s32 %s18, 1
      %s24 = ssub.s32 %s18, 2
      %s31 = sadd.s32 1, %s26
      %p32 = scmp.ge.s32.totalorder %s31, 1
      %s33 = scalar_select %p32, 0, %s31
      %s34 = sadd.s32 1, %s25
      %s35 = scalar_select %p32, %s34, %s25
      %p36 = scmp.ge.s32.totalorder %s35, 2
      %s37 = scalar_select %p36, 0, %s35
      %s38 = sadd.s32 %s25, %s26
      %s39 = sadd.s32 %s37, %s33
      %s40 = ssub.s32 %s38, %s39
      %p41 = scmp.eq.s32.totalorder %s40, 0
      %s43 = sadd.s32 %s42, 1
      %s44 = scalar_select %p41, %s42, %s43
      %p47 = pneg %p41
      %p48 = scmp.eq.s32.totalorder %s18, 1
      %p49 = por %p47, %p48
      %p50 = scmp.ne.s32.totalorder %s42, %s45
      %p51 = scmp.eq.s32.totalorder %s18, 0
      %p52 = por %p50, %p51
      %p53 = scmp.ne.s32.totalorder %s42, %s45
      %p54 = scmp.eq.s32.totalorder %s23, 1
      %p55 = por %p53, %p54
      %p56 = scmp.ne.s32.totalorder %s45, %s46
      %p57 = scmp.eq.s32.totalorder %s23, 0
      %p58 = por %p56, %p57
      %p59 = scmp.ne.s32.totalorder %s45, %s46
      %p60 = scmp.eq.s32.totalorder %s24, 1
      %p61 = por %p59, %p60
      %p63 = scmp.ne.s32.totalorder %s46, %s62
      %p64 = scmp.eq.s32.totalorder %s24, 0
      %p65 = por %p63, %p64
      %s66 = ssub.s32 %s25, %s37
      %s67 = ssub.s32 %s26, %s33
      %s68 = sor.u32 %s66, %s67
      %p69 = scmp.eq.s32.totalorder %s68, 0
      %s71 = sadd.s32 %s70, 1
      %s72 = scalar_select %p69, %s70, %s71
      %p75 = pneg %p69
      %p76 = scmp.eq.s32.totalorder %s18, 1
      %p77 = por %p75, %p76
      %p78 = scmp.ne.s32.totalorder %s70, %s73
      %p79 = scmp.eq.s32.totalorder %s18, 0
      %p80 = por %p78, %p79
      %p81 = scmp.ne.s32.totalorder %s70, %s73
      %p82 = scmp.eq.s32.totalorder %s23, 1
      %p83 = por %p81, %p82
      %p84 = scmp.ne.s32.totalorder %s73, %s74
      %p85 = scmp.eq.s32.totalorder %s23, 0
      %p86 = por %p84, %p85
      %p87 = scmp.ne.s32.totalorder %s73, %s74
      %p88 = scmp.eq.s32.totalorder %s24, 1
      %p89 = por %p87, %p88
      %p91 = scmp.ne.s32.totalorder %s74, %s90
      %p92 = scmp.eq.s32.totalorder %s24, 0
      %p93 = por %p91, %p92
      %s95 = sadd.s32 %s94, 1
      %p98 = scmp.eq.s32.totalorder %s18, 1
      %p99 = scmp.ne.s32.totalorder %s94, %s96
      %p100 = scmp.eq.s32.totalorder %s18, 0
      %p101 = por %p99, %p100
      %p102 = scmp.ne.s32.totalorder %s94, %s96
      %p103 = scmp.eq.s32.totalorder %s23, 1
      %p104 = por %p102, %p103
      %p105 = scmp.ne.s32.totalorder %s96, %s97
      %p106 = scmp.eq.s32.totalorder %s23, 0
      %p107 = por %p105, %p106
      %p108 = scmp.ne.s32.totalorder %s96, %s97
      %p109 = scmp.eq.s32.totalorder %s24, 1
      %p110 = por %p108, %p109
      %p112 = scmp.ne.s32.totalorder %s97, %s111
      %p113 = scmp.eq.s32.totalorder %s24, 0
      %p114 = por %p112, %p113
      %s116 = sadd.s32 %s115, 1
      %p119 = scmp.eq.s32.totalorder %s18, 1
      %p120 = scmp.ne.s32.totalorder %s115, %s117
      %p121 = scmp.eq.s32.totalorder %s18, 0
      %p122 = por %p120, %p121
      %p123 = scmp.ne.s32.totalorder %s115, %s117
      %p124 = scmp.eq.s32.totalorder %s23, 1
      %p125 = por %p123, %p124
      %p126 = scmp.ne.s32.totalorder %s117, %s118
      %p127 = scmp.eq.s32.totalorder %s23, 0
      %p128 = por %p126, %p127
      %p129 = scmp.ne.s32.totalorder %s117, %s118
      %p130 = scmp.eq.s32.totalorder %s24, 1
      %p131 = por %p129, %p130
      %p133 = scmp.ne.s32.totalorder %s118, %s132
      %p134 = scmp.eq.s32.totalorder %s24, 0
      %p135 = por %p133, %p134
      %s137 = sadd.s32 %s136, 1
      %p140 = scmp.eq.s32.totalorder %s18, 1
      %p141 = scmp.ne.s32.totalorder %s136, %s138
      %p142 = scmp.eq.s32.totalorder %s18, 0
      %p143 = por %p141, %p142
      %p144 = scmp.ne.s32.totalorder %s136, %s138
      %p145 = scmp.eq.s32.totalorder %s23, 1
      %p146 = por %p144, %p145
      %p147 = scmp.ne.s32.totalorder %s138, %s139
      %p148 = scmp.eq.s32.totalorder %s23, 0
      %p149 = por %p147, %p148
      %p150 = scmp.ne.s32.totalorder %s138, %s139
      %p151 = scmp.eq.s32.totalorder %s24, 1
      %p152 = por %p150, %p151
      %p154 = scmp.ne.s32.totalorder %s139, %s153
      %p155 = scmp.eq.s32.totalorder %s24, 0
      %p156 = por %p154, %p155
      %s158 = sadd.s32 %s157, 1
      %p161 = scmp.eq.s32.totalorder %s18, 1
      %p162 = scmp.ne.s32.totalorder %s157, %s159
      %p163 = scmp.eq.s32.totalorder %s18, 0
      %p164 = por %p162, %p163
      %p165 = scmp.ne.s32.totalorder %s157, %s159
      %p166 = scmp.eq.s32.totalorder %s23, 1
      %p167 = por %p165, %p166
      %p168 = scmp.ne.s32.totalorder %s159, %s160
      %p169 = scmp.eq.s32.totalorder %s23, 0
      %p170 = por %p168, %p169
      %p171 = scmp.ne.s32.totalorder %s159, %s160
      %p172 = scmp.eq.s32.totalorder %s24, 1
      %p173 = por %p171, %p172
      %p175 = scmp.ne.s32.totalorder %s160, %s174
      %p176 = scmp.eq.s32.totalorder %s24, 0
      %p177 = por %p175, %p176
      %s179 = sadd.s32 %s178, 1
      %p182 = scmp.eq.s32.totalorder %s18, 1
      %p183 = scmp.ne.s32.totalorder %s178, %s180
      %p184 = scmp.eq.s32.totalorder %s18, 0
      %p185 = por %p183, %p184
      %p186 = scmp.ne.s32.totalorder %s178, %s180
      %p187 = scmp.eq.s32.totalorder %s23, 1
      %p188 = por %p186, %p187
      %p189 = scmp.ne.s32.totalorder %s180, %s181
      %p190 = scmp.eq.s32.totalorder %s23, 0
      %p191 = por %p189, %p190
      %p192 = scmp.ne.s32.totalorder %s180, %s181
      %p193 = scmp.eq.s32.totalorder %s24, 1
      %p194 = por %p192, %p193
      %p196 = scmp.ne.s32.totalorder %s181, %s195
      %p197 = scmp.eq.s32.totalorder %s24, 0
      %p198 = por %p196, %p197
      %s199 = ssub.s32 %s25, %s37
      %s200 = ssub.s32 %s26, %s33
      %s201 = sor.u32 %s199, %s200
      %p202 = scmp.eq.s32.totalorder %s201, 0
      %s204 = sadd.s32 %s203, 1
      %s205 = scalar_select %p202, %s203, %s204
      %p208 = pneg %p202
      %p209 = scmp.eq.s32.totalorder %s18, 1
      %p210 = por %p208, %p209
      %p211 = scmp.ne.s32.totalorder %s203, %s206
      %p212 = scmp.eq.s32.totalorder %s18, 0
      %p213 = por %p211, %p212
      %p214 = scmp.ne.s32.totalorder %s203, %s206
      %p215 = scmp.eq.s32.totalorder %s23, 1
      %p216 = por %p214, %p215
      %p217 = scmp.ne.s32.totalorder %s206, %s207
      %p218 = scmp.eq.s32.totalorder %s23, 0
      %p219 = por %p217, %p218
      %p220 = scmp.ne.s32.totalorder %s206, %s207
      %p221 = scmp.eq.s32.totalorder %s24, 1
      %p222 = por %p220, %p221
      %p224 = scmp.ne.s32.totalorder %s207, %s223
      %p225 = scmp.eq.s32.totalorder %s24, 0
      %p226 = por %p224, %p225
      %s227 = ssub.s32 %s25, %s37
      %s228 = ssub.s32 %s26, %s33
      %s229 = sor.u32 %s227, %s228
      %p230 = scmp.eq.s32.totalorder %s229, 0
      %s232 = sadd.s32 %s231, 1
      %s233 = scalar_select %p230, %s231, %s232
      %p236 = pneg %p230
      %p237 = scmp.eq.s32.totalorder %s18, 1
      %p238 = por %p236, %p237
      %p239 = scmp.ne.s32.totalorder %s231, %s234
      %p240 = scmp.eq.s32.totalorder %s18, 0
      %p241 = por %p239, %p240
      %p242 = scmp.ne.s32.totalorder %s231, %s234
      %p243 = scmp.eq.s32.totalorder %s23, 1
      %p244 = por %p242, %p243
      %p245 = scmp.ne.s32.totalorder %s234, %s235
      %p246 = scmp.eq.s32.totalorder %s23, 0
      %p247 = por %p245, %p246
      %p248 = scmp.ne.s32.totalorder %s234, %s235
      %p249 = scmp.eq.s32.totalorder %s24, 1
      %p250 = por %p248, %p249
      %p252 = scmp.ne.s32.totalorder %s235, %s251
      %p253 = scmp.eq.s32.totalorder %s24, 0
      %p254 = por %p252, %p253
      %p255 = scmp.le.s32.totalorder 1, %s18
      %p256 = scmp.lt.s32.totalorder %s18, 3
      %p257 = pnand %p255, %p256
      %p258 = pneg %p257
      // Predicated region
      $region9: #{mim_forward.1} parent=5 // pred_check
        _
      $region10: #{mim_forward.1} parent=5 // pred_check_branch
        %260 = sbr.rel (%p257) target = $region12
      $region11: #{mim_forward.1} parent=5 // pred_region
        %s261 = ssub.s32 %s18, 1
        // Predicated region
        $region13: #{mim_forward.1} parent=11 // pred_check
          %p262 = pneg %p107
        $region14: #{mim_forward.1} parent=11 // pred_check_branch
          %264 = sbr.rel (%p262) target = $region16
        $region15: #{mim_forward.1} parent=11 // pred_region
          _
        $region16: #{mim_forward.1} parent=11 // pred_fallthru
          _
        // Predicated region
        $region17: #{mim_forward.1} parent=11 // pred_check
          %p265 = pneg %p128
        $region18: #{mim_forward.1} parent=11 // pred_check_branch
          %267 = sbr.rel (%p265) target = $region20
        $region19: #{mim_forward.1} parent=11 // pred_region
          _
        $region20: #{mim_forward.1} parent=11 // pred_fallthru
          _
        // Predicated region
        $region21: #{mim_forward.1} parent=11 // pred_check
          %p268 = pneg %p149
        $region22: #{mim_forward.1} parent=11 // pred_check_branch
          %270 = sbr.rel (%p268) target = $region24
        $region23: #{mim_forward.1} parent=11 // pred_region
          _
        $region24: #{mim_forward.1} parent=11 // pred_fallthru
          _
        // Predicated region
        $region25: #{mim_forward.1} parent=11 // pred_check
          %p271 = pneg %p170
        $region26: #{mim_forward.1} parent=11 // pred_check_branch
          %273 = sbr.rel (%p271) target = $region28
        $region27: #{mim_forward.1} parent=11 // pred_region
          _
        $region28: #{mim_forward.1} parent=11 // pred_fallthru
          _
        // Predicated region
        $region29: #{mim_forward.1} parent=11 // pred_check
          %p274 = pneg %p191
        $region30: #{mim_forward.1} parent=11 // pred_check_branch
          %276 = sbr.rel (%p274) target = $region32
        $region31: #{mim_forward.1} parent=11 // pred_region
          _
        $region32: #{mim_forward.1} parent=11 // pred_fallthru
          _
      $region12: #{mim_forward.1} parent=5 // pred_fallthru
        _
      %p277 = scmp.lt.s32.totalorder %s18, 2
      // Predicated region
      $region33: #{mim_forward.1} parent=5 // pred_check
        %p278 = pneg %p277
      $region34: #{mim_forward.1} parent=5 // pred_check_branch
        %280 = sbr.rel (%p278) target = $region36
      $region35: #{mim_forward.1} parent=5 // pred_region
        // Predicated region
        $region37: #{mim_forward.1} parent=35 // pred_check
          %p281 = pneg %p52
        $region38: #{mim_forward.1} parent=35 // pred_check_branch
          %283 = sbr.rel (%p281) target = $region40
        $region39: #{mim_forward.1} parent=35 // pred_region
          %s284 = sadd.s32 %s25, %s26
          %p285 = scmp.lt.s32.totalorder %s284, 1
          %s286 = scalar_select %p285, %s284, 1
          %s287 = smul.addr %s286, 2
          %s288 = smul.addr %s287, 8
          %s289 = scalar_lea.vmem %s0, %s288
          %s290 = sadd.s32 %s25, %s26
        $region40: #{mim_forward.1} parent=35 // pred_fallthru
          _
        // Predicated region
        $region41: #{mim_forward.1} parent=35 // pred_check
          %p291 = pneg %p80
        $region42: #{mim_forward.1} parent=35 // pred_check_branch
          %293 = sbr.rel (%p291) target = $region44
        $region43: #{mim_forward.1} parent=35 // pred_region
          %s294 = smul.u32 4, %s26
          %p295 = scmp.lt.s32.totalorder %s25, 1
          %s296 = scalar_select %p295, %s25, 1
          %p297 = scmp.lt.s32.totalorder %s294, 3
          %s298 = scalar_select %p297, %s294, 3
          %s299 = smul.addr %s296, 12
          %s300 = sadd.s32 %s298, %s299
          %s301 = smul.addr %s300, 8
          %s302 = scalar_lea.vmem %s1, %s301
          %s303 = smul.u32 4, %s26
        $region44: #{mim_forward.1} parent=35 // pred_fallthru
          _
      $region36: #{mim_forward.1} parent=5 // pred_fallthru
        _
      %p304 = scmp.le.s32.totalorder 1, %s18
      %p305 = scmp.lt.s32.totalorder %s18, 3
      %p306 = pnand %p304, %p305
      %p307 = pneg %p306
      // Predicated region
      $region45: #{mim_forward.1} parent=5 // pred_check
        _
      $region46: #{mim_forward.1} parent=5 // pred_check_branch
        %309 = sbr.rel (%p306) target = $region48
      $region47: #{mim_forward.1} parent=5 // pred_region
        %s310 = ssub.s32 %s18, 1
        %s311 = sadd.s32 %s27, %s28
        %p312 = scmp.lt.s32.totalorder %s311, 1
        %s313 = scalar_select %p312, %s311, 1
        %s314 = smul.addr %s313, 2
        %s315 = smul.addr %s314, 8
        %s316 = scalar_lea.vmem %s0, %s315
        %p317 = pneg %p58
        %p318 = pneg %p55
        %s319 = smul.u32 4, %s28
        %p320 = scmp.lt.s32.totalorder %s27, 1
        %s321 = scalar_select %p320, %s27, 1
        %p322 = scmp.lt.s32.totalorder %s319, 3
        %s323 = scalar_select %p322, %s319, 3
        %s324 = smul.addr %s321, 12
        %s325 = sadd.s32 %s323, %s324
        %s326 = smul.addr %s325, 8
        %s327 = scalar_lea.vmem %s1, %s326
        %p328 = pneg %p86
        %p329 = pneg %p83
        %p330 = pneg %p107
        %p331 = pneg %p104
        %p332 = pneg %p128
        %p333 = pneg %p125
        %p334 = pneg %p149
        %p335 = pneg %p146
        %p336 = pneg %p170
        %p337 = pneg %p167
        %p338 = pneg %p191
        %p339 = pneg %p188
        %p340 = pneg %p219
        %p341 = pneg %p216
        %s342 = sand.u32 %s206, 1
        %s343 = scalar_lea.sflag [#allocation5], %s342
        %s344 = sand.u32 %s206, 1
        %s345 = smul.addr %s344, 96
        %s346 = scalar_lea.vmem [#allocation4], %s345
        %p347 = pneg %p247
        %p348 = pneg %p244
        %p349 = scmp.lt.s32.totalorder %s27, 1
        %s350 = scalar_select %p349, %s27, 1
        %p351 = scmp.lt.s32.totalorder %s28, 0
        %s352 = scalar_select %p351, %s28, 0
        %s353 = sadd.s32 %s352, %s350
        %s354 = scalar_lea.vmem %s8, %s353
        %s355 = sadd.s32 %s27, %s28
        %p356 = scmp.lt.s32.totalorder %s355, 1
        %s357 = scalar_select %p356, %s355, 1
        %s358 = smul.addr %s357, 2
        %s359 = smul.addr %s358, 8
        %s360 = scalar_lea.vmem %s0, %s359
        %s361 = sadd.s32 %s27, %s28
        %s362 = smul.u32 4, %s28
        %p363 = scmp.lt.s32.totalorder %s27, 1
        %s364 = scalar_select %p363, %s27, 1
        %p365 = scmp.lt.s32.totalorder %s362, 3
        %s366 = scalar_select %p365, %s362, 3
        %s367 = smul.addr %s364, 12
        %s368 = sadd.s32 %s366, %s367
        %s369 = smul.addr %s368, 8
        %s370 = scalar_lea.vmem %s1, %s369
        %s371 = smul.u32 4, %s28
        %s372 = smul.u32 4, %s28
        %p373 = scmp.lt.s32.totalorder %s27, 1
        %s374 = scalar_select %p373, %s27, 1
        %p375 = scmp.lt.s32.totalorder %s28, 0
        %s376 = scalar_select %p375, %s28, 0
        %s377 = sadd.s32 %s376, %s374
        %s378 = scalar_lea.vmem %s8, %s377
        %v379 = vld [vmem:[%s370] sm:$0xff]
        %v380 = vld [vmem:[%s370 + $0x20] sm:$0xff]
        %v381 = vld [vmem:[%s370 + $0x40] sm:$0xff]
        %382 = vxpose.xlu0.b32.start [1/16] %v379, 128
        %383 = vxpose.xlu0.b32.cont [2/16] %v380, 128
        %384 = vxpose.xlu0.b32.cont [3/16] %v381, 128
        %385 = vxpose.xlu0.b32.cont [4/16] 0.0, 128
        %386 = vxpose.xlu0.b32.cont [5/16] 0.0, 128
        %387 = vxpose.xlu0.b32.cont [6/16] 0.0, 128
        %388 = vxpose.xlu0.b32.cont [7/16] 0.0, 128
        %389 = vxpose.xlu0.b32.cont [8/16] 0.0, 128
        %390 = vxpose.xlu0.b32.cont [9/16] 0.0, 128
        %391 = vxpose.xlu0.b32.cont [10/16] 0.0, 128
        %392 = vxpose.xlu0.b32.cont [11/16] 0.0, 128
        %393 = vxpose.xlu0.b32.cont [12/16] 0.0, 128
        %394 = vxpose.xlu0.b32.cont [13/16] 0.0, 128
        %395 = vxpose.xlu0.b32.cont [14/16] 0.0, 128
        %396 = vxpose.xlu0.b32.cont [15/16] 0.0, 128
        %397 = vxpose.xlu0.b32.end [16/16] 0.0, 128
        %v398 = vpop.trf.xlu0
        %v399 = vpop.trf.xlu0
        %v400 = vpop.trf.xlu0
        %v401 = vpop.trf.xlu0
        %v402 = vpop.trf.xlu0
        %v403 = vpop.trf.xlu0
        %v404 = vpop.trf.xlu0
        %v405 = vpop.trf.xlu0
        %v406 = vpop.trf.xlu0
        %v407 = vpop.trf.xlu0
        %v408 = vpop.trf.xlu0
        %v409 = vpop.trf.xlu0
        %v410 = vpop.trf.xlu0
        %v411 = vpop.trf.xlu0
        %v412 = vpop.trf.xlu0
        %v413 = vpop.trf.xlu0
        %vm414 = vcmask 195584
        %415 = vst.msk [vmem:[#allocation2] sm:$0xff] %vm414, %v398
        %416 = vst.msk [vmem:[#allocation2 + $0x8] sm:$0xff] %vm414, %v399
        %417 = vst.msk [vmem:[#allocation2 + $0x10] sm:$0xff] %vm414, %v400
        %418 = vst.msk [vmem:[#allocation2 + $0x18] sm:$0xff] %vm414, %v401
        %v419 = vld [vmem:[%s370 + $0x8] sm:$0xff]
        %v420 = vld [vmem:[%s370 + $0x28] sm:$0xff]
        %v421 = vld [vmem:[%s370 + $0x48] sm:$0xff]
        %422 = vxpose.xlu0.b32.start [1/16] %v419, 128
        %423 = vxpose.xlu0.b32.cont [2/16] %v420, 128
        %424 = vxpose.xlu0.b32.cont [3/16] %v421, 128
        %425 = vxpose.xlu0.b32.cont [4/16] 0.0, 128
        %426 = vxpose.xlu0.b32.cont [5/16] 0.0, 128
        %427 = vxpose.xlu0.b32.cont [6/16] 0.0, 128
        %428 = vxpose.xlu0.b32.cont [7/16] 0.0, 128
        %429 = vxpose.xlu0.b32.cont [8/16] 0.0, 128
        %430 = vxpose.xlu0.b32.cont [9/16] 0.0, 128
        %431 = vxpose.xlu0.b32.cont [10/16] 0.0, 128
        %432 = vxpose.xlu0.b32.cont [11/16] 0.0, 128
        %433 = vxpose.xlu0.b32.cont [12/16] 0.0, 128
        %434 = vxpose.xlu0.b32.cont [13/16] 0.0, 128
        %435 = vxpose.xlu0.b32.cont [14/16] 0.0, 128
        %436 = vxpose.xlu0.b32.cont [15/16] 0.0, 128
        %437 = vxpose.xlu0.b32.end [16/16] 0.0, 128
        %v438 = vpop.trf.xlu0
        %v439 = vpop.trf.xlu0
        %v440 = vpop.trf.xlu0
        %v441 = vpop.trf.xlu0
        %v442 = vpop.trf.xlu0
        %v443 = vpop.trf.xlu0
        %v444 = vpop.trf.xlu0
        %v445 = vpop.trf.xlu0
        %v446 = vpop.trf.xlu0
        %v447 = vpop.trf.xlu0
        %v448 = vpop.trf.xlu0
        %v449 = vpop.trf.xlu0
        %v450 = vpop.trf.xlu0
        %v451 = vpop.trf.xlu0
        %v452 = vpop.trf.xlu0
        %v453 = vpop.trf.xlu0
        %s454 = scalar_lea.vmem [#allocation2], 32
        %455 = vst.msk [vmem:[%s454] sm:$0xff] %vm414, %v438
        %456 = vst.msk [vmem:[%s454 + $0x8] sm:$0xff] %vm414, %v439
        %457 = vst.msk [vmem:[%s454 + $0x10] sm:$0xff] %vm414, %v440
        %458 = vst.msk [vmem:[%s454 + $0x18] sm:$0xff] %vm414, %v441
        %v459 = vld [vmem:[%s370 + $0x10] sm:$0xff]
        %v460 = vld [vmem:[%s370 + $0x30] sm:$0xff]
        %v461 = vld [vmem:[%s370 + $0x50] sm:$0xff]
        %462 = vxpose.xlu0.b32.start [1/16] %v459, 128
        %463 = vxpose.xlu0.b32.cont [2/16] %v460, 128
        %464 = vxpose.xlu0.b32.cont [3/16] %v461, 128
        %465 = vxpose.xlu0.b32.cont [4/16] 0.0, 128
        %466 = vxpose.xlu0.b32.cont [5/16] 0.0, 128
        %467 = vxpose.xlu0.b32.cont [6/16] 0.0, 128
        %468 = vxpose.xlu0.b32.cont [7/16] 0.0, 128
        %469 = vxpose.xlu0.b32.cont [8/16] 0.0, 128
        %470 = vxpose.xlu0.b32.cont [9/16] 0.0, 128
        %471 = vxpose.xlu0.b32.cont [10/16] 0.0, 128
        %472 = vxpose.xlu0.b32.cont [11/16] 0.0, 128
        %473 = vxpose.xlu0.b32.cont [12/16] 0.0, 128
        %474 = vxpose.xlu0.b32.cont [13/16] 0.0, 128
        %475 = vxpose.xlu0.b32.cont [14/16] 0.0, 128
        %476 = vxpose.xlu0.b32.cont [15/16] 0.0, 128
        %477 = vxpose.xlu0.b32.end [16/16] 0.0, 128
        %v478 = vpop.trf.xlu0
        %v479 = vpop.trf.xlu0
        %v480 = vpop.trf.xlu0
        %v481 = vpop.trf.xlu0
        %v482 = vpop.trf.xlu0
        %v483 = vpop.trf.xlu0
        %v484 = vpop.trf.xlu0
        %v485 = vpop.trf.xlu0
        %v486 = vpop.trf.xlu0
        %v487 = vpop.trf.xlu0
        %v488 = vpop.trf.xlu0
        %v489 = vpop.trf.xlu0
        %v490 = vpop.trf.xlu0
        %v491 = vpop.trf.xlu0
        %v492 = vpop.trf.xlu0
        %v493 = vpop.trf.xlu0
        %s494 = scalar_lea.vmem [#allocation2], 64
        %495 = vst.msk [vmem:[%s494] sm:$0xff] %vm414, %v478
        %496 = vst.msk [vmem:[%s494 + $0x8] sm:$0xff] %vm414, %v479
        %497 = vst.msk [vmem:[%s494 + $0x10] sm:$0xff] %vm414, %v480
        %498 = vst.msk [vmem:[%s494 + $0x18] sm:$0xff] %vm414, %v481
        %v499 = vld [vmem:[%s370 + $0x18] sm:$0xff]
        %v500 = vld [vmem:[%s370 + $0x38] sm:$0xff]
        %v501 = vld [vmem:[%s370 + $0x58] sm:$0xff]
        %502 = vxpose.xlu0.b32.start [1/16] %v499, 128
        %503 = vxpose.xlu0.b32.cont [2/16] %v500, 128
        %504 = vxpose.xlu0.b32.cont [3/16] %v501, 128
        %505 = vxpose.xlu0.b32.cont [4/16] 0.0, 128
        %506 = vxpose.xlu0.b32.cont [5/16] 0.0, 128
        %507 = vxpose.xlu0.b32.cont [6/16] 0.0, 128
        %508 = vxpose.xlu0.b32.cont [7/16] 0.0, 128
        %509 = vxpose.xlu0.b32.cont [8/16] 0.0, 128
        %510 = vxpose.xlu0.b32.cont [9/16] 0.0, 128
        %511 = vxpose.xlu0.b32.cont [10/16] 0.0, 128
        %512 = vxpose.xlu0.b32.cont [11/16] 0.0, 128
        %513 = vxpose.xlu0.b32.cont [12/16] 0.0, 128
        %514 = vxpose.xlu0.b32.cont [13/16] 0.0, 128
        %515 = vxpose.xlu0.b32.cont [14/16] 0.0, 128
        %516 = vxpose.xlu0.b32.cont [15/16] 0.0, 128
        %517 = vxpose.xlu0.b32.end [16/16] 0.0, 128
        %v518 = vpop.trf.xlu0
        %v519 = vpop.trf.xlu0
        %v520 = vpop.trf.xlu0
        %v521 = vpop.trf.xlu0
        %v522 = vpop.trf.xlu0
        %v523 = vpop.trf.xlu0
        %v524 = vpop.trf.xlu0
        %v525 = vpop.trf.xlu0
        %v526 = vpop.trf.xlu0
        %v527 = vpop.trf.xlu0
        %v528 = vpop.trf.xlu0
        %v529 = vpop.trf.xlu0
        %v530 = vpop.trf.xlu0
        %v531 = vpop.trf.xlu0
        %v532 = vpop.trf.xlu0
        %v533 = vpop.trf.xlu0
        %s534 = scalar_lea.vmem [#allocation2], 96
        %535 = vst.msk [vmem:[%s534] sm:$0xff] %vm414, %v518
        %536 = vst.msk [vmem:[%s534 + $0x8] sm:$0xff] %vm414, %v519
        %537 = vst.msk [vmem:[%s534 + $0x10] sm:$0xff] %vm414, %v520
        %538 = vst.msk [vmem:[%s534 + $0x18] sm:$0xff] %vm414, %v521
        %v539 = vld [vmem:[#allocation2] sm:$0x1]
        %v540 = vld [vmem:[#allocation2 + $0x8] sm:$0x1]
        %v541 = vld [vmem:[#allocation2 + $0x10] sm:$0x1]
        %v542 = vld [vmem:[#allocation2 + $0x18] sm:$0x1]
        %v543 = vld [vmem:[#allocation2 + $0x20] sm:$0x1]
        %v544 = vld [vmem:[#allocation2 + $0x28] sm:$0x1]
        %v545 = vld [vmem:[#allocation2 + $0x30] sm:$0x1]
        %v546 = vld [vmem:[#allocation2 + $0x38] sm:$0x1]
        %v547 = vld [vmem:[#allocation2 + $0x40] sm:$0x1]
        %v548 = vld [vmem:[#allocation2 + $0x48] sm:$0x1]
        %v549 = vld [vmem:[#allocation2 + $0x50] sm:$0x1]
        %v550 = vld [vmem:[#allocation2 + $0x58] sm:$0x1]
        %v551 = vld [vmem:[#allocation2 + $0x60] sm:$0x1]
        %v552 = vld [vmem:[#allocation2 + $0x68] sm:$0x1]
        %v553 = vld [vmem:[#allocation2 + $0x70] sm:$0x1]
        %v554 = vld [vmem:[#allocation2 + $0x78] sm:$0x1]
        %v571 = vrot.slane %v540, 7
        %vm572 = vcmask 1041409
        %v573 = vsel %vm572, %v571, %v539
        %v574 = vrot.slane %v541, 6
        %vm575 = vcmask 1042434
        %v576 = vsel %vm575, %v574, %v573
        %v577 = vrot.slane %v542, 5
        %vm578 = vcmask 1043459
        %v579 = vsel %vm578, %v577, %v576
        %v580 = vrot.slane %v543, 4
        %vm581 = vcmask 1044484
        %v582 = vsel %vm581, %v580, %v579
        %v583 = vrot.slane %v544, 3
        %vm584 = vcmask 1045509
        %v585 = vsel %vm584, %v583, %v582
        %v586 = vrot.slane %v545, 2
        %vm587 = vcmask 1046534
        %v588 = vsel %vm587, %v586, %v585
        %v589 = vrot.slane %v546, 1
        %vm590 = vcmask 1047559
        %v591 = vsel %vm590, %v589, %v588
        %v592 = vrot.slane %v548, 7
        %v593 = vsel %vm572, %v592, %v547
        %v594 = vrot.slane %v549, 6
        %v595 = vsel %vm575, %v594, %v593
        %v596 = vrot.slane %v550, 5
        %v597 = vsel %vm578, %v596, %v595
        %v598 = vrot.slane %v551, 4
        %v599 = vsel %vm581, %v598, %v597
        %v600 = vrot.slane %v552, 3
        %v601 = vsel %vm584, %v600, %v599
        %v602 = vrot.slane %v553, 2
        %v603 = vsel %vm587, %v602, %v601
        %v604 = vrot.slane %v554, 1
        %v605 = vsel %vm590, %v604, %v603
        %608 = vst.msk [vmem:[#allocation3] sm:$0xff] %vm414, %v591
        %609 = vst.msk [vmem:[#allocation3 + $0x10] sm:$0xff] %vm414, %v605
        %v610 = vld [vmem:[#allocation2 + $0x1] sm:$0x1]
        %v611 = vld [vmem:[#allocation2 + $0x9] sm:$0x1]
        %v612 = vld [vmem:[#allocation2 + $0x11] sm:$0x1]
        %v613 = vld [vmem:[#allocation2 + $0x19] sm:$0x1]
        %v614 = vld [vmem:[#allocation2 + $0x21] sm:$0x1]
        %v615 = vld [vmem:[#allocation2 + $0x29] sm:$0x1]
        %v616 = vld [vmem:[#allocation2 + $0x31] sm:$0x1]
        %v617 = vld [vmem:[#allocation2 + $0x39] sm:$0x1]
        %v618 = vld [vmem:[#allocation2 + $0x41] sm:$0x1]
        %v619 = vld [vmem:[#allocation2 + $0x49] sm:$0x1]
        %v620 = vld [vmem:[#allocation2 + $0x51] sm:$0x1]
        %v621 = vld [vmem:[#allocation2 + $0x59] sm:$0x1]
        %v622 = vld [vmem:[#allocation2 + $0x61] sm:$0x1]
        %v623 = vld [vmem:[#allocation2 + $0x69] sm:$0x1]
        %v624 = vld [vmem:[#allocation2 + $0x71] sm:$0x1]
        %v625 = vld [vmem:[#allocation2 + $0x79] sm:$0x1]
        %v642 = vrot.slane %v611, 7
        %v643 = vsel %vm572, %v642, %v610
        %v644 = vrot.slane %v612, 6
        %v645 = vsel %vm575, %v644, %v643
        %v646 = vrot.slane %v613, 5
        %v647 = vsel %vm578, %v646, %v645
        %v648 = vrot.slane %v614, 4
        %v649 = vsel %vm581, %v648, %v647
        %v650 = vrot.slane %v615, 3
        %v651 = vsel %vm584, %v650, %v649
        %v652 = vrot.slane %v616, 2
        %v653 = vsel %vm587, %v652, %v651
        %v654 = vrot.slane %v617, 1
        %v655 = vsel %vm590, %v654, %v653
        %v656 = vrot.slane %v619, 7
        %v657 = vsel %vm572, %v656, %v618
        %v658 = vrot.slane %v620, 6
        %v659 = vsel %vm575, %v658, %v657
        %v660 = vrot.slane %v621, 5
        %v661 = vsel %vm578, %v660, %v659
        %v662 = vrot.slane %v622, 4
        %v663 = vsel %vm581, %v662, %v661
        %v664 = vrot.slane %v623, 3
        %v665 = vsel %vm584, %v664, %v663
        %v666 = vrot.slane %v624, 2
        %v667 = vsel %vm587, %v666, %v665
        %v668 = vrot.slane %v625, 1
        %v669 = vsel %vm590, %v668, %v667
        %670 = vrot.lane.b32.xlu0 %v655, 24
        %v671 = vpop.permute.xlu0 %670
        %672 = vrot.lane.b32.xlu0 %v669, 24
        %v673 = vpop.permute.xlu0 %672
        %vm676 = vcmask 392384
        %677 = vst.msk [vmem:[#allocation3] sm:$0xff] %vm676, %v671
        %678 = vst.msk [vmem:[#allocation3 + $0x10] sm:$0xff] %vm676, %v673
        %v679 = vld [vmem:[#allocation2 + $0x2] sm:$0x1]
        %v680 = vld [vmem:[#allocation2 + $0xa] sm:$0x1]
        %v681 = vld [vmem:[#allocation2 + $0x12] sm:$0x1]
        %v682 = vld [vmem:[#allocation2 + $0x1a] sm:$0x1]
        %v683 = vld [vmem:[#allocation2 + $0x22] sm:$0x1]
        %v684 = vld [vmem:[#allocation2 + $0x2a] sm:$0x1]
        %v685 = vld [vmem:[#allocation2 + $0x32] sm:$0x1]
        %v686 = vld [vmem:[#allocation2 + $0x3a] sm:$0x1]
        %v687 = vld [vmem:[#allocation2 + $0x42] sm:$0x1]
        %v688 = vld [vmem:[#allocation2 + $0x4a] sm:$0x1]
        %v689 = vld [vmem:[#allocation2 + $0x52] sm:$0x1]
        %v690 = vld [vmem:[#allocation2 + $0x5a] sm:$0x1]
        %v691 = vld [vmem:[#allocation2 + $0x62] sm:$0x1]
        %v692 = vld [vmem:[#allocation2 + $0x6a] sm:$0x1]
        %v693 = vld [vmem:[#allocation2 + $0x72] sm:$0x1]
        %v694 = vld [vmem:[#allocation2 + $0x7a] sm:$0x1]
        %v711 = vrot.slane %v680, 7
        %v712 = vsel %vm572, %v711, %v679
        %v713 = vrot.slane %v681, 6
        %v714 = vsel %vm575, %v713, %v712
        %v715 = vrot.slane %v682, 5
        %v716 = vsel %vm578, %v715, %v714
        %v717 = vrot.slane %v683, 4
        %v718 = vsel %vm581, %v717, %v716
        %v719 = vrot.slane %v684, 3
        %v720 = vsel %vm584, %v719, %v718
        %v721 = vrot.slane %v685, 2
        %v722 = vsel %vm587, %v721, %v720
        %v723 = vrot.slane %v686, 1
        %v724 = vsel %vm590, %v723, %v722
        %v725 = vrot.slane %v688, 7
        %v726 = vsel %vm572, %v725, %v687
        %v727 = vrot.slane %v689, 6
        %v728 = vsel %vm575, %v727, %v726
        %v729 = vrot.slane %v690, 5
        %v730 = vsel %vm578, %v729, %v728
        %v731 = vrot.slane %v691, 4
        %v732 = vsel %vm581, %v731, %v730
        %v733 = vrot.slane %v692, 3
        %v734 = vsel %vm584, %v733, %v732
        %v735 = vrot.slane %v693, 2
        %v736 = vsel %vm587, %v735, %v734
        %v737 = vrot.slane %v694, 1
        %v738 = vsel %vm590, %v737, %v736
        %739 = vrot.lane.b32.xlu0 %v724, 48
        %v740 = vpop.permute.xlu0 %739
        %741 = vrot.lane.b32.xlu0 %v738, 48
        %v742 = vpop.permute.xlu0 %741
        %vm745 = vcmask 589184
        %746 = vst.msk [vmem:[#allocation3] sm:$0xff] %vm745, %v740
        %747 = vst.msk [vmem:[#allocation3 + $0x10] sm:$0xff] %vm745, %v742
        %v748 = vld [vmem:[#allocation2 + $0x3] sm:$0x1]
        %v749 = vld [vmem:[#allocation2 + $0xb] sm:$0x1]
        %v750 = vld [vmem:[#allocation2 + $0x13] sm:$0x1]
        %v751 = vld [vmem:[#allocation2 + $0x1b] sm:$0x1]
        %v752 = vld [vmem:[#allocation2 + $0x23] sm:$0x1]
        %v753 = vld [vmem:[#allocation2 + $0x2b] sm:$0x1]
        %v754 = vld [vmem:[#allocation2 + $0x33] sm:$0x1]
        %v755 = vld [vmem:[#allocation2 + $0x3b] sm:$0x1]
        %v756 = vld [vmem:[#allocation2 + $0x43] sm:$0x1]
        %v757 = vld [vmem:[#allocation2 + $0x4b] sm:$0x1]
        %v758 = vld [vmem:[#allocation2 + $0x53] sm:$0x1]
        %v759 = vld [vmem:[#allocation2 + $0x5b] sm:$0x1]
        %v760 = vld [vmem:[#allocation2 + $0x63] sm:$0x1]
        %v761 = vld [vmem:[#allocation2 + $0x6b] sm:$0x1]
        %v762 = vld [vmem:[#allocation2 + $0x73] sm:$0x1]
        %v763 = vld [vmem:[#allocation2 + $0x7b] sm:$0x1]
        %v780 = vrot.slane %v749, 7
        %v781 = vsel %vm572, %v780, %v748
        %v782 = vrot.slane %v750, 6
        %v783 = vsel %vm575, %v782, %v781
        %v784 = vrot.slane %v751, 5
        %v785 = vsel %vm578, %v784, %v783
        %v786 = vrot.slane %v752, 4
        %v787 = vsel %vm581, %v786, %v785
        %v788 = vrot.slane %v753, 3
        %v789 = vsel %vm584, %v788, %v787
        %v790 = vrot.slane %v754, 2
        %v791 = vsel %vm587, %v790, %v789
        %v792 = vrot.slane %v755, 1
        %v793 = vsel %vm590, %v792, %v791
        %v794 = vrot.slane %v757, 7
        %v795 = vsel %vm572, %v794, %v756
        %v796 = vrot.slane %v758, 6
        %v797 = vsel %vm575, %v796, %v795
        %v798 = vrot.slane %v759, 5
        %v799 = vsel %vm578, %v798, %v797
        %v800 = vrot.slane %v760, 4
        %v801 = vsel %vm581, %v800, %v799
        %v802 = vrot.slane %v761, 3
        %v803 = vsel %vm584, %v802, %v801
        %v804 = vrot.slane %v762, 2
        %v805 = vsel %vm587, %v804, %v803
        %v806 = vrot.slane %v763, 1
        %v807 = vsel %vm590, %v806, %v805
        %808 = vrot.lane.b32.xlu0 %v793, 72
        %v809 = vpop.permute.xlu0 %808
        %810 = vrot.lane.b32.xlu0 %v807, 72
        %v811 = vpop.permute.xlu0 %810
        %vm814 = vcmask 785984
        %815 = vst.msk [vmem:[#allocation3] sm:$0xff] %vm814, %v809
        %816 = vst.msk [vmem:[#allocation3 + $0x10] sm:$0xff] %vm814, %v811
        %v817 = vld [vmem:[#allocation2 + $0x4] sm:$0x1]
        %v818 = vld [vmem:[#allocation2 + $0xc] sm:$0x1]
        %v819 = vld [vmem:[#allocation2 + $0x14] sm:$0x1]
        %v820 = vld [vmem:[#allocation2 + $0x1c] sm:$0x1]
        %v821 = vld [vmem:[#allocation2 + $0x24] sm:$0x1]
        %v822 = vld [vmem:[#allocation2 + $0x2c] sm:$0x1]
        %v823 = vld [vmem:[#allocation2 + $0x34] sm:$0x1]
        %v824 = vld [vmem:[#allocation2 + $0x3c] sm:$0x1]
        %v825 = vld [vmem:[#allocation2 + $0x44] sm:$0x1]
        %v826 = vld [vmem:[#allocation2 + $0x4c] sm:$0x1]
        %v827 = vld [vmem:[#allocation2 + $0x54] sm:$0x1]
        %v828 = vld [vmem:[#allocation2 + $0x5c] sm:$0x1]
        %v829 = vld [vmem:[#allocation2 + $0x64] sm:$0x1]
        %v830 = vld [vmem:[#allocation2 + $0x6c] sm:$0x1]
        %v831 = vld [vmem:[#allocation2 + $0x74] sm:$0x1]
        %v832 = vld [vmem:[#allocation2 + $0x7c] sm:$0x1]
        %v849 = vrot.slane %v818, 7
        %v850 = vsel %vm572, %v849, %v817
        %v851 = vrot.slane %v819, 6
        %v852 = vsel %vm575, %v851, %v850
        %v853 = vrot.slane %v820, 5
        %v854 = vsel %vm578, %v853, %v852
        %v855 = vrot.slane %v821, 4
        %v856 = vsel %vm581, %v855, %v854
        %v857 = vrot.slane %v822, 3
        %v858 = vsel %vm584, %v857, %v856
        %v859 = vrot.slane %v823, 2
        %v860 = vsel %vm587, %v859, %v858
        %v861 = vrot.slane %v824, 1
        %v862 = vsel %vm590, %v861, %v860
        %v863 = vrot.slane %v826, 7
        %v864 = vsel %vm572, %v863, %v825
        %v865 = vrot.slane %v827, 6
        %v866 = vsel %vm575, %v865, %v864
        %v867 = vrot.slane %v828, 5
        %v868 = vsel %vm578, %v867, %v866
        %v869 = vrot.slane %v829, 4
        %v870 = vsel %vm581, %v869, %v868
        %v871 = vrot.slane %v830, 3
        %v872 = vsel %vm584, %v871, %v870
        %v873 = vrot.slane %v831, 2
        %v874 = vsel %vm587, %v873, %v872
        %v875 = vrot.slane %v832, 1
        %v876 = vsel %vm590, %v875, %v874
        %877 = vrot.lane.b32.xlu0 %v862, 96
        %v878 = vpop.permute.xlu0 %877
        %879 = vrot.lane.b32.xlu0 %v876, 96
        %v880 = vpop.permute.xlu0 %879
        %vm883 = vcmask 982784
        %884 = vst.msk [vmem:[#allocation3] sm:$0xff] %vm883, %v878
        %885 = vst.msk [vmem:[#allocation3 + $0x10] sm:$0xff] %vm883, %v880
        %v886 = vld [vmem:[#allocation2 + $0x5] sm:$0x1]
        %v887 = vld [vmem:[#allocation2 + $0xd] sm:$0x1]
        %v888 = vld [vmem:[#allocation2 + $0x15] sm:$0x1]
        %v889 = vld [vmem:[#allocation2 + $0x1d] sm:$0x1]
        %v890 = vld [vmem:[#allocation2 + $0x25] sm:$0x1]
        %v891 = vld [vmem:[#allocation2 + $0x2d] sm:$0x1]
        %v892 = vld [vmem:[#allocation2 + $0x35] sm:$0x1]
        %v893 = vld [vmem:[#allocation2 + $0x3d] sm:$0x1]
        %v894 = vld [vmem:[#allocation2 + $0x45] sm:$0x1]
        %v895 = vld [vmem:[#allocation2 + $0x4d] sm:$0x1]
        %v896 = vld [vmem:[#allocation2 + $0x55] sm:$0x1]
        %v897 = vld [vmem:[#allocation2 + $0x5d] sm:$0x1]
        %v898 = vld [vmem:[#allocation2 + $0x65] sm:$0x1]
        %v899 = vld [vmem:[#allocation2 + $0x6d] sm:$0x1]
        %v900 = vld [vmem:[#allocation2 + $0x75] sm:$0x1]
        %v901 = vld [vmem:[#allocation2 + $0x7d] sm:$0x1]
        %v918 = vrot.slane %v887, 7
        %v919 = vsel %vm572, %v918, %v886
        %v920 = vrot.slane %v888, 6
        %v921 = vsel %vm575, %v920, %v919
        %v922 = vrot.slane %v889, 5
        %v923 = vsel %vm578, %v922, %v921
        %v924 = vrot.slane %v890, 4
        %v925 = vsel %vm581, %v924, %v923
        %v926 = vrot.slane %v891, 3
        %v927 = vsel %vm584, %v926, %v925
        %v928 = vrot.slane %v892, 2
        %v929 = vsel %vm587, %v928, %v927
        %v930 = vrot.slane %v893, 1
        %v931 = vsel %vm590, %v930, %v929
        %v932 = vrot.slane %v895, 7
        %v933 = vsel %vm572, %v932, %v894
        %v934 = vrot.slane %v896, 6
        %v935 = vsel %vm575, %v934, %v933
        %v936 = vrot.slane %v897, 5
        %v937 = vsel %vm578, %v936, %v935
        %v938 = vrot.slane %v898, 4
        %v939 = vsel %vm581, %v938, %v937
        %v940 = vrot.slane %v899, 3
        %v941 = vsel %vm584, %v940, %v939
        %v942 = vrot.slane %v900, 2
        %v943 = vsel %vm587, %v942, %v941
        %v944 = vrot.slane %v901, 1
        %v945 = vsel %vm590, %v944, %v943
        %946 = vrot.lane.b32.xlu0 %v931, 120
        %v947 = vpop.permute.xlu0 %946
        %948 = vrot.lane.b32.xlu0 %v945, 120
        %v949 = vpop.permute.xlu0 %948
        %vm952 = vcmask 1048512
        %953 = vst.msk [vmem:[#allocation3] sm:$0xff] %vm952, %v947
        %vm954 = vcmask 130048
        %955 = vst.msk [vmem:[#allocation3 + $0x8] sm:$0xff] %vm954, %v947
        %956 = vst.msk [vmem:[#allocation3 + $0x10] sm:$0xff] %vm952, %v949
        %957 = vst.msk [vmem:[#allocation3 + $0x18] sm:$0xff] %vm954, %v949
        %v958 = vld [vmem:[#allocation2 + $0x6] sm:$0x1]
        %v959 = vld [vmem:[#allocation2 + $0xe] sm:$0x1]
        %v960 = vld [vmem:[#allocation2 + $0x16] sm:$0x1]
        %v961 = vld [vmem:[#allocation2 + $0x1e] sm:$0x1]
        %v962 = vld [vmem:[#allocation2 + $0x26] sm:$0x1]
        %v963 = vld [vmem:[#allocation2 + $0x2e] sm:$0x1]
        %v964 = vld [vmem:[#allocation2 + $0x36] sm:$0x1]
        %v965 = vld [vmem:[#allocation2 + $0x3e] sm:$0x1]
        %v966 = vld [vmem:[#allocation2 + $0x46] sm:$0x1]
        %v967 = vld [vmem:[#allocation2 + $0x4e] sm:$0x1]
        %v968 = vld [vmem:[#allocation2 + $0x56] sm:$0x1]
        %v969 = vld [vmem:[#allocation2 + $0x5e] sm:$0x1]
        %v970 = vld [vmem:[#allocation2 + $0x66] sm:$0x1]
        %v971 = vld [vmem:[#allocation2 + $0x6e] sm:$0x1]
        %v972 = vld [vmem:[#allocation2 + $0x76] sm:$0x1]
        %v973 = vld [vmem:[#allocation2 + $0x7e] sm:$0x1]
        %v990 = vrot.slane %v959, 7
        %v991 = vsel %vm572, %v990, %v958
        %v992 = vrot.slane %v960, 6
        %v993 = vsel %vm575, %v992, %v991
        %v994 = vrot.slane %v961, 5
        %v995 = vsel %vm578, %v994, %v993
        %v996 = vrot.slane %v962, 4
        %v997 = vsel %vm581, %v996, %v995
        %v998 = vrot.slane %v963, 3
        %v999 = vsel %vm584, %v998, %v997
        %v1000 = vrot.slane %v964, 2
        %v1001 = vsel %vm587, %v1000, %v999
        %v1002 = vrot.slane %v965, 1
        %v1003 = vsel %vm590, %v1002, %v1001
        %v1004 = vrot.slane %v967, 7
        %v1005 = vsel %vm572, %v1004, %v966
        %v1006 = vrot.slane %v968, 6
        %v1007 = vsel %vm575, %v1006, %v1005
        %v1008 = vrot.slane %v969, 5
        %v1009 = vsel %vm578, %v1008, %v1007
        %v1010 = vrot.slane %v970, 4
        %v1011 = vsel %vm581, %v1010, %v1009
        %v1012 = vrot.slane %v971, 3
        %v1013 = vsel %vm584, %v1012, %v1011
        %v1014 = vrot.slane %v972, 2
        %v1015 = vsel %vm587, %v1014, %v1013
        %v1016 = vrot.slane %v973, 1
        %v1017 = vsel %vm590, %v1016, %v1015
        %1018 = vrot.lane.b32.xlu0 %v1003, 16
        %v1019 = vpop.permute.xlu0 %1018
        %1020 = vrot.lane.b32.xlu0 %v1017, 16
        %v1021 = vpop.permute.xlu0 %1020
        %vm1024 = vcmask 326784
        %1025 = vst.msk [vmem:[#allocation3 + $0x8] sm:$0xff] %vm1024, %v1019
        %1026 = vst.msk [vmem:[#allocation3 + $0x18] sm:$0xff] %vm1024, %v1021
        %v1027 = vld [vmem:[#allocation2 + $0x7] sm:$0x1]
        %v1028 = vld [vmem:[#allocation2 + $0xf] sm:$0x1]
        %v1029 = vld [vmem:[#allocation2 + $0x17] sm:$0x1]
        %v1030 = vld [vmem:[#allocation2 + $0x1f] sm:$0x1]
        %v1031 = vld [vmem:[#allocation2 + $0x27] sm:$0x1]
        %v1032 = vld [vmem:[#allocation2 + $0x2f] sm:$0x1]
        %v1033 = vld [vmem:[#allocation2 + $0x37] sm:$0x1]
        %v1034 = vld [vmem:[#allocation2 + $0x3f] sm:$0x1]
        %v1035 = vld [vmem:[#allocation2 + $0x47] sm:$0x1]
        %v1036 = vld [vmem:[#allocation2 + $0x4f] sm:$0x1]
        %v1037 = vld [vmem:[#allocation2 + $0x57] sm:$0x1]
        %v1038 = vld [vmem:[#allocation2 + $0x5f] sm:$0x1]
        %v1039 = vld [vmem:[#allocation2 + $0x67] sm:$0x1]
        %v1040 = vld [vmem:[#allocation2 + $0x6f] sm:$0x1]
        %v1041 = vld [vmem:[#allocation2 + $0x77] sm:$0x1]
        %v1042 = vld [vmem:[#allocation2 + $0x7f] sm:$0x1]
        %v1059 = vrot.slane %v1028, 7
        %v1060 = vsel %vm572, %v1059, %v1027
        %v1061 = vrot.slane %v1029, 6
        %v1062 = vsel %vm575, %v1061, %v1060
        %v1063 = vrot.slane %v1030, 5
        %v1064 = vsel %vm578, %v1063, %v1062
        %v1065 = vrot.slane %v1031, 4
        %v1066 = vsel %vm581, %v1065, %v1064
        %v1067 = vrot.slane %v1032, 3
        %v1068 = vsel %vm584, %v1067, %v1066
        %v1069 = vrot.slane %v1033, 2
        %v1070 = vsel %vm587, %v1069, %v1068
        %v1071 = vrot.slane %v1034, 1
        %v1072 = vsel %vm590, %v1071, %v1070
        %v1073 = vrot.slane %v1036, 7
        %v1074 = vsel %vm572, %v1073, %v1035
        %v1075 = vrot.slane %v1037, 6
        %v1076 = vsel %vm575, %v1075, %v1074
        %v1077 = vrot.slane %v1038, 5
        %v1078 = vsel %vm578, %v1077, %v1076
        %v1079 = vrot.slane %v1039, 4
        %v1080 = vsel %vm581, %v1079, %v1078
        %v1081 = vrot.slane %v1040, 3
        %v1082 = vsel %vm584, %v1081, %v1080
        %v1083 = vrot.slane %v1041, 2
        %v1084 = vsel %vm587, %v1083, %v1082
        %v1085 = vrot.slane %v1042, 1
        %v1086 = vsel %vm590, %v1085, %v1084
        %1087 = vrot.lane.b32.xlu0 %v1072, 40
        %v1088 = vpop.permute.xlu0 %1087
        %1089 = vrot.lane.b32.xlu0 %v1086, 40
        %v1090 = vpop.permute.xlu0 %1089
        %vm1093 = vcmask 523584
        %1094 = vst.msk [vmem:[#allocation3 + $0x8] sm:$0xff] %vm1093, %v1088
        %1095 = vst.msk [vmem:[#allocation3 + $0x18] sm:$0xff] %vm1093, %v1090
        %v1096 = vld [vmem:[#allocation3] sm:$0xff]
        %v1097 = vld [vmem:[#allocation3 + $0x8] sm:$0xff]
        %v1098 = vld [vmem:[#allocation3 + $0x10] sm:$0xff]
        %v1099 = vld [vmem:[#allocation3 + $0x18] sm:$0xff]
        %v1100 = vld [vmem:[%s2] sm:$0xff]
        %v1101 = vld [vmem:[%s2 + $0x8] sm:$0xff]
        %v1102 = vld [vmem:[%s2 + $0x10] sm:$0xff]
        %v1103 = vld [vmem:[%s2 + $0x18] sm:$0xff]
        %v1104 = vld [vmem:[%s2 + $0x20] sm:$0xff]
        %v1105 = vld [vmem:[%s2 + $0x28] sm:$0xff]
        %v1106 = vld [vmem:[%s2 + $0x30] sm:$0xff]
        %v1107 = vld [vmem:[%s2 + $0x38] sm:$0xff]
        %v1108 = vld [vmem:[%s2 + $0x40] sm:$0xff]
        %v1109 = vld [vmem:[%s2 + $0x48] sm:$0xff]
        %v1110 = vld [vmem:[%s2 + $0x50] sm:$0xff]
        %v1111 = vld [vmem:[%s2 + $0x58] sm:$0xff]
        %v1112 = vld [vmem:[%s2 + $0x60] sm:$0xff]
        %v1113 = vld [vmem:[%s2 + $0x68] sm:$0xff]
        %v1114 = vld [vmem:[%s2 + $0x70] sm:$0xff]
        %v1115 = vld [vmem:[%s2 + $0x78] sm:$0xff]
        %v1116 = vld [vmem:[%s2 + $0x80] sm:$0xff]
        %v1117 = vld [vmem:[%s2 + $0x88] sm:$0xff]
        %v1118 = vld [vmem:[%s2 + $0x90] sm:$0xff]
        %v1119 = vld [vmem:[%s2 + $0x98] sm:$0xff]
        %v1120 = vld [vmem:[%s2 + $0xa0] sm:$0xff]
        %v1121 = vld [vmem:[%s2 + $0xa8] sm:$0xff]
        %v1122 = vld [vmem:[%s2 + $0xb0] sm:$0xff]
        %v1123 = vld [vmem:[%s2 + $0xb8] sm:$0xff]
        %v1124 = vld [vmem:[%s3] sm:$0x1]
        %v1126 = vlaneseq
        %v1127 = vshrl.u32 %v1126, 7
        %v1128 = vsub.s32 0, %v1127
        %v1129 = vrot.slane %v1124, %v1128
        %vm1131 = vcmask 523264
        %v1133 = vsel %vm1131, %v1097, 0
        %v1136 = vsel %vm1131, %v1099, 0
        %1138 = vmatprep.subr.mxu0 0.0
        %1139 = vmatpush1.msra.mxu0 %v1115
        %1140 = vmatprep.subr.mxu0 0.0
        %1141 = vmatpush1.msra.mxu0 %v1114
        %1142 = vmatprep.subr.mxu0 0.0
        %1143 = vmatpush1.msra.mxu0 %v1113
        %1144 = vmatprep.subr.mxu0 0.0
        %1145 = vmatpush1.msra.mxu0 %v1112
        %1146 = vmatprep.subr.mxu0 0.0
        %1147 = vmatpush1.msra.mxu0 %v1111
        %1148 = vmatprep.subr.mxu0 0.0
        %1149 = vmatpush1.msra.mxu0 %v1110
        %1150 = vmatprep.subr.mxu0 0.0
        %1151 = vmatpush1.msra.mxu0 %v1109
        %1152 = vmatprep.subr.mxu0 0.0
        %1153 = vmatpush1.msra.mxu0 %v1108
        %1154 = vmatprep.subr.mxu0 0.0
        %1155 = vmatpush1.msra.mxu0 %v1107
        %1156 = vmatprep.subr.mxu0 0.0
        %1157 = vmatpush1.msra.mxu0 %v1106
        %1158 = vmatprep.subr.mxu0 0.0
        %1159 = vmatpush1.msra.mxu0 %v1105
        %1160 = vmatprep.subr.mxu0 0.0
        %1161 = vmatpush1.msra.mxu0 %v1104
        %1162 = vmatprep.subr.mxu0 0.0
        %1163 = vmatpush1.msra.mxu0 %v1103
        %1164 = vmatprep.subr.mxu0 0.0
        %1165 = vmatpush1.msra.mxu0 %v1102
        %1166 = vmatprep.subr.mxu0 0.0
        %1167 = vmatpush1.msra.mxu0 %v1101
        %1168 = vmatprep.subr.mxu0 0.0
        %1169 = vmatpush1.msra.mxu0 %v1100
        %1170 = vmatprep.subr.mxu0 0.0
        %1171 = vmatpush2.msra.mxu0 0.0
        %1172 = vmatprep.subr.mxu0 0.0
        %1173 = vmatpush2.msra.mxu0 0.0
        %1174 = vmatprep.subr.mxu0 0.0
        %1175 = vmatpush2.msra.mxu0 0.0
        %1176 = vmatprep.subr.mxu0 0.0
        %1177 = vmatpush2.msra.mxu0 0.0
        %1178 = vmatprep.subr.mxu0 0.0
        %1179 = vmatpush2.msra.mxu0 0.0
        %1180 = vmatprep.subr.mxu0 0.0
        %1181 = vmatpush2.msra.mxu0 0.0
        %1182 = vmatprep.subr.mxu0 0.0
        %1183 = vmatpush2.msra.mxu0 0.0
        %1184 = vmatprep.subr.mxu0 0.0
        %1185 = vmatpush2.msra.mxu0 0.0
        %1186 = vmatprep.subr.mxu0 0.0
        %1187 = vmatpush2.msra.mxu0 %v1123
        %1188 = vmatprep.subr.mxu0 0.0
        %1189 = vmatpush2.msra.mxu0 %v1122
        %1190 = vmatprep.subr.mxu0 0.0
        %1191 = vmatpush2.msra.mxu0 %v1121
        %1192 = vmatprep.subr.mxu0 0.0
        %1193 = vmatpush2.msra.mxu0 %v1120
        %1194 = vmatprep.subr.mxu0 0.0
        %1195 = vmatpush2.msra.mxu0 %v1119
        %1196 = vmatprep.subr.mxu0 0.0
        %1197 = vmatpush2.msra.mxu0 %v1118
        %1198 = vmatprep.subr.mxu0 0.0
        %1199 = vmatpush2.msra.mxu0 %v1117
        %1200 = vmatprep.subr.mxu0 0.0
        %1201 = vmatpush2.msra.mxu0 %v1116
        %1202 = vmatprep.mubr.f32.mxu0 %v1133
        %1203 = vmatmul.mubr.f32.gmra.mxu0 %v1096
        %v1204 = vpop.f32.mrf.mxu0
        %v1205 = vadd.f32 %v1129, %v1204
        %v1206 = vpop.f32.mrf.mxu0
        %1207 = vmatprep.mubr.f32.mxu0 %v1136
        %1208 = vmatmul.mubr.f32.gmra.mxu0 %v1098
        %v1209 = vpop.f32.mrf.mxu0
        %v1210 = vadd.f32 %v1129, %v1209
        %v1211 = vpop.f32.mrf.mxu0
        %1212 = vdwg.mxu0
        %v1213 = vld [vmem:[%s360] sm:$0xff]
        %v1214 = vld [vmem:[%s360 + $0x8] sm:$0xff]
        %v1215 = vsub.f32 1.0, %v1213
        %v1216 = vsub.f32 1.0, %v1214
        %1218 = vset.pattern.permute.xlu0 0
        %1219 = vperm.xlu0 %1218, %v1215
        %v1220 = vpop.permute.xlu0 %1219
        %1223 = vset.pattern.permute.xlu0 0
        %1224 = vperm.xlu0 %1223, %v1216
        %v1225 = vpop.permute.xlu0 %1224
        %v1227 = vmul.f32 %v1205, %v1220
        %v1228 = vmul.f32 %v1210, %v1225
        %v1229 = vld [vmem:[%s4] sm:$0x1]
        %v1231 = vlaneseq
        %v1232 = vshrl.u32 %v1231, 7
        %v1233 = vsub.s32 0, %v1232
        %v1234 = vrot.slane %v1229, %v1233
        %1237 = vset.pattern.permute.xlu0 0
        %1238 = vperm.xlu0 %1237, %v1213
        %v1239 = vpop.permute.xlu0 %1238
        %1242 = vset.pattern.permute.xlu0 0
        %1243 = vperm.xlu0 %1242, %v1214
        %v1244 = vpop.permute.xlu0 %1243
        %v1246 = vmul.f32 %v1234, %v1239
        %v1247 = vmul.f32 %v1234, %v1244
        %v1248 = vadd.f32 %v1227, %v1246
        %v1249 = vadd.f32 %v1228, %v1247
        %v1250 = vld [vmem:[%s5] sm:$0xff]
        %v1251 = vld [vmem:[%s5 + $0x8] sm:$0xff]
        %v1252 = vld [vmem:[%s5 + $0x10] sm:$0xff]
        %v1253 = vld [vmem:[%s5 + $0x18] sm:$0xff]
        %v1254 = vld [vmem:[%s5 + $0x20] sm:$0xff]
        %v1255 = vld [vmem:[%s5 + $0x28] sm:$0xff]
        %v1256 = vld [vmem:[%s5 + $0x30] sm:$0xff]
        %v1257 = vld [vmem:[%s5 + $0x38] sm:$0xff]
        %v1258 = vld [vmem:[%s6] sm:$0x3]
        %v1260 = vlaneseq
        %v1261 = vshrl.u32 %v1260, 7
        %v1262 = vsub.s32 0, %v1261
        %v1263 = vrot.slane %v1258, %v1262
        %v1264 = vlaneseq
        %v1265 = vshrl.u32 %v1264, 7
        %v1266 = vsub.s32 1, %v1265
        %v1267 = vrot.slane %v1258, %v1266
        %vm1270 = vcmask 261120
        %v1272 = vsel %vm1270, %v1248, 0
        %v1275 = vsel %vm1270, %v1249, 0
        %1277 = vmatprep.subr.mxu0 0.0
        %1278 = vmatpush1.msra.mxu0 0.0
        %1279 = vmatprep.subr.mxu0 0.0
        %1280 = vmatpush1.msra.mxu0 0.0
        %1281 = vmatprep.subr.mxu0 0.0
        %1282 = vmatpush1.msra.mxu0 0.0
        %1283 = vmatprep.subr.mxu0 0.0
        %1284 = vmatpush1.msra.mxu0 0.0
        %1285 = vmatprep.subr.mxu0 0.0
        %1286 = vmatpush1.msra.mxu0 0.0
        %1287 = vmatprep.subr.mxu0 0.0
        %1288 = vmatpush1.msra.mxu0 0.0
        %1289 = vmatprep.subr.mxu0 0.0
        %1290 = vmatpush1.msra.mxu0 0.0
        %1291 = vmatprep.subr.mxu0 0.0
        %1292 = vmatpush1.msra.mxu0 0.0
        %1293 = vmatprep.subr.mxu0 0.0
        %1294 = vmatpush1.msra.mxu0 0.0
        %1295 = vmatprep.subr.mxu0 0.0
        %1296 = vmatpush1.msra.mxu0 0.0
        %1297 = vmatprep.subr.mxu0 0.0
        %1298 = vmatpush1.msra.mxu0 0.0
        %1299 = vmatprep.subr.mxu0 0.0
        %1300 = vmatpush1.msra.mxu0 0.0
        %1301 = vmatprep.subr.mxu0 %v1257
        %1302 = vmatpush1.msra.mxu0 %v1256
        %1303 = vmatprep.subr.mxu0 %v1255
        %1304 = vmatpush1.msra.mxu0 %v1254
        %1305 = vmatprep.subr.mxu0 %v1253
        %1306 = vmatpush1.msra.mxu0 %v1252
        %1307 = vmatprep.subr.mxu0 %v1251
        %1308 = vmatpush1.msra.mxu0 %v1250
        %1309 = vmatprep.subr.mxu0 0.0
        %1310 = vmatpush2.msra.mxu0 0.0
        %1311 = vmatprep.subr.mxu0 0.0
        %1312 = vmatpush2.msra.mxu0 0.0
        %1313 = vmatprep.subr.mxu0 0.0
        %1314 = vmatpush2.msra.mxu0 0.0
        %1315 = vmatprep.subr.mxu0 0.0
        %1316 = vmatpush2.msra.mxu0 0.0
        %1317 = vmatprep.subr.mxu0 0.0
        %1318 = vmatpush2.msra.mxu0 0.0
        %1319 = vmatprep.subr.mxu0 0.0
        %1320 = vmatpush2.msra.mxu0 0.0
        %1321 = vmatprep.subr.mxu0 0.0
        %1322 = vmatpush2.msra.mxu0 0.0
        %1323 = vmatprep.subr.mxu0 0.0
        %1324 = vmatpush2.msra.mxu0 0.0
        %1325 = vmatprep.subr.mxu0 0.0
        %1326 = vmatpush2.msra.mxu0 0.0
        %1327 = vmatprep.subr.mxu0 0.0
        %1328 = vmatpush2.msra.mxu0 0.0
        %1329 = vmatprep.subr.mxu0 0.0
        %1330 = vmatpush2.msra.mxu0 0.0
        %1331 = vmatprep.subr.mxu0 0.0
        %1332 = vmatpush2.msra.mxu0 0.0
        %1333 = vmatprep.subr.mxu0 0.0
        %1334 = vmatpush2.msra.mxu0 0.0
        %1335 = vmatprep.subr.mxu0 0.0
        %1336 = vmatpush2.msra.mxu0 0.0
        %1337 = vmatprep.subr.mxu0 0.0
        %1338 = vmatpush2.msra.mxu0 0.0
        %1339 = vmatprep.subr.mxu0 0.0
        %1340 = vmatpush2.msra.mxu0 0.0
        %1341 = vmatprep.mubr.f32.mxu0 0.0
        %1342 = vmatmul.mubr.f32.gmra.mxu0 %v1272
        %v1343 = vpop.f32.mrf.mxu0
        %v1344 = vadd.f32 %v1263, %v1343
        %v1345 = vpop.f32.mrf.mxu0
        %v1346 = vadd.f32 %v1267, %v1345
        %1347 = vmatprep.mubr.f32.mxu0 0.0
        %1348 = vmatmul.mubr.f32.gmra.mxu0 %v1275
        %v1349 = vpop.f32.mrf.mxu0
        %v1350 = vadd.f32 %v1263, %v1349
        %v1351 = vpop.f32.mrf.mxu0
        %v1352 = vadd.f32 %v1267, %v1351
        %1353 = vdwg.mxu0
        %v1354 = vsub.f32 %v1096, %v1344
        %v1355 = vsub.f32 %v1097, %v1346
        %v1356 = vsub.f32 %v1098, %v1350
        %v1357 = vsub.f32 %v1099, %v1352
        %v1358 = vand.u32 2147483647, %v1354
        %v1359 = vand.u32 2147483647, %v1355
        %v1360 = vand.u32 2147483647, %v1356
        %v1361 = vand.u32 2147483647, %v1357
        %v1362 = vmul.f32 %v1358, %v1239
        %v1363 = vmul.f32 %v1359, %v1239
        %v1364 = vmul.f32 %v1360, %v1244
        %v1365 = vmul.f32 %v1361, %v1244
        %v1366 = vsel %vm1131, %v1363, 0.0
        %v1367 = vadd.f32 %v1362, %v1366
        %v1368 = vadd.f32 %v1367, %v1364
        %v1369 = vsel %vm1131, %v1365, 0.0
        %v1370 = vadd.f32 %v1368, %v1369
        %1371 = vadd.xlane.f32.xlu0 %v1370
        %v1372 = vpop.xlane.xlu0 %1371
        %v1373 = vrot.slane %v1372, 4
        %v1374 = vadd.f32 %v1372, %v1373
        %v1375 = vrot.slane %v1374, 2
        %v1376 = vadd.f32 %v1374, %v1375
        %v1377 = vrot.slane %v1376, 1
        %v1378 = vadd.f32 %v1376, %v1377
        %s1379 = vtos %v1378
        %v1380 = vstv %s1379
        %1381 = vst [vmem:[%s378] sm:$0x1] %v1380
        %1382 = vst [vmem:[#allocation3] sm:$0xff] %v1344
        %1383 = vst.msk [vmem:[#allocation3 + $0x8] sm:$0xff] %vm1131, %v1346
        %1384 = vst [vmem:[#allocation3 + $0x10] sm:$0xff] %v1350
        %1385 = vst.msk [vmem:[#allocation3 + $0x18] sm:$0xff] %vm1131, %v1352
        %v1386 = vld [vmem:[#allocation3] sm:$0xff]
        %v1387 = vld [vmem:[#allocation3 + $0x10] sm:$0xff]
        %v1390 = vcombine.high %v1386, %v1386
        %v1392 = vunpack.c.l.s4 1966171168
        %v1393 = vunpack.c.0.s8 %v1392
        %v1394 = vlaneseq
        %v1395 = vshrl.u32 %v1394, 7
        %v1396 = vsub.s32 %v1393, %v1395
        %v1397 = vrot.slane %v1386, %v1396
        %v1399 = vunpack.c.l.s4 1966171168
        %v1400 = vunpack.c.0.s8 %v1399
        %v1401 = vlaneseq
        %v1402 = vshrl.u32 %v1401, 7
        %v1403 = vsub.s32 %v1400, %v1402
        %v1404 = vrot.slane %v1390, %v1403
        %v1405 = vcombine.high %v1397, %v1397
        %v1406 = vcombine.high %v1404, %v1404
        %v1408 = vunpack.c.l.s4 1966171168
        %v1409 = vunpack.c.0.s8 %v1408
        %v1410 = vlaneseq
        %v1411 = vshrl.u32 %v1410, 7
        %v1412 = vsub.s32 %v1409, %v1411
        %v1413 = vrot.slane %v1397, %v1412
        %v1415 = vunpack.c.l.s4 1966171168
        %v1416 = vunpack.c.0.s8 %v1415
        %v1417 = vlaneseq
        %v1418 = vshrl.u32 %v1417, 7
        %v1419 = vsub.s32 %v1416, %v1418
        %v1420 = vrot.slane %v1404, %v1419
        %v1422 = vunpack.c.l.s4 1966171168
        %v1423 = vunpack.c.0.s8 %v1422
        %v1424 = vlaneseq
        %v1425 = vshrl.u32 %v1424, 7
        %v1426 = vsub.s32 %v1423, %v1425
        %v1427 = vrot.slane %v1405, %v1426
        %v1429 = vunpack.c.l.s4 1966171168
        %v1430 = vunpack.c.0.s8 %v1429
        %v1431 = vlaneseq
        %v1432 = vshrl.u32 %v1431, 7
        %v1433 = vsub.s32 %v1430, %v1432
        %v1434 = vrot.slane %v1406, %v1433
        %v1435 = vcombine.high %v1413, %v1413
        %v1436 = vcombine.high %v1420, %v1420
        %v1437 = vcombine.high %v1427, %v1427
        %v1438 = vcombine.high %v1434, %v1434
        %v1439 = vcombine.high %v1387, %v1387
        %v1441 = vunpack.c.l.s4 1966171168
        %v1442 = vunpack.c.0.s8 %v1441
        %v1443 = vlaneseq
        %v1444 = vshrl.u32 %v1443, 7
        %v1445 = vsub.s32 %v1442, %v1444
        %v1446 = vrot.slane %v1387, %v1445
        %v1448 = vunpack.c.l.s4 1966171168
        %v1449 = vunpack.c.0.s8 %v1448
        %v1450 = vlaneseq
        %v1451 = vshrl.u32 %v1450, 7
        %v1452 = vsub.s32 %v1449, %v1451
        %v1453 = vrot.slane %v1439, %v1452
        %v1454 = vcombine.high %v1446, %v1446
        %v1455 = vcombine.high %v1453, %v1453
        %v1457 = vunpack.c.l.s4 1966171168
        %v1458 = vunpack.c.0.s8 %v1457
        %v1459 = vlaneseq
        %v1460 = vshrl.u32 %v1459, 7
        %v1461 = vsub.s32 %v1458, %v1460
        %v1462 = vrot.slane %v1446, %v1461
        %v1464 = vunpack.c.l.s4 1966171168
        %v1465 = vunpack.c.0.s8 %v1464
        %v1466 = vlaneseq
        %v1467 = vshrl.u32 %v1466, 7
        %v1468 = vsub.s32 %v1465, %v1467
        %v1469 = vrot.slane %v1453, %v1468
        %v1471 = vunpack.c.l.s4 1966171168
        %v1472 = vunpack.c.0.s8 %v1471
        %v1473 = vlaneseq
        %v1474 = vshrl.u32 %v1473, 7
        %v1475 = vsub.s32 %v1472, %v1474
        %v1476 = vrot.slane %v1454, %v1475
        %v1478 = vunpack.c.l.s4 1966171168
        %v1479 = vunpack.c.0.s8 %v1478
        %v1480 = vlaneseq
        %v1481 = vshrl.u32 %v1480, 7
        %v1482 = vsub.s32 %v1479, %v1481
        %v1483 = vrot.slane %v1455, %v1482
        %v1484 = vcombine.high %v1462, %v1462
        %v1485 = vcombine.high %v1469, %v1469
        %v1486 = vcombine.high %v1476, %v1476
        %v1487 = vcombine.high %v1483, %v1483
        %vm1504 = vcmask 188416
        %1505 = vst.msk [vmem:[#allocation2] sm:$0x1] %vm1504, %v1413
        %1506 = vst.msk [vmem:[#allocation2 + $0x8] sm:$0x1] %vm1504, %v1427
        %1507 = vst.msk [vmem:[#allocation2 + $0x10] sm:$0x1] %vm1504, %v1435
        %1508 = vst.msk [vmem:[#allocation2 + $0x18] sm:$0x1] %vm1504, %v1437
        %1509 = vst.msk [vmem:[#allocation2 + $0x20] sm:$0x1] %vm1504, %v1420
        %1510 = vst.msk [vmem:[#allocation2 + $0x28] sm:$0x1] %vm1504, %v1434
        %1511 = vst.msk [vmem:[#allocation2 + $0x30] sm:$0x1] %vm1504, %v1436
        %1512 = vst.msk [vmem:[#allocation2 + $0x38] sm:$0x1] %vm1504, %v1438
        %1513 = vst.msk [vmem:[#allocation2 + $0x40] sm:$0x1] %vm1504, %v1462
        %1514 = vst.msk [vmem:[#allocation2 + $0x48] sm:$0x1] %vm1504, %v1476
        %1515 = vst.msk [vmem:[#allocation2 + $0x50] sm:$0x1] %vm1504, %v1484
        %1516 = vst.msk [vmem:[#allocation2 + $0x58] sm:$0x1] %vm1504, %v1486
        %1517 = vst.msk [vmem:[#allocation2 + $0x60] sm:$0x1] %vm1504, %v1469
        %1518 = vst.msk [vmem:[#allocation2 + $0x68] sm:$0x1] %vm1504, %v1483
        %1519 = vst.msk [vmem:[#allocation2 + $0x70] sm:$0x1] %vm1504, %v1485
        %1520 = vst.msk [vmem:[#allocation2 + $0x78] sm:$0x1] %vm1504, %v1487
        %v1521 = vld [vmem:[#allocation3] sm:$0xff]
        %v1522 = vld [vmem:[#allocation3 + $0x10] sm:$0xff]
        %v1525 = vcombine.high %v1521, %v1521
        %v1527 = vunpack.c.l.s4 1966171168
        %v1528 = vunpack.c.0.s8 %v1527
        %v1529 = vlaneseq
        %v1530 = vshrl.u32 %v1529, 7
        %v1531 = vsub.s32 %v1528, %v1530
        %v1532 = vrot.slane %v1521, %v1531
        %v1534 = vunpack.c.l.s4 1966171168
        %v1535 = vunpack.c.0.s8 %v1534
        %v1536 = vlaneseq
        %v1537 = vshrl.u32 %v1536, 7
        %v1538 = vsub.s32 %v1535, %v1537
        %v1539 = vrot.slane %v1525, %v1538
        %v1540 = vcombine.high %v1532, %v1532
        %v1541 = vcombine.high %v1539, %v1539
        %v1543 = vunpack.c.l.s4 1966171168
        %v1544 = vunpack.c.0.s8 %v1543
        %v1545 = vlaneseq
        %v1546 = vshrl.u32 %v1545, 7
        %v1547 = vsub.s32 %v1544, %v1546
        %v1548 = vrot.slane %v1532, %v1547
        %v1550 = vunpack.c.l.s4 1966171168
        %v1551 = vunpack.c.0.s8 %v1550
        %v1552 = vlaneseq
        %v1553 = vshrl.u32 %v1552, 7
        %v1554 = vsub.s32 %v1551, %v1553
        %v1555 = vrot.slane %v1539, %v1554
        %v1557 = vunpack.c.l.s4 1966171168
        %v1558 = vunpack.c.0.s8 %v1557
        %v1559 = vlaneseq
        %v1560 = vshrl.u32 %v1559, 7
        %v1561 = vsub.s32 %v1558, %v1560
        %v1562 = vrot.slane %v1540, %v1561
        %v1564 = vunpack.c.l.s4 1966171168
        %v1565 = vunpack.c.0.s8 %v1564
        %v1566 = vlaneseq
        %v1567 = vshrl.u32 %v1566, 7
        %v1568 = vsub.s32 %v1565, %v1567
        %v1569 = vrot.slane %v1541, %v1568
        %v1570 = vcombine.high %v1548, %v1548
        %v1571 = vcombine.high %v1555, %v1555
        %v1572 = vcombine.high %v1562, %v1562
        %v1573 = vcombine.high %v1569, %v1569
        %v1574 = vcombine.high %v1522, %v1522
        %v1576 = vunpack.c.l.s4 1966171168
        %v1577 = vunpack.c.0.s8 %v1576
        %v1578 = vlaneseq
        %v1579 = vshrl.u32 %v1578, 7
        %v1580 = vsub.s32 %v1577, %v1579
        %v1581 = vrot.slane %v1522, %v1580
        %v1583 = vunpack.c.l.s4 1966171168
        %v1584 = vunpack.c.0.s8 %v1583
        %v1585 = vlaneseq
        %v1586 = vshrl.u32 %v1585, 7
        %v1587 = vsub.s32 %v1584, %v1586
        %v1588 = vrot.slane %v1574, %v1587
        %v1589 = vcombine.high %v1581, %v1581
        %v1590 = vcombine.high %v1588, %v1588
        %v1592 = vunpack.c.l.s4 1966171168
        %v1593 = vunpack.c.0.s8 %v1592
        %v1594 = vlaneseq
        %v1595 = vshrl.u32 %v1594, 7
        %v1596 = vsub.s32 %v1593, %v1595
        %v1597 = vrot.slane %v1581, %v1596
        %v1599 = vunpack.c.l.s4 1966171168
        %v1600 = vunpack.c.0.s8 %v1599
        %v1601 = vlaneseq
        %v1602 = vshrl.u32 %v1601, 7
        %v1603 = vsub.s32 %v1600, %v1602
        %v1604 = vrot.slane %v1588, %v1603
        %v1606 = vunpack.c.l.s4 1966171168
        %v1607 = vunpack.c.0.s8 %v1606
        %v1608 = vlaneseq
        %v1609 = vshrl.u32 %v1608, 7
        %v1610 = vsub.s32 %v1607, %v1609
        %v1611 = vrot.slane %v1589, %v1610
        %v1613 = vunpack.c.l.s4 1966171168
        %v1614 = vunpack.c.0.s8 %v1613
        %v1615 = vlaneseq
        %v1616 = vshrl.u32 %v1615, 7
        %v1617 = vsub.s32 %v1614, %v1616
        %v1618 = vrot.slane %v1590, %v1617
        %v1619 = vcombine.high %v1597, %v1597
        %v1620 = vcombine.high %v1604, %v1604
        %v1621 = vcombine.high %v1611, %v1611
        %v1622 = vcombine.high %v1618, %v1618
        %v1623 = vlaneseq
        %v1624 = vshrl.u32 %v1623, 7
        %v1625 = vsub.s32 0, %v1624
        %v1626 = vrot.slane %v1548, %v1625
        %v1627 = vlaneseq
        %v1628 = vshrl.u32 %v1627, 7
        %v1629 = vsub.s32 0, %v1628
        %v1630 = vrot.slane %v1562, %v1629
        %v1631 = vlaneseq
        %v1632 = vshrl.u32 %v1631, 7
        %v1633 = vsub.s32 0, %v1632
        %v1634 = vrot.slane %v1570, %v1633
        %v1635 = vlaneseq
        %v1636 = vshrl.u32 %v1635, 7
        %v1637 = vsub.s32 0, %v1636
        %v1638 = vrot.slane %v1572, %v1637
        %v1639 = vlaneseq
        %v1640 = vshrl.u32 %v1639, 7
        %v1641 = vsub.s32 0, %v1640
        %v1642 = vrot.slane %v1555, %v1641
        %v1643 = vlaneseq
        %v1644 = vshrl.u32 %v1643, 7
        %v1645 = vsub.s32 0, %v1644
        %v1646 = vrot.slane %v1569, %v1645
        %v1647 = vlaneseq
        %v1648 = vshrl.u32 %v1647, 7
        %v1649 = vsub.s32 0, %v1648
        %v1650 = vrot.slane %v1571, %v1649
        %v1651 = vlaneseq
        %v1652 = vshrl.u32 %v1651, 7
        %v1653 = vsub.s32 0, %v1652
        %v1654 = vrot.slane %v1573, %v1653
        %v1655 = vlaneseq
        %v1656 = vshrl.u32 %v1655, 7
        %v1657 = vsub.s32 0, %v1656
        %v1658 = vrot.slane %v1597, %v1657
        %v1659 = vlaneseq
        %v1660 = vshrl.u32 %v1659, 7
        %v1661 = vsub.s32 0, %v1660
        %v1662 = vrot.slane %v1611, %v1661
        %v1663 = vlaneseq
        %v1664 = vshrl.u32 %v1663, 7
        %v1665 = vsub.s32 0, %v1664
        %v1666 = vrot.slane %v1619, %v1665
        %v1667 = vlaneseq
        %v1668 = vshrl.u32 %v1667, 7
        %v1669 = vsub.s32 0, %v1668
        %v1670 = vrot.slane %v1621, %v1669
        %v1671 = vlaneseq
        %v1672 = vshrl.u32 %v1671, 7
        %v1673 = vsub.s32 0, %v1672
        %v1674 = vrot.slane %v1604, %v1673
        %v1675 = vlaneseq
        %v1676 = vshrl.u32 %v1675, 7
        %v1677 = vsub.s32 0, %v1676
        %v1678 = vrot.slane %v1618, %v1677
        %v1679 = vlaneseq
        %v1680 = vshrl.u32 %v1679, 7
        %v1681 = vsub.s32 0, %v1680
        %v1682 = vrot.slane %v1620, %v1681
        %v1683 = vlaneseq
        %v1684 = vshrl.u32 %v1683, 7
        %v1685 = vsub.s32 0, %v1684
        %v1686 = vrot.slane %v1622, %v1685
        %1687 = vrot.lane.b32.xlu0 %v1626, 104
        %v1688 = vpop.permute.xlu0 %1687
        %1689 = vrot.lane.b32.xlu0 %v1630, 104
        %v1690 = vpop.permute.xlu0 %1689
        %1691 = vrot.lane.b32.xlu0 %v1634, 104
        %v1692 = vpop.permute.xlu0 %1691
        %1693 = vrot.lane.b32.xlu0 %v1638, 104
        %v1694 = vpop.permute.xlu0 %1693
        %1695 = vrot.lane.b32.xlu0 %v1642, 104
        %v1696 = vpop.permute.xlu0 %1695
        %1697 = vrot.lane.b32.xlu0 %v1646, 104
        %v1698 = vpop.permute.xlu0 %1697
        %1699 = vrot.lane.b32.xlu0 %v1650, 104
        %v1700 = vpop.permute.xlu0 %1699
        %1701 = vrot.lane.b32.xlu0 %v1654, 104
        %v1702 = vpop.permute.xlu0 %1701
        %1703 = vrot.lane.b32.xlu0 %v1658, 104
        %v1704 = vpop.permute.xlu0 %1703
        %1705 = vrot.lane.b32.xlu0 %v1662, 104
        %v1706 = vpop.permute.xlu0 %1705
        %1707 = vrot.lane.b32.xlu0 %v1666, 104
        %v1708 = vpop.permute.xlu0 %1707
        %1709 = vrot.lane.b32.xlu0 %v1670, 104
        %v1710 = vpop.permute.xlu0 %1709
        %1711 = vrot.lane.b32.xlu0 %v1674, 104
        %v1712 = vpop.permute.xlu0 %1711
        %1713 = vrot.lane.b32.xlu0 %v1678, 104
        %v1714 = vpop.permute.xlu0 %1713
        %1715 = vrot.lane.b32.xlu0 %v1682, 104
        %v1716 = vpop.permute.xlu0 %1715
        %1717 = vrot.lane.b32.xlu0 %v1686, 104
        %v1718 = vpop.permute.xlu0 %1717
        %1735 = vst.msk [vmem:[#allocation2 + $0x1] sm:$0x1] %vm1504, %v1688
        %1736 = vst.msk [vmem:[#allocation2 + $0x9] sm:$0x1] %vm1504, %v1690
        %1737 = vst.msk [vmem:[#allocation2 + $0x11] sm:$0x1] %vm1504, %v1692
        %1738 = vst.msk [vmem:[#allocation2 + $0x19] sm:$0x1] %vm1504, %v1694
        %1739 = vst.msk [vmem:[#allocation2 + $0x21] sm:$0x1] %vm1504, %v1696
        %1740 = vst.msk [vmem:[#allocation2 + $0x29] sm:$0x1] %vm1504, %v1698
        %1741 = vst.msk [vmem:[#allocation2 + $0x31] sm:$0x1] %vm1504, %v1700
        %1742 = vst.msk [vmem:[#allocation2 + $0x39] sm:$0x1] %vm1504, %v1702
        %1743 = vst.msk [vmem:[#allocation2 + $0x41] sm:$0x1] %vm1504, %v1704
        %1744 = vst.msk [vmem:[#allocation2 + $0x49] sm:$0x1] %vm1504, %v1706
        %1745 = vst.msk [vmem:[#allocation2 + $0x51] sm:$0x1] %vm1504, %v1708
        %1746 = vst.msk [vmem:[#allocation2 + $0x59] sm:$0x1] %vm1504, %v1710
        %1747 = vst.msk [vmem:[#allocation2 + $0x61] sm:$0x1] %vm1504, %v1712
        %1748 = vst.msk [vmem:[#allocation2 + $0x69] sm:$0x1] %vm1504, %v1714
        %1749 = vst.msk [vmem:[#allocation2 + $0x71] sm:$0x1] %vm1504, %v1716
        %1750 = vst.msk [vmem:[#allocation2 + $0x79] sm:$0x1] %vm1504, %v1718
        %v1751 = vld [vmem:[#allocation3] sm:$0xff]
        %v1752 = vld [vmem:[#allocation3 + $0x10] sm:$0xff]
        %v1755 = vcombine.high %v1751, %v1751
        %v1757 = vunpack.c.l.s4 1966171168
        %v1758 = vunpack.c.0.s8 %v1757
        %v1759 = vlaneseq
        %v1760 = vshrl.u32 %v1759, 7
        %v1761 = vsub.s32 %v1758, %v1760
        %v1762 = vrot.slane %v1751, %v1761
        %v1764 = vunpack.c.l.s4 1966171168
        %v1765 = vunpack.c.0.s8 %v1764
        %v1766 = vlaneseq
        %v1767 = vshrl.u32 %v1766, 7
        %v1768 = vsub.s32 %v1765, %v1767
        %v1769 = vrot.slane %v1755, %v1768
        %v1770 = vcombine.high %v1762, %v1762
        %v1771 = vcombine.high %v1769, %v1769
        %v1773 = vunpack.c.l.s4 1966171168
        %v1774 = vunpack.c.0.s8 %v1773
        %v1775 = vlaneseq
        %v1776 = vshrl.u32 %v1775, 7
        %v1777 = vsub.s32 %v1774, %v1776
        %v1778 = vrot.slane %v1762, %v1777
        %v1780 = vunpack.c.l.s4 1966171168
        %v1781 = vunpack.c.0.s8 %v1780
        %v1782 = vlaneseq
        %v1783 = vshrl.u32 %v1782, 7
        %v1784 = vsub.s32 %v1781, %v1783
        %v1785 = vrot.slane %v1769, %v1784
        %v1787 = vunpack.c.l.s4 1966171168
        %v1788 = vunpack.c.0.s8 %v1787
        %v1789 = vlaneseq
        %v1790 = vshrl.u32 %v1789, 7
        %v1791 = vsub.s32 %v1788, %v1790
        %v1792 = vrot.slane %v1770, %v1791
        %v1794 = vunpack.c.l.s4 1966171168
        %v1795 = vunpack.c.0.s8 %v1794
        %v1796 = vlaneseq
        %v1797 = vshrl.u32 %v1796, 7
        %v1798 = vsub.s32 %v1795, %v1797
        %v1799 = vrot.slane %v1771, %v1798
        %v1800 = vcombine.high %v1778, %v1778
        %v1801 = vcombine.high %v1785, %v1785
        %v1802 = vcombine.high %v1792, %v1792
        %v1803 = vcombine.high %v1799, %v1799
        %v1804 = vcombine.high %v1752, %v1752
        %v1806 = vunpack.c.l.s4 1966171168
        %v1807 = vunpack.c.0.s8 %v1806
        %v1808 = vlaneseq
        %v1809 = vshrl.u32 %v1808, 7
        %v1810 = vsub.s32 %v1807, %v1809
        %v1811 = vrot.slane %v1752, %v1810
        %v1813 = vunpack.c.l.s4 1966171168
        %v1814 = vunpack.c.0.s8 %v1813
        %v1815 = vlaneseq
        %v1816 = vshrl.u32 %v1815, 7
        %v1817 = vsub.s32 %v1814, %v1816
        %v1818 = vrot.slane %v1804, %v1817
        %v1819 = vcombine.high %v1811, %v1811
        %v1820 = vcombine.high %v1818, %v1818
        %v1822 = vunpack.c.l.s4 1966171168
        %v1823 = vunpack.c.0.s8 %v1822
        %v1824 = vlaneseq
        %v1825 = vshrl.u32 %v1824, 7
        %v1826 = vsub.s32 %v1823, %v1825
        %v1827 = vrot.slane %v1811, %v1826
        %v1829 = vunpack.c.l.s4 1966171168
        %v1830 = vunpack.c.0.s8 %v1829
        %v1831 = vlaneseq
        %v1832 = vshrl.u32 %v1831, 7
        %v1833 = vsub.s32 %v1830, %v1832
        %v1834 = vrot.slane %v1818, %v1833
        %v1836 = vunpack.c.l.s4 1966171168
        %v1837 = vunpack.c.0.s8 %v1836
        %v1838 = vlaneseq
        %v1839 = vshrl.u32 %v1838, 7
        %v1840 = vsub.s32 %v1837, %v1839
        %v1841 = vrot.slane %v1819, %v1840
        %v1843 = vunpack.c.l.s4 1966171168
        %v1844 = vunpack.c.0.s8 %v1843
        %v1845 = vlaneseq
        %v1846 = vshrl.u32 %v1845, 7
        %v1847 = vsub.s32 %v1844, %v1846
        %v1848 = vrot.slane %v1820, %v1847
        %v1849 = vcombine.high %v1827, %v1827
        %v1850 = vcombine.high %v1834, %v1834
        %v1851 = vcombine.high %v1841, %v1841
        %v1852 = vcombine.high %v1848, %v1848
        %v1853 = vlaneseq
        %v1854 = vshrl.u32 %v1853, 7
        %v1855 = vsub.s32 0, %v1854
        %v1856 = vrot.slane %v1778, %v1855
        %v1857 = vlaneseq
        %v1858 = vshrl.u32 %v1857, 7
        %v1859 = vsub.s32 0, %v1858
        %v1860 = vrot.slane %v1792, %v1859
        %v1861 = vlaneseq
        %v1862 = vshrl.u32 %v1861, 7
        %v1863 = vsub.s32 0, %v1862
        %v1864 = vrot.slane %v1800, %v1863
        %v1865 = vlaneseq
        %v1866 = vshrl.u32 %v1865, 7
        %v1867 = vsub.s32 0, %v1866
        %v1868 = vrot.slane %v1802, %v1867
        %v1869 = vlaneseq
        %v1870 = vshrl.u32 %v1869, 7
        %v1871 = vsub.s32 0, %v1870
        %v1872 = vrot.slane %v1785, %v1871
        %v1873 = vlaneseq
        %v1874 = vshrl.u32 %v1873, 7
        %v1875 = vsub.s32 0, %v1874
        %v1876 = vrot.slane %v1799, %v1875
        %v1877 = vlaneseq
        %v1878 = vshrl.u32 %v1877, 7
        %v1879 = vsub.s32 0, %v1878
        %v1880 = vrot.slane %v1801, %v1879
        %v1881 = vlaneseq
        %v1882 = vshrl.u32 %v1881, 7
        %v1883 = vsub.s32 0, %v1882
        %v1884 = vrot.slane %v1803, %v1883
        %v1885 = vlaneseq
        %v1886 = vshrl.u32 %v1885, 7
        %v1887 = vsub.s32 0, %v1886
        %v1888 = vrot.slane %v1827, %v1887
        %v1889 = vlaneseq
        %v1890 = vshrl.u32 %v1889, 7
        %v1891 = vsub.s32 0, %v1890
        %v1892 = vrot.slane %v1841, %v1891
        %v1893 = vlaneseq
        %v1894 = vshrl.u32 %v1893, 7
        %v1895 = vsub.s32 0, %v1894
        %v1896 = vrot.slane %v1849, %v1895
        %v1897 = vlaneseq
        %v1898 = vshrl.u32 %v1897, 7
        %v1899 = vsub.s32 0, %v1898
        %v1900 = vrot.slane %v1851, %v1899
        %v1901 = vlaneseq
        %v1902 = vshrl.u32 %v1901, 7
        %v1903 = vsub.s32 0, %v1902
        %v1904 = vrot.slane %v1834, %v1903
        %v1905 = vlaneseq
        %v1906 = vshrl.u32 %v1905, 7
        %v1907 = vsub.s32 0, %v1906
        %v1908 = vrot.slane %v1848, %v1907
        %v1909 = vlaneseq
        %v1910 = vshrl.u32 %v1909, 7
        %v1911 = vsub.s32 0, %v1910
        %v1912 = vrot.slane %v1850, %v1911
        %v1913 = vlaneseq
        %v1914 = vshrl.u32 %v1913, 7
        %v1915 = vsub.s32 0, %v1914
        %v1916 = vrot.slane %v1852, %v1915
        %1917 = vrot.lane.b32.xlu0 %v1856, 80
        %v1918 = vpop.permute.xlu0 %1917
        %1919 = vrot.lane.b32.xlu0 %v1860, 80
        %v1920 = vpop.permute.xlu0 %1919
        %1921 = vrot.lane.b32.xlu0 %v1864, 80
        %v1922 = vpop.permute.xlu0 %1921
        %1923 = vrot.lane.b32.xlu0 %v1868, 80
        %v1924 = vpop.permute.xlu0 %1923
        %1925 = vrot.lane.b32.xlu0 %v1872, 80
        %v1926 = vpop.permute.xlu0 %1925
        %1927 = vrot.lane.b32.xlu0 %v1876, 80
        %v1928 = vpop.permute.xlu0 %1927
        %1929 = vrot.lane.b32.xlu0 %v1880, 80
        %v1930 = vpop.permute.xlu0 %1929
        %1931 = vrot.lane.b32.xlu0 %v1884, 80
        %v1932 = vpop.permute.xlu0 %1931
        %1933 = vrot.lane.b32.xlu0 %v1888, 80
        %v1934 = vpop.permute.xlu0 %1933
        %1935 = vrot.lane.b32.xlu0 %v1892, 80
        %v1936 = vpop.permute.xlu0 %1935
        %1937 = vrot.lane.b32.xlu0 %v1896, 80
        %v1938 = vpop.permute.xlu0 %1937
        %1939 = vrot.lane.b32.xlu0 %v1900, 80
        %v1940 = vpop.permute.xlu0 %1939
        %1941 = vrot.lane.b32.xlu0 %v1904, 80
        %v1942 = vpop.permute.xlu0 %1941
        %1943 = vrot.lane.b32.xlu0 %v1908, 80
        %v1944 = vpop.permute.xlu0 %1943
        %1945 = vrot.lane.b32.xlu0 %v1912, 80
        %v1946 = vpop.permute.xlu0 %1945
        %1947 = vrot.lane.b32.xlu0 %v1916, 80
        %v1948 = vpop.permute.xlu0 %1947
        %1965 = vst.msk [vmem:[#allocation2 + $0x2] sm:$0x1] %vm1504, %v1918
        %1966 = vst.msk [vmem:[#allocation2 + $0xa] sm:$0x1] %vm1504, %v1920
        %1967 = vst.msk [vmem:[#allocation2 + $0x12] sm:$0x1] %vm1504, %v1922
        %1968 = vst.msk [vmem:[#allocation2 + $0x1a] sm:$0x1] %vm1504, %v1924
        %1969 = vst.msk [vmem:[#allocation2 + $0x22] sm:$0x1] %vm1504, %v1926
        %1970 = vst.msk [vmem:[#allocation2 + $0x2a] sm:$0x1] %vm1504, %v1928
        %1971 = vst.msk [vmem:[#allocation2 + $0x32] sm:$0x1] %vm1504, %v1930
        %1972 = vst.msk [vmem:[#allocation2 + $0x3a] sm:$0x1] %vm1504, %v1932
        %1973 = vst.msk [vmem:[#allocation2 + $0x42] sm:$0x1] %vm1504, %v1934
        %1974 = vst.msk [vmem:[#allocation2 + $0x4a] sm:$0x1] %vm1504, %v1936
        %1975 = vst.msk [vmem:[#allocation2 + $0x52] sm:$0x1] %vm1504, %v1938
        %1976 = vst.msk [vmem:[#allocation2 + $0x5a] sm:$0x1] %vm1504, %v1940
        %1977 = vst.msk [vmem:[#allocation2 + $0x62] sm:$0x1] %vm1504, %v1942
        %1978 = vst.msk [vmem:[#allocation2 + $0x6a] sm:$0x1] %vm1504, %v1944
        %1979 = vst.msk [vmem:[#allocation2 + $0x72] sm:$0x1] %vm1504, %v1946
        %1980 = vst.msk [vmem:[#allocation2 + $0x7a] sm:$0x1] %vm1504, %v1948
        %v1981 = vld [vmem:[#allocation3] sm:$0xff]
        %v1982 = vld [vmem:[#allocation3 + $0x10] sm:$0xff]
        %v1985 = vcombine.high %v1981, %v1981
        %v1987 = vunpack.c.l.s4 1966171168
        %v1988 = vunpack.c.0.s8 %v1987
        %v1989 = vlaneseq
        %v1990 = vshrl.u32 %v1989, 7
        %v1991 = vsub.s32 %v1988, %v1990
        %v1992 = vrot.slane %v1981, %v1991
        %v1994 = vunpack.c.l.s4 1966171168
        %v1995 = vunpack.c.0.s8 %v1994
        %v1996 = vlaneseq
        %v1997 = vshrl.u32 %v1996, 7
        %v1998 = vsub.s32 %v1995, %v1997
        %v1999 = vrot.slane %v1985, %v1998
        %v2000 = vcombine.high %v1992, %v1992
        %v2001 = vcombine.high %v1999, %v1999
        %v2003 = vunpack.c.l.s4 1966171168
        %v2004 = vunpack.c.0.s8 %v2003
        %v2005 = vlaneseq
        %v2006 = vshrl.u32 %v2005, 7
        %v2007 = vsub.s32 %v2004, %v2006
        %v2008 = vrot.slane %v1992, %v2007
        %v2010 = vunpack.c.l.s4 1966171168
        %v2011 = vunpack.c.0.s8 %v2010
        %v2012 = vlaneseq
        %v2013 = vshrl.u32 %v2012, 7
        %v2014 = vsub.s32 %v2011, %v2013
        %v2015 = vrot.slane %v1999, %v2014
        %v2017 = vunpack.c.l.s4 1966171168
        %v2018 = vunpack.c.0.s8 %v2017
        %v2019 = vlaneseq
        %v2020 = vshrl.u32 %v2019, 7
        %v2021 = vsub.s32 %v2018, %v2020
        %v2022 = vrot.slane %v2000, %v2021
        %v2024 = vunpack.c.l.s4 1966171168
        %v2025 = vunpack.c.0.s8 %v2024
        %v2026 = vlaneseq
        %v2027 = vshrl.u32 %v2026, 7
        %v2028 = vsub.s32 %v2025, %v2027
        %v2029 = vrot.slane %v2001, %v2028
        %v2030 = vcombine.high %v2008, %v2008
        %v2031 = vcombine.high %v2015, %v2015
        %v2032 = vcombine.high %v2022, %v2022
        %v2033 = vcombine.high %v2029, %v2029
        %v2034 = vcombine.high %v1982, %v1982
        %v2036 = vunpack.c.l.s4 1966171168
        %v2037 = vunpack.c.0.s8 %v2036
        %v2038 = vlaneseq
        %v2039 = vshrl.u32 %v2038, 7
        %v2040 = vsub.s32 %v2037, %v2039
        %v2041 = vrot.slane %v1982, %v2040
        %v2043 = vunpack.c.l.s4 1966171168
        %v2044 = vunpack.c.0.s8 %v2043
        %v2045 = vlaneseq
        %v2046 = vshrl.u32 %v2045, 7
        %v2047 = vsub.s32 %v2044, %v2046
        %v2048 = vrot.slane %v2034, %v2047
        %v2049 = vcombine.high %v2041, %v2041
        %v2050 = vcombine.high %v2048, %v2048
        %v2052 = vunpack.c.l.s4 1966171168
        %v2053 = vunpack.c.0.s8 %v2052
        %v2054 = vlaneseq
        %v2055 = vshrl.u32 %v2054, 7
        %v2056 = vsub.s32 %v2053, %v2055
        %v2057 = vrot.slane %v2041, %v2056
        %v2059 = vunpack.c.l.s4 1966171168
        %v2060 = vunpack.c.0.s8 %v2059
        %v2061 = vlaneseq
        %v2062 = vshrl.u32 %v2061, 7
        %v2063 = vsub.s32 %v2060, %v2062
        %v2064 = vrot.slane %v2048, %v2063
        %v2066 = vunpack.c.l.s4 1966171168
        %v2067 = vunpack.c.0.s8 %v2066
        %v2068 = vlaneseq
        %v2069 = vshrl.u32 %v2068, 7
        %v2070 = vsub.s32 %v2067, %v2069
        %v2071 = vrot.slane %v2049, %v2070
        %v2073 = vunpack.c.l.s4 1966171168
        %v2074 = vunpack.c.0.s8 %v2073
        %v2075 = vlaneseq
        %v2076 = vshrl.u32 %v2075, 7
        %v2077 = vsub.s32 %v2074, %v2076
        %v2078 = vrot.slane %v2050, %v2077
        %v2079 = vcombine.high %v2057, %v2057
        %v2080 = vcombine.high %v2064, %v2064
        %v2081 = vcombine.high %v2071, %v2071
        %v2082 = vcombine.high %v2078, %v2078
        %v2083 = vlaneseq
        %v2084 = vshrl.u32 %v2083, 7
        %v2085 = vsub.s32 0, %v2084
        %v2086 = vrot.slane %v2008, %v2085
        %v2087 = vlaneseq
        %v2088 = vshrl.u32 %v2087, 7
        %v2089 = vsub.s32 0, %v2088
        %v2090 = vrot.slane %v2022, %v2089
        %v2091 = vlaneseq
        %v2092 = vshrl.u32 %v2091, 7
        %v2093 = vsub.s32 0, %v2092
        %v2094 = vrot.slane %v2030, %v2093
        %v2095 = vlaneseq
        %v2096 = vshrl.u32 %v2095, 7
        %v2097 = vsub.s32 0, %v2096
        %v2098 = vrot.slane %v2032, %v2097
        %v2099 = vlaneseq
        %v2100 = vshrl.u32 %v2099, 7
        %v2101 = vsub.s32 0, %v2100
        %v2102 = vrot.slane %v2015, %v2101
        %v2103 = vlaneseq
        %v2104 = vshrl.u32 %v2103, 7
        %v2105 = vsub.s32 0, %v2104
        %v2106 = vrot.slane %v2029, %v2105
        %v2107 = vlaneseq
        %v2108 = vshrl.u32 %v2107, 7
        %v2109 = vsub.s32 0, %v2108
        %v2110 = vrot.slane %v2031, %v2109
        %v2111 = vlaneseq
        %v2112 = vshrl.u32 %v2111, 7
        %v2113 = vsub.s32 0, %v2112
        %v2114 = vrot.slane %v2033, %v2113
        %v2115 = vlaneseq
        %v2116 = vshrl.u32 %v2115, 7
        %v2117 = vsub.s32 0, %v2116
        %v2118 = vrot.slane %v2057, %v2117
        %v2119 = vlaneseq
        %v2120 = vshrl.u32 %v2119, 7
        %v2121 = vsub.s32 0, %v2120
        %v2122 = vrot.slane %v2071, %v2121
        %v2123 = vlaneseq
        %v2124 = vshrl.u32 %v2123, 7
        %v2125 = vsub.s32 0, %v2124
        %v2126 = vrot.slane %v2079, %v2125
        %v2127 = vlaneseq
        %v2128 = vshrl.u32 %v2127, 7
        %v2129 = vsub.s32 0, %v2128
        %v2130 = vrot.slane %v2081, %v2129
        %v2131 = vlaneseq
        %v2132 = vshrl.u32 %v2131, 7
        %v2133 = vsub.s32 0, %v2132
        %v2134 = vrot.slane %v2064, %v2133
        %v2135 = vlaneseq
        %v2136 = vshrl.u32 %v2135, 7
        %v2137 = vsub.s32 0, %v2136
        %v2138 = vrot.slane %v2078, %v2137
        %v2139 = vlaneseq
        %v2140 = vshrl.u32 %v2139, 7
        %v2141 = vsub.s32 0, %v2140
        %v2142 = vrot.slane %v2080, %v2141
        %v2143 = vlaneseq
        %v2144 = vshrl.u32 %v2143, 7
        %v2145 = vsub.s32 0, %v2144
        %v2146 = vrot.slane %v2082, %v2145
        %2147 = vrot.lane.b32.xlu0 %v2086, 56
        %v2148 = vpop.permute.xlu0 %2147
        %2149 = vrot.lane.b32.xlu0 %v2090, 56
        %v2150 = vpop.permute.xlu0 %2149
        %2151 = vrot.lane.b32.xlu0 %v2094, 56
        %v2152 = vpop.permute.xlu0 %2151
        %2153 = vrot.lane.b32.xlu0 %v2098, 56
        %v2154 = vpop.permute.xlu0 %2153
        %2155 = vrot.lane.b32.xlu0 %v2102, 56
        %v2156 = vpop.permute.xlu0 %2155
        %2157 = vrot.lane.b32.xlu0 %v2106, 56
        %v2158 = vpop.permute.xlu0 %2157
        %2159 = vrot.lane.b32.xlu0 %v2110, 56
        %v2160 = vpop.permute.xlu0 %2159
        %2161 = vrot.lane.b32.xlu0 %v2114, 56
        %v2162 = vpop.permute.xlu0 %2161
        %2163 = vrot.lane.b32.xlu0 %v2118, 56
        %v2164 = vpop.permute.xlu0 %2163
        %2165 = vrot.lane.b32.xlu0 %v2122, 56
        %v2166 = vpop.permute.xlu0 %2165
        %2167 = vrot.lane.b32.xlu0 %v2126, 56
        %v2168 = vpop.permute.xlu0 %2167
        %2169 = vrot.lane.b32.xlu0 %v2130, 56
        %v2170 = vpop.permute.xlu0 %2169
        %2171 = vrot.lane.b32.xlu0 %v2134, 56
        %v2172 = vpop.permute.xlu0 %2171
        %2173 = vrot.lane.b32.xlu0 %v2138, 56
        %v2174 = vpop.permute.xlu0 %2173
        %2175 = vrot.lane.b32.xlu0 %v2142, 56
        %v2176 = vpop.permute.xlu0 %2175
        %2177 = vrot.lane.b32.xlu0 %v2146, 56
        %v2178 = vpop.permute.xlu0 %2177
        %2195 = vst.msk [vmem:[#allocation2 + $0x3] sm:$0x1] %vm1504, %v2148
        %2196 = vst.msk [vmem:[#allocation2 + $0xb] sm:$0x1] %vm1504, %v2150
        %2197 = vst.msk [vmem:[#allocation2 + $0x13] sm:$0x1] %vm1504, %v2152
        %2198 = vst.msk [vmem:[#allocation2 + $0x1b] sm:$0x1] %vm1504, %v2154
        %2199 = vst.msk [vmem:[#allocation2 + $0x23] sm:$0x1] %vm1504, %v2156
        %2200 = vst.msk [vmem:[#allocation2 + $0x2b] sm:$0x1] %vm1504, %v2158
        %2201 = vst.msk [vmem:[#allocation2 + $0x33] sm:$0x1] %vm1504, %v2160
        %2202 = vst.msk [vmem:[#allocation2 + $0x3b] sm:$0x1] %vm1504, %v2162
        %2203 = vst.msk [vmem:[#allocation2 + $0x43] sm:$0x1] %vm1504, %v2164
        %2204 = vst.msk [vmem:[#allocation2 + $0x4b] sm:$0x1] %vm1504, %v2166
        %2205 = vst.msk [vmem:[#allocation2 + $0x53] sm:$0x1] %vm1504, %v2168
        %2206 = vst.msk [vmem:[#allocation2 + $0x5b] sm:$0x1] %vm1504, %v2170
        %2207 = vst.msk [vmem:[#allocation2 + $0x63] sm:$0x1] %vm1504, %v2172
        %2208 = vst.msk [vmem:[#allocation2 + $0x6b] sm:$0x1] %vm1504, %v2174
        %2209 = vst.msk [vmem:[#allocation2 + $0x73] sm:$0x1] %vm1504, %v2176
        %2210 = vst.msk [vmem:[#allocation2 + $0x7b] sm:$0x1] %vm1504, %v2178
        %v2211 = vld [vmem:[#allocation3] sm:$0xff]
        %v2212 = vld [vmem:[#allocation3 + $0x10] sm:$0xff]
        %v2215 = vcombine.high %v2211, %v2211
        %v2217 = vunpack.c.l.s4 1966171168
        %v2218 = vunpack.c.0.s8 %v2217
        %v2219 = vlaneseq
        %v2220 = vshrl.u32 %v2219, 7
        %v2221 = vsub.s32 %v2218, %v2220
        %v2222 = vrot.slane %v2211, %v2221
        %v2224 = vunpack.c.l.s4 1966171168
        %v2225 = vunpack.c.0.s8 %v2224
        %v2226 = vlaneseq
        %v2227 = vshrl.u32 %v2226, 7
        %v2228 = vsub.s32 %v2225, %v2227
        %v2229 = vrot.slane %v2215, %v2228
        %v2230 = vcombine.high %v2222, %v2222
        %v2231 = vcombine.high %v2229, %v2229
        %v2233 = vunpack.c.l.s4 1966171168
        %v2234 = vunpack.c.0.s8 %v2233
        %v2235 = vlaneseq
        %v2236 = vshrl.u32 %v2235, 7
        %v2237 = vsub.s32 %v2234, %v2236
        %v2238 = vrot.slane %v2222, %v2237
        %v2240 = vunpack.c.l.s4 1966171168
        %v2241 = vunpack.c.0.s8 %v2240
        %v2242 = vlaneseq
        %v2243 = vshrl.u32 %v2242, 7
        %v2244 = vsub.s32 %v2241, %v2243
        %v2245 = vrot.slane %v2229, %v2244
        %v2247 = vunpack.c.l.s4 1966171168
        %v2248 = vunpack.c.0.s8 %v2247
        %v2249 = vlaneseq
        %v2250 = vshrl.u32 %v2249, 7
        %v2251 = vsub.s32 %v2248, %v2250
        %v2252 = vrot.slane %v2230, %v2251
        %v2254 = vunpack.c.l.s4 1966171168
        %v2255 = vunpack.c.0.s8 %v2254
        %v2256 = vlaneseq
        %v2257 = vshrl.u32 %v2256, 7
        %v2258 = vsub.s32 %v2255, %v2257
        %v2259 = vrot.slane %v2231, %v2258
        %v2260 = vcombine.high %v2238, %v2238
        %v2261 = vcombine.high %v2245, %v2245
        %v2262 = vcombine.high %v2252, %v2252
        %v2263 = vcombine.high %v2259, %v2259
        %v2264 = vcombine.high %v2212, %v2212
        %v2266 = vunpack.c.l.s4 1966171168
        %v2267 = vunpack.c.0.s8 %v2266
        %v2268 = vlaneseq
        %v2269 = vshrl.u32 %v2268, 7
        %v2270 = vsub.s32 %v2267, %v2269
        %v2271 = vrot.slane %v2212, %v2270
        %v2273 = vunpack.c.l.s4 1966171168
        %v2274 = vunpack.c.0.s8 %v2273
        %v2275 = vlaneseq
        %v2276 = vshrl.u32 %v2275, 7
        %v2277 = vsub.s32 %v2274, %v2276
        %v2278 = vrot.slane %v2264, %v2277
        %v2279 = vcombine.high %v2271, %v2271
        %v2280 = vcombine.high %v2278, %v2278
        %v2282 = vunpack.c.l.s4 1966171168
        %v2283 = vunpack.c.0.s8 %v2282
        %v2284 = vlaneseq
        %v2285 = vshrl.u32 %v2284, 7
        %v2286 = vsub.s32 %v2283, %v2285
        %v2287 = vrot.slane %v2271, %v2286
        %v2289 = vunpack.c.l.s4 1966171168
        %v2290 = vunpack.c.0.s8 %v2289
        %v2291 = vlaneseq
        %v2292 = vshrl.u32 %v2291, 7
        %v2293 = vsub.s32 %v2290, %v2292
        %v2294 = vrot.slane %v2278, %v2293
        %v2296 = vunpack.c.l.s4 1966171168
        %v2297 = vunpack.c.0.s8 %v2296
        %v2298 = vlaneseq
        %v2299 = vshrl.u32 %v2298, 7
        %v2300 = vsub.s32 %v2297, %v2299
        %v2301 = vrot.slane %v2279, %v2300
        %v2303 = vunpack.c.l.s4 1966171168
        %v2304 = vunpack.c.0.s8 %v2303
        %v2305 = vlaneseq
        %v2306 = vshrl.u32 %v2305, 7
        %v2307 = vsub.s32 %v2304, %v2306
        %v2308 = vrot.slane %v2280, %v2307
        %v2309 = vcombine.high %v2287, %v2287
        %v2310 = vcombine.high %v2294, %v2294
        %v2311 = vcombine.high %v2301, %v2301
        %v2312 = vcombine.high %v2308, %v2308
        %v2313 = vlaneseq
        %v2314 = vshrl.u32 %v2313, 7
        %v2315 = vsub.s32 0, %v2314
        %v2316 = vrot.slane %v2238, %v2315
        %v2317 = vlaneseq
        %v2318 = vshrl.u32 %v2317, 7
        %v2319 = vsub.s32 0, %v2318
        %v2320 = vrot.slane %v2252, %v2319
        %v2321 = vlaneseq
        %v2322 = vshrl.u32 %v2321, 7
        %v2323 = vsub.s32 0, %v2322
        %v2324 = vrot.slane %v2260, %v2323
        %v2325 = vlaneseq
        %v2326 = vshrl.u32 %v2325, 7
        %v2327 = vsub.s32 0, %v2326
        %v2328 = vrot.slane %v2262, %v2327
        %v2329 = vlaneseq
        %v2330 = vshrl.u32 %v2329, 7
        %v2331 = vsub.s32 0, %v2330
        %v2332 = vrot.slane %v2245, %v2331
        %v2333 = vlaneseq
        %v2334 = vshrl.u32 %v2333, 7
        %v2335 = vsub.s32 0, %v2334
        %v2336 = vrot.slane %v2259, %v2335
        %v2337 = vlaneseq
        %v2338 = vshrl.u32 %v2337, 7
        %v2339 = vsub.s32 0, %v2338
        %v2340 = vrot.slane %v2261, %v2339
        %v2341 = vlaneseq
        %v2342 = vshrl.u32 %v2341, 7
        %v2343 = vsub.s32 0, %v2342
        %v2344 = vrot.slane %v2263, %v2343
        %v2345 = vlaneseq
        %v2346 = vshrl.u32 %v2345, 7
        %v2347 = vsub.s32 0, %v2346
        %v2348 = vrot.slane %v2287, %v2347
        %v2349 = vlaneseq
        %v2350 = vshrl.u32 %v2349, 7
        %v2351 = vsub.s32 0, %v2350
        %v2352 = vrot.slane %v2301, %v2351
        %v2353 = vlaneseq
        %v2354 = vshrl.u32 %v2353, 7
        %v2355 = vsub.s32 0, %v2354
        %v2356 = vrot.slane %v2309, %v2355
        %v2357 = vlaneseq
        %v2358 = vshrl.u32 %v2357, 7
        %v2359 = vsub.s32 0, %v2358
        %v2360 = vrot.slane %v2311, %v2359
        %v2361 = vlaneseq
        %v2362 = vshrl.u32 %v2361, 7
        %v2363 = vsub.s32 0, %v2362
        %v2364 = vrot.slane %v2294, %v2363
        %v2365 = vlaneseq
        %v2366 = vshrl.u32 %v2365, 7
        %v2367 = vsub.s32 0, %v2366
        %v2368 = vrot.slane %v2308, %v2367
        %v2369 = vlaneseq
        %v2370 = vshrl.u32 %v2369, 7
        %v2371 = vsub.s32 0, %v2370
        %v2372 = vrot.slane %v2310, %v2371
        %v2373 = vlaneseq
        %v2374 = vshrl.u32 %v2373, 7
        %v2375 = vsub.s32 0, %v2374
        %v2376 = vrot.slane %v2312, %v2375
        %2377 = vrot.lane.b32.xlu0 %v2316, 32
        %v2378 = vpop.permute.xlu0 %2377
        %2379 = vrot.lane.b32.xlu0 %v2320, 32
        %v2380 = vpop.permute.xlu0 %2379
        %2381 = vrot.lane.b32.xlu0 %v2324, 32
        %v2382 = vpop.permute.xlu0 %2381
        %2383 = vrot.lane.b32.xlu0 %v2328, 32
        %v2384 = vpop.permute.xlu0 %2383
        %2385 = vrot.lane.b32.xlu0 %v2332, 32
        %v2386 = vpop.permute.xlu0 %2385
        %2387 = vrot.lane.b32.xlu0 %v2336, 32
        %v2388 = vpop.permute.xlu0 %2387
        %2389 = vrot.lane.b32.xlu0 %v2340, 32
        %v2390 = vpop.permute.xlu0 %2389
        %2391 = vrot.lane.b32.xlu0 %v2344, 32
        %v2392 = vpop.permute.xlu0 %2391
        %2393 = vrot.lane.b32.xlu0 %v2348, 32
        %v2394 = vpop.permute.xlu0 %2393
        %2395 = vrot.lane.b32.xlu0 %v2352, 32
        %v2396 = vpop.permute.xlu0 %2395
        %2397 = vrot.lane.b32.xlu0 %v2356, 32
        %v2398 = vpop.permute.xlu0 %2397
        %2399 = vrot.lane.b32.xlu0 %v2360, 32
        %v2400 = vpop.permute.xlu0 %2399
        %2401 = vrot.lane.b32.xlu0 %v2364, 32
        %v2402 = vpop.permute.xlu0 %2401
        %2403 = vrot.lane.b32.xlu0 %v2368, 32
        %v2404 = vpop.permute.xlu0 %2403
        %2405 = vrot.lane.b32.xlu0 %v2372, 32
        %v2406 = vpop.permute.xlu0 %2405
        %2407 = vrot.lane.b32.xlu0 %v2376, 32
        %v2408 = vpop.permute.xlu0 %2407
        %2425 = vst.msk [vmem:[#allocation2 + $0x4] sm:$0x1] %vm1504, %v2378
        %2426 = vst.msk [vmem:[#allocation2 + $0xc] sm:$0x1] %vm1504, %v2380
        %2427 = vst.msk [vmem:[#allocation2 + $0x14] sm:$0x1] %vm1504, %v2382
        %2428 = vst.msk [vmem:[#allocation2 + $0x1c] sm:$0x1] %vm1504, %v2384
        %2429 = vst.msk [vmem:[#allocation2 + $0x24] sm:$0x1] %vm1504, %v2386
        %2430 = vst.msk [vmem:[#allocation2 + $0x2c] sm:$0x1] %vm1504, %v2388
        %2431 = vst.msk [vmem:[#allocation2 + $0x34] sm:$0x1] %vm1504, %v2390
        %2432 = vst.msk [vmem:[#allocation2 + $0x3c] sm:$0x1] %vm1504, %v2392
        %2433 = vst.msk [vmem:[#allocation2 + $0x44] sm:$0x1] %vm1504, %v2394
        %2434 = vst.msk [vmem:[#allocation2 + $0x4c] sm:$0x1] %vm1504, %v2396
        %2435 = vst.msk [vmem:[#allocation2 + $0x54] sm:$0x1] %vm1504, %v2398
        %2436 = vst.msk [vmem:[#allocation2 + $0x5c] sm:$0x1] %vm1504, %v2400
        %2437 = vst.msk [vmem:[#allocation2 + $0x64] sm:$0x1] %vm1504, %v2402
        %2438 = vst.msk [vmem:[#allocation2 + $0x6c] sm:$0x1] %vm1504, %v2404
        %2439 = vst.msk [vmem:[#allocation2 + $0x74] sm:$0x1] %vm1504, %v2406
        %2440 = vst.msk [vmem:[#allocation2 + $0x7c] sm:$0x1] %vm1504, %v2408
        %v2441 = vld [vmem:[#allocation3] sm:$0xff]
        %v2442 = vld [vmem:[#allocation3 + $0x8] sm:$0xff]
        %v2443 = vld [vmem:[#allocation3 + $0x10] sm:$0xff]
        %v2444 = vld [vmem:[#allocation3 + $0x18] sm:$0xff]
        %v2449 = vcombine.low %v2441, %v2442
        %v2450 = vcombine.high %v2441, %v2442
        %v2452 = vunpack.c.l.s4 1966171168
        %v2453 = vunpack.c.0.s8 %v2452
        %v2454 = vlaneseq
        %v2455 = vshrl.u32 %v2454, 7
        %v2456 = vsub.s32 %v2453, %v2455
        %v2457 = vrot.slane %v2449, %v2456
        %v2459 = vunpack.c.l.s4 1966171168
        %v2460 = vunpack.c.0.s8 %v2459
        %v2461 = vlaneseq
        %v2462 = vshrl.u32 %v2461, 7
        %v2463 = vsub.s32 %v2460, %v2462
        %v2464 = vrot.slane %v2450, %v2463
        %v2465 = vcombine.high %v2457, %v2457
        %v2466 = vcombine.high %v2464, %v2464
        %v2468 = vunpack.c.l.s4 1966171168
        %v2469 = vunpack.c.0.s8 %v2468
        %v2470 = vlaneseq
        %v2471 = vshrl.u32 %v2470, 7
        %v2472 = vsub.s32 %v2469, %v2471
        %v2473 = vrot.slane %v2457, %v2472
        %v2475 = vunpack.c.l.s4 1966171168
        %v2476 = vunpack.c.0.s8 %v2475
        %v2477 = vlaneseq
        %v2478 = vshrl.u32 %v2477, 7
        %v2479 = vsub.s32 %v2476, %v2478
        %v2480 = vrot.slane %v2464, %v2479
        %v2482 = vunpack.c.l.s4 1966171168
        %v2483 = vunpack.c.0.s8 %v2482
        %v2484 = vlaneseq
        %v2485 = vshrl.u32 %v2484, 7
        %v2486 = vsub.s32 %v2483, %v2485
        %v2487 = vrot.slane %v2465, %v2486
        %v2489 = vunpack.c.l.s4 1966171168
        %v2490 = vunpack.c.0.s8 %v2489
        %v2491 = vlaneseq
        %v2492 = vshrl.u32 %v2491, 7
        %v2493 = vsub.s32 %v2490, %v2492
        %v2494 = vrot.slane %v2466, %v2493
        %v2495 = vcombine.high %v2473, %v2473
        %v2496 = vcombine.high %v2480, %v2480
        %v2497 = vcombine.high %v2487, %v2487
        %v2498 = vcombine.high %v2494, %v2494
        %v2499 = vcombine.low %v2443, %v2444
        %v2500 = vcombine.high %v2443, %v2444
        %v2502 = vunpack.c.l.s4 1966171168
        %v2503 = vunpack.c.0.s8 %v2502
        %v2504 = vlaneseq
        %v2505 = vshrl.u32 %v2504, 7
        %v2506 = vsub.s32 %v2503, %v2505
        %v2507 = vrot.slane %v2499, %v2506
        %v2509 = vunpack.c.l.s4 1966171168
        %v2510 = vunpack.c.0.s8 %v2509
        %v2511 = vlaneseq
        %v2512 = vshrl.u32 %v2511, 7
        %v2513 = vsub.s32 %v2510, %v2512
        %v2514 = vrot.slane %v2500, %v2513
        %v2515 = vcombine.high %v2507, %v2507
        %v2516 = vcombine.high %v2514, %v2514
        %v2518 = vunpack.c.l.s4 1966171168
        %v2519 = vunpack.c.0.s8 %v2518
        %v2520 = vlaneseq
        %v2521 = vshrl.u32 %v2520, 7
        %v2522 = vsub.s32 %v2519, %v2521
        %v2523 = vrot.slane %v2507, %v2522
        %v2525 = vunpack.c.l.s4 1966171168
        %v2526 = vunpack.c.0.s8 %v2525
        %v2527 = vlaneseq
        %v2528 = vshrl.u32 %v2527, 7
        %v2529 = vsub.s32 %v2526, %v2528
        %v2530 = vrot.slane %v2514, %v2529
        %v2532 = vunpack.c.l.s4 1966171168
        %v2533 = vunpack.c.0.s8 %v2532
        %v2534 = vlaneseq
        %v2535 = vshrl.u32 %v2534, 7
        %v2536 = vsub.s32 %v2533, %v2535
        %v2537 = vrot.slane %v2515, %v2536
        %v2539 = vunpack.c.l.s4 1966171168
        %v2540 = vunpack.c.0.s8 %v2539
        %v2541 = vlaneseq
        %v2542 = vshrl.u32 %v2541, 7
        %v2543 = vsub.s32 %v2540, %v2542
        %v2544 = vrot.slane %v2516, %v2543
        %v2545 = vcombine.high %v2523, %v2523
        %v2546 = vcombine.high %v2530, %v2530
        %v2547 = vcombine.high %v2537, %v2537
        %v2548 = vcombine.high %v2544, %v2544
        %v2549 = vlaneseq
        %v2550 = vshrl.u32 %v2549, 7
        %v2551 = vsub.s32 0, %v2550
        %v2552 = vrot.slane %v2473, %v2551
        %v2553 = vlaneseq
        %v2554 = vshrl.u32 %v2553, 7
        %v2555 = vsub.s32 1, %v2554
        %v2556 = vrot.slane %v2473, %v2555
        %v2557 = vlaneseq
        %v2558 = vshrl.u32 %v2557, 7
        %v2559 = vsub.s32 0, %v2558
        %v2560 = vrot.slane %v2487, %v2559
        %v2561 = vlaneseq
        %v2562 = vshrl.u32 %v2561, 7
        %v2563 = vsub.s32 1, %v2562
        %v2564 = vrot.slane %v2487, %v2563
        %v2565 = vlaneseq
        %v2566 = vshrl.u32 %v2565, 7
        %v2567 = vsub.s32 0, %v2566
        %v2568 = vrot.slane %v2495, %v2567
        %v2569 = vlaneseq
        %v2570 = vshrl.u32 %v2569, 7
        %v2571 = vsub.s32 1, %v2570
        %v2572 = vrot.slane %v2495, %v2571
        %v2573 = vlaneseq
        %v2574 = vshrl.u32 %v2573, 7
        %v2575 = vsub.s32 0, %v2574
        %v2576 = vrot.slane %v2497, %v2575
        %v2577 = vlaneseq
        %v2578 = vshrl.u32 %v2577, 7
        %v2579 = vsub.s32 1, %v2578
        %v2580 = vrot.slane %v2497, %v2579
        %v2581 = vlaneseq
        %v2582 = vshrl.u32 %v2581, 7
        %v2583 = vsub.s32 0, %v2582
        %v2584 = vrot.slane %v2480, %v2583
        %v2585 = vlaneseq
        %v2586 = vshrl.u32 %v2585, 7
        %v2587 = vsub.s32 1, %v2586
        %v2588 = vrot.slane %v2480, %v2587
        %v2589 = vlaneseq
        %v2590 = vshrl.u32 %v2589, 7
        %v2591 = vsub.s32 0, %v2590
        %v2592 = vrot.slane %v2494, %v2591
        %v2593 = vlaneseq
        %v2594 = vshrl.u32 %v2593, 7
        %v2595 = vsub.s32 1, %v2594
        %v2596 = vrot.slane %v2494, %v2595
        %v2597 = vlaneseq
        %v2598 = vshrl.u32 %v2597, 7
        %v2599 = vsub.s32 0, %v2598
        %v2600 = vrot.slane %v2496, %v2599
        %v2601 = vlaneseq
        %v2602 = vshrl.u32 %v2601, 7
        %v2603 = vsub.s32 1, %v2602
        %v2604 = vrot.slane %v2496, %v2603
        %v2605 = vlaneseq
        %v2606 = vshrl.u32 %v2605, 7
        %v2607 = vsub.s32 0, %v2606
        %v2608 = vrot.slane %v2498, %v2607
        %v2609 = vlaneseq
        %v2610 = vshrl.u32 %v2609, 7
        %v2611 = vsub.s32 1, %v2610
        %v2612 = vrot.slane %v2498, %v2611
        %v2613 = vlaneseq
        %v2614 = vshrl.u32 %v2613, 7
        %v2615 = vsub.s32 0, %v2614
        %v2616 = vrot.slane %v2523, %v2615
        %v2617 = vlaneseq
        %v2618 = vshrl.u32 %v2617, 7
        %v2619 = vsub.s32 1, %v2618
        %v2620 = vrot.slane %v2523, %v2619
        %v2621 = vlaneseq
        %v2622 = vshrl.u32 %v2621, 7
        %v2623 = vsub.s32 0, %v2622
        %v2624 = vrot.slane %v2537, %v2623
        %v2625 = vlaneseq
        %v2626 = vshrl.u32 %v2625, 7
        %v2627 = vsub.s32 1, %v2626
        %v2628 = vrot.slane %v2537, %v2627
        %v2629 = vlaneseq
        %v2630 = vshrl.u32 %v2629, 7
        %v2631 = vsub.s32 0, %v2630
        %v2632 = vrot.slane %v2545, %v2631
        %v2633 = vlaneseq
        %v2634 = vshrl.u32 %v2633, 7
        %v2635 = vsub.s32 1, %v2634
        %v2636 = vrot.slane %v2545, %v2635
        %v2637 = vlaneseq
        %v2638 = vshrl.u32 %v2637, 7
        %v2639 = vsub.s32 0, %v2638
        %v2640 = vrot.slane %v2547, %v2639
        %v2641 = vlaneseq
        %v2642 = vshrl.u32 %v2641, 7
        %v2643 = vsub.s32 1, %v2642
        %v2644 = vrot.slane %v2547, %v2643
        %v2645 = vlaneseq
        %v2646 = vshrl.u32 %v2645, 7
        %v2647 = vsub.s32 0, %v2646
        %v2648 = vrot.slane %v2530, %v2647
        %v2649 = vlaneseq
        %v2650 = vshrl.u32 %v2649, 7
        %v2651 = vsub.s32 1, %v2650
        %v2652 = vrot.slane %v2530, %v2651
        %v2653 = vlaneseq
        %v2654 = vshrl.u32 %v2653, 7
        %v2655 = vsub.s32 0, %v2654
        %v2656 = vrot.slane %v2544, %v2655
        %v2657 = vlaneseq
        %v2658 = vshrl.u32 %v2657, 7
        %v2659 = vsub.s32 1, %v2658
        %v2660 = vrot.slane %v2544, %v2659
        %v2661 = vlaneseq
        %v2662 = vshrl.u32 %v2661, 7
        %v2663 = vsub.s32 0, %v2662
        %v2664 = vrot.slane %v2546, %v2663
        %v2665 = vlaneseq
        %v2666 = vshrl.u32 %v2665, 7
        %v2667 = vsub.s32 1, %v2666
        %v2668 = vrot.slane %v2546, %v2667
        %v2669 = vlaneseq
        %v2670 = vshrl.u32 %v2669, 7
        %v2671 = vsub.s32 0, %v2670
        %v2672 = vrot.slane %v2548, %v2671
        %v2673 = vlaneseq
        %v2674 = vshrl.u32 %v2673, 7
        %v2675 = vsub.s32 1, %v2674
        %v2676 = vrot.slane %v2548, %v2675
        %2677 = vrot.lane.b32.xlu0 %v2552, 8
        %v2678 = vpop.permute.xlu0 %2677
        %2679 = vrot.lane.b32.xlu0 %v2556, 8
        %v2680 = vpop.permute.xlu0 %2679
        %2681 = vrot.lane.b32.xlu0 %v2560, 8
        %v2682 = vpop.permute.xlu0 %2681
        %2683 = vrot.lane.b32.xlu0 %v2564, 8
        %v2684 = vpop.permute.xlu0 %2683
        %2685 = vrot.lane.b32.xlu0 %v2568, 8
        %v2686 = vpop.permute.xlu0 %2685
        %2687 = vrot.lane.b32.xlu0 %v2572, 8
        %v2688 = vpop.permute.xlu0 %2687
        %2689 = vrot.lane.b32.xlu0 %v2576, 8
        %v2690 = vpop.permute.xlu0 %2689
        %2691 = vrot.lane.b32.xlu0 %v2580, 8
        %v2692 = vpop.permute.xlu0 %2691
        %2693 = vrot.lane.b32.xlu0 %v2584, 8
        %v2694 = vpop.permute.xlu0 %2693
        %2695 = vrot.lane.b32.xlu0 %v2588, 8
        %v2696 = vpop.permute.xlu0 %2695
        %2697 = vrot.lane.b32.xlu0 %v2592, 8
        %v2698 = vpop.permute.xlu0 %2697
        %2699 = vrot.lane.b32.xlu0 %v2596, 8
        %v2700 = vpop.permute.xlu0 %2699
        %2701 = vrot.lane.b32.xlu0 %v2600, 8
        %v2702 = vpop.permute.xlu0 %2701
        %2703 = vrot.lane.b32.xlu0 %v2604, 8
        %v2704 = vpop.permute.xlu0 %2703
        %2705 = vrot.lane.b32.xlu0 %v2608, 8
        %v2706 = vpop.permute.xlu0 %2705
        %2707 = vrot.lane.b32.xlu0 %v2612, 8
        %v2708 = vpop.permute.xlu0 %2707
        %2709 = vrot.lane.b32.xlu0 %v2616, 8
        %v2710 = vpop.permute.xlu0 %2709
        %2711 = vrot.lane.b32.xlu0 %v2620, 8
        %v2712 = vpop.permute.xlu0 %2711
        %2713 = vrot.lane.b32.xlu0 %v2624, 8
        %v2714 = vpop.permute.xlu0 %2713
        %2715 = vrot.lane.b32.xlu0 %v2628, 8
        %v2716 = vpop.permute.xlu0 %2715
        %2717 = vrot.lane.b32.xlu0 %v2632, 8
        %v2718 = vpop.permute.xlu0 %2717
        %2719 = vrot.lane.b32.xlu0 %v2636, 8
        %v2720 = vpop.permute.xlu0 %2719
        %2721 = vrot.lane.b32.xlu0 %v2640, 8
        %v2722 = vpop.permute.xlu0 %2721
        %2723 = vrot.lane.b32.xlu0 %v2644, 8
        %v2724 = vpop.permute.xlu0 %2723
        %2725 = vrot.lane.b32.xlu0 %v2648, 8
        %v2726 = vpop.permute.xlu0 %2725
        %2727 = vrot.lane.b32.xlu0 %v2652, 8
        %v2728 = vpop.permute.xlu0 %2727
        %2729 = vrot.lane.b32.xlu0 %v2656, 8
        %v2730 = vpop.permute.xlu0 %2729
        %2731 = vrot.lane.b32.xlu0 %v2660, 8
        %v2732 = vpop.permute.xlu0 %2731
        %2733 = vrot.lane.b32.xlu0 %v2664, 8
        %v2734 = vpop.permute.xlu0 %2733
        %2735 = vrot.lane.b32.xlu0 %v2668, 8
        %v2736 = vpop.permute.xlu0 %2735
        %2737 = vrot.lane.b32.xlu0 %v2672, 8
        %v2738 = vpop.permute.xlu0 %2737
        %2739 = vrot.lane.b32.xlu0 %v2676, 8
        %v2740 = vpop.permute.xlu0 %2739
        %vm2741 = vcmask 64512
        %v2742 = vsel %vm2741, %v2678, %v2680
        %v2743 = vsel %vm2741, %v2682, %v2684
        %v2744 = vsel %vm2741, %v2686, %v2688
        %v2745 = vsel %vm2741, %v2690, %v2692
        %v2746 = vsel %vm2741, %v2694, %v2696
        %v2747 = vsel %vm2741, %v2698, %v2700
        %v2748 = vsel %vm2741, %v2702, %v2704
        %v2749 = vsel %vm2741, %v2706, %v2708
        %v2750 = vsel %vm2741, %v2710, %v2712
        %v2751 = vsel %vm2741, %v2714, %v2716
        %v2752 = vsel %vm2741, %v2718, %v2720
        %v2753 = vsel %vm2741, %v2722, %v2724
        %v2754 = vsel %vm2741, %v2726, %v2728
        %v2755 = vsel %vm2741, %v2730, %v2732
        %v2756 = vsel %vm2741, %v2734, %v2736
        %v2757 = vsel %vm2741, %v2738, %v2740
        %2774 = vst.msk [vmem:[#allocation2 + $0x5] sm:$0x1] %vm1504, %v2742
        %2775 = vst.msk [vmem:[#allocation2 + $0xd] sm:$0x1] %vm1504, %v2743
        %2776 = vst.msk [vmem:[#allocation2 + $0x15] sm:$0x1] %vm1504, %v2744
        %2777 = vst.msk [vmem:[#allocation2 + $0x1d] sm:$0x1] %vm1504, %v2745
        %2778 = vst.msk [vmem:[#allocation2 + $0x25] sm:$0x1] %vm1504, %v2746
        %2779 = vst.msk [vmem:[#allocation2 + $0x2d] sm:$0x1] %vm1504, %v2747
        %2780 = vst.msk [vmem:[#allocation2 + $0x35] sm:$0x1] %vm1504, %v2748
        %2781 = vst.msk [vmem:[#allocation2 + $0x3d] sm:$0x1] %vm1504, %v2749
        %2782 = vst.msk [vmem:[#allocation2 + $0x45] sm:$0x1] %vm1504, %v2750
        %2783 = vst.msk [vmem:[#allocation2 + $0x4d] sm:$0x1] %vm1504, %v2751
        %2784 = vst.msk [vmem:[#allocation2 + $0x55] sm:$0x1] %vm1504, %v2752
        %2785 = vst.msk [vmem:[#allocation2 + $0x5d] sm:$0x1] %vm1504, %v2753
        %2786 = vst.msk [vmem:[#allocation2 + $0x65] sm:$0x1] %vm1504, %v2754
        %2787 = vst.msk [vmem:[#allocation2 + $0x6d] sm:$0x1] %vm1504, %v2755
        %2788 = vst.msk [vmem:[#allocation2 + $0x75] sm:$0x1] %vm1504, %v2756
        %2789 = vst.msk [vmem:[#allocation2 + $0x7d] sm:$0x1] %vm1504, %v2757
        %v2790 = vld [vmem:[#allocation3 + $0x8] sm:$0xff]
        %v2791 = vld [vmem:[#allocation3 + $0x18] sm:$0xff]
        %v2794 = vcombine.high %v2790, %v2790
        %v2796 = vunpack.c.l.s4 1966171168
        %v2797 = vunpack.c.0.s8 %v2796
        %v2798 = vlaneseq
        %v2799 = vshrl.u32 %v2798, 7
        %v2800 = vsub.s32 %v2797, %v2799
        %v2801 = vrot.slane %v2790, %v2800
        %v2803 = vunpack.c.l.s4 1966171168
        %v2804 = vunpack.c.0.s8 %v2803
        %v2805 = vlaneseq
        %v2806 = vshrl.u32 %v2805, 7
        %v2807 = vsub.s32 %v2804, %v2806
        %v2808 = vrot.slane %v2794, %v2807
        %v2809 = vcombine.high %v2801, %v2801
        %v2810 = vcombine.high %v2808, %v2808
        %v2812 = vunpack.c.l.s4 1966171168
        %v2813 = vunpack.c.0.s8 %v2812
        %v2814 = vlaneseq
        %v2815 = vshrl.u32 %v2814, 7
        %v2816 = vsub.s32 %v2813, %v2815
        %v2817 = vrot.slane %v2801, %v2816
        %v2819 = vunpack.c.l.s4 1966171168
        %v2820 = vunpack.c.0.s8 %v2819
        %v2821 = vlaneseq
        %v2822 = vshrl.u32 %v2821, 7
        %v2823 = vsub.s32 %v2820, %v2822
        %v2824 = vrot.slane %v2808, %v2823
        %v2826 = vunpack.c.l.s4 1966171168
        %v2827 = vunpack.c.0.s8 %v2826
        %v2828 = vlaneseq
        %v2829 = vshrl.u32 %v2828, 7
        %v2830 = vsub.s32 %v2827, %v2829
        %v2831 = vrot.slane %v2809, %v2830
        %v2833 = vunpack.c.l.s4 1966171168
        %v2834 = vunpack.c.0.s8 %v2833
        %v2835 = vlaneseq
        %v2836 = vshrl.u32 %v2835, 7
        %v2837 = vsub.s32 %v2834, %v2836
        %v2838 = vrot.slane %v2810, %v2837
        %v2839 = vcombine.high %v2817, %v2817
        %v2840 = vcombine.high %v2824, %v2824
        %v2841 = vcombine.high %v2831, %v2831
        %v2842 = vcombine.high %v2838, %v2838
        %v2843 = vcombine.high %v2791, %v2791
        %v2845 = vunpack.c.l.s4 1966171168
        %v2846 = vunpack.c.0.s8 %v2845
        %v2847 = vlaneseq
        %v2848 = vshrl.u32 %v2847, 7
        %v2849 = vsub.s32 %v2846, %v2848
        %v2850 = vrot.slane %v2791, %v2849
        %v2852 = vunpack.c.l.s4 1966171168
        %v2853 = vunpack.c.0.s8 %v2852
        %v2854 = vlaneseq
        %v2855 = vshrl.u32 %v2854, 7
        %v2856 = vsub.s32 %v2853, %v2855
        %v2857 = vrot.slane %v2843, %v2856
        %v2858 = vcombine.high %v2850, %v2850
        %v2859 = vcombine.high %v2857, %v2857
        %v2861 = vunpack.c.l.s4 1966171168
        %v2862 = vunpack.c.0.s8 %v2861
        %v2863 = vlaneseq
        %v2864 = vshrl.u32 %v2863, 7
        %v2865 = vsub.s32 %v2862, %v2864
        %v2866 = vrot.slane %v2850, %v2865
        %v2868 = vunpack.c.l.s4 1966171168
        %v2869 = vunpack.c.0.s8 %v2868
        %v2870 = vlaneseq
        %v2871 = vshrl.u32 %v2870, 7
        %v2872 = vsub.s32 %v2869, %v2871
        %v2873 = vrot.slane %v2857, %v2872
        %v2875 = vunpack.c.l.s4 1966171168
        %v2876 = vunpack.c.0.s8 %v2875
        %v2877 = vlaneseq
        %v2878 = vshrl.u32 %v2877, 7
        %v2879 = vsub.s32 %v2876, %v2878
        %v2880 = vrot.slane %v2858, %v2879
        %v2882 = vunpack.c.l.s4 1966171168
        %v2883 = vunpack.c.0.s8 %v2882
        %v2884 = vlaneseq
        %v2885 = vshrl.u32 %v2884, 7
        %v2886 = vsub.s32 %v2883, %v2885
        %v2887 = vrot.slane %v2859, %v2886
        %v2888 = vcombine.high %v2866, %v2866
        %v2889 = vcombine.high %v2873, %v2873
        %v2890 = vcombine.high %v2880, %v2880
        %v2891 = vcombine.high %v2887, %v2887
        %v2892 = vlaneseq
        %v2893 = vshrl.u32 %v2892, 7
        %v2894 = vsub.s32 0, %v2893
        %v2895 = vrot.slane %v2817, %v2894
        %v2896 = vlaneseq
        %v2897 = vshrl.u32 %v2896, 7
        %v2898 = vsub.s32 0, %v2897
        %v2899 = vrot.slane %v2831, %v2898
        %v2900 = vlaneseq
        %v2901 = vshrl.u32 %v2900, 7
        %v2902 = vsub.s32 0, %v2901
        %v2903 = vrot.slane %v2839, %v2902
        %v2904 = vlaneseq
        %v2905 = vshrl.u32 %v2904, 7
        %v2906 = vsub.s32 0, %v2905
        %v2907 = vrot.slane %v2841, %v2906
        %v2908 = vlaneseq
        %v2909 = vshrl.u32 %v2908, 7
        %v2910 = vsub.s32 0, %v2909
        %v2911 = vrot.slane %v2824, %v2910
        %v2912 = vlaneseq
        %v2913 = vshrl.u32 %v2912, 7
        %v2914 = vsub.s32 0, %v2913
        %v2915 = vrot.slane %v2838, %v2914
        %v2916 = vlaneseq
        %v2917 = vshrl.u32 %v2916, 7
        %v2918 = vsub.s32 0, %v2917
        %v2919 = vrot.slane %v2840, %v2918
        %v2920 = vlaneseq
        %v2921 = vshrl.u32 %v2920, 7
        %v2922 = vsub.s32 0, %v2921
        %v2923 = vrot.slane %v2842, %v2922
        %v2924 = vlaneseq
        %v2925 = vshrl.u32 %v2924, 7
        %v2926 = vsub.s32 0, %v2925
        %v2927 = vrot.slane %v2866, %v2926
        %v2928 = vlaneseq
        %v2929 = vshrl.u32 %v2928, 7
        %v2930 = vsub.s32 0, %v2929
        %v2931 = vrot.slane %v2880, %v2930
        %v2932 = vlaneseq
        %v2933 = vshrl.u32 %v2932, 7
        %v2934 = vsub.s32 0, %v2933
        %v2935 = vrot.slane %v2888, %v2934
        %v2936 = vlaneseq
        %v2937 = vshrl.u32 %v2936, 7
        %v2938 = vsub.s32 0, %v2937
        %v2939 = vrot.slane %v2890, %v2938
        %v2940 = vlaneseq
        %v2941 = vshrl.u32 %v2940, 7
        %v2942 = vsub.s32 0, %v2941
        %v2943 = vrot.slane %v2873, %v2942
        %v2944 = vlaneseq
        %v2945 = vshrl.u32 %v2944, 7
        %v2946 = vsub.s32 0, %v2945
        %v2947 = vrot.slane %v2887, %v2946
        %v2948 = vlaneseq
        %v2949 = vshrl.u32 %v2948, 7
        %v2950 = vsub.s32 0, %v2949
        %v2951 = vrot.slane %v2889, %v2950
        %v2952 = vlaneseq
        %v2953 = vshrl.u32 %v2952, 7
        %v2954 = vsub.s32 0, %v2953
        %v2955 = vrot.slane %v2891, %v2954
        %2956 = vrot.lane.b32.xlu0 %v2895, 112
        %v2957 = vpop.permute.xlu0 %2956
        %2958 = vrot.lane.b32.xlu0 %v2899, 112
        %v2959 = vpop.permute.xlu0 %2958
        %2960 = vrot.lane.b32.xlu0 %v2903, 112
        %v2961 = vpop.permute.xlu0 %2960
        %2962 = vrot.lane.b32.xlu0 %v2907, 112
        %v2963 = vpop.permute.xlu0 %2962
        %2964 = vrot.lane.b32.xlu0 %v2911, 112
        %v2965 = vpop.permute.xlu0 %2964
        %2966 = vrot.lane.b32.xlu0 %v2915, 112
        %v2967 = vpop.permute.xlu0 %2966
        %2968 = vrot.lane.b32.xlu0 %v2919, 112
        %v2969 = vpop.permute.xlu0 %2968
        %2970 = vrot.lane.b32.xlu0 %v2923, 112
        %v2971 = vpop.permute.xlu0 %2970
        %2972 = vrot.lane.b32.xlu0 %v2927, 112
        %v2973 = vpop.permute.xlu0 %2972
        %2974 = vrot.lane.b32.xlu0 %v2931, 112
        %v2975 = vpop.permute.xlu0 %2974
        %2976 = vrot.lane.b32.xlu0 %v2935, 112
        %v2977 = vpop.permute.xlu0 %2976
        %2978 = vrot.lane.b32.xlu0 %v2939, 112
        %v2979 = vpop.permute.xlu0 %2978
        %2980 = vrot.lane.b32.xlu0 %v2943, 112
        %v2981 = vpop.permute.xlu0 %2980
        %2982 = vrot.lane.b32.xlu0 %v2947, 112
        %v2983 = vpop.permute.xlu0 %2982
        %2984 = vrot.lane.b32.xlu0 %v2951, 112
        %v2985 = vpop.permute.xlu0 %2984
        %2986 = vrot.lane.b32.xlu0 %v2955, 112
        %v2987 = vpop.permute.xlu0 %2986
        %3004 = vst.msk [vmem:[#allocation2 + $0x6] sm:$0x1] %vm1504, %v2957
        %3005 = vst.msk [vmem:[#allocation2 + $0xe] sm:$0x1] %vm1504, %v2959
        %3006 = vst.msk [vmem:[#allocation2 + $0x16] sm:$0x1] %vm1504, %v2961
        %3007 = vst.msk [vmem:[#allocation2 + $0x1e] sm:$0x1] %vm1504, %v2963
        %3008 = vst.msk [vmem:[#allocation2 + $0x26] sm:$0x1] %vm1504, %v2965
        %3009 = vst.msk [vmem:[#allocation2 + $0x2e] sm:$0x1] %vm1504, %v2967
        %3010 = vst.msk [vmem:[#allocation2 + $0x36] sm:$0x1] %vm1504, %v2969
        %3011 = vst.msk [vmem:[#allocation2 + $0x3e] sm:$0x1] %vm1504, %v2971
        %3012 = vst.msk [vmem:[#allocation2 + $0x46] sm:$0x1] %vm1504, %v2973
        %3013 = vst.msk [vmem:[#allocation2 + $0x4e] sm:$0x1] %vm1504, %v2975
        %3014 = vst.msk [vmem:[#allocation2 + $0x56] sm:$0x1] %vm1504, %v2977
        %3015 = vst.msk [vmem:[#allocation2 + $0x5e] sm:$0x1] %vm1504, %v2979
        %3016 = vst.msk [vmem:[#allocation2 + $0x66] sm:$0x1] %vm1504, %v2981
        %3017 = vst.msk [vmem:[#allocation2 + $0x6e] sm:$0x1] %vm1504, %v2983
        %3018 = vst.msk [vmem:[#allocation2 + $0x76] sm:$0x1] %vm1504, %v2985
        %3019 = vst.msk [vmem:[#allocation2 + $0x7e] sm:$0x1] %vm1504, %v2987
        %v3020 = vld [vmem:[#allocation3 + $0x8] sm:$0xff]
        %v3021 = vld [vmem:[#allocation3 + $0x18] sm:$0xff]
        %v3024 = vcombine.high %v3020, %v3020
        %v3026 = vunpack.c.l.s4 1966171168
        %v3027 = vunpack.c.0.s8 %v3026
        %v3028 = vlaneseq
        %v3029 = vshrl.u32 %v3028, 7
        %v3030 = vsub.s32 %v3027, %v3029
        %v3031 = vrot.slane %v3020, %v3030
        %v3033 = vunpack.c.l.s4 1966171168
        %v3034 = vunpack.c.0.s8 %v3033
        %v3035 = vlaneseq
        %v3036 = vshrl.u32 %v3035, 7
        %v3037 = vsub.s32 %v3034, %v3036
        %v3038 = vrot.slane %v3024, %v3037
        %v3039 = vcombine.high %v3031, %v3031
        %v3040 = vcombine.high %v3038, %v3038
        %v3042 = vunpack.c.l.s4 1966171168
        %v3043 = vunpack.c.0.s8 %v3042
        %v3044 = vlaneseq
        %v3045 = vshrl.u32 %v3044, 7
        %v3046 = vsub.s32 %v3043, %v3045
        %v3047 = vrot.slane %v3031, %v3046
        %v3049 = vunpack.c.l.s4 1966171168
        %v3050 = vunpack.c.0.s8 %v3049
        %v3051 = vlaneseq
        %v3052 = vshrl.u32 %v3051, 7
        %v3053 = vsub.s32 %v3050, %v3052
        %v3054 = vrot.slane %v3038, %v3053
        %v3056 = vunpack.c.l.s4 1966171168
        %v3057 = vunpack.c.0.s8 %v3056
        %v3058 = vlaneseq
        %v3059 = vshrl.u32 %v3058, 7
        %v3060 = vsub.s32 %v3057, %v3059
        %v3061 = vrot.slane %v3039, %v3060
        %v3063 = vunpack.c.l.s4 1966171168
        %v3064 = vunpack.c.0.s8 %v3063
        %v3065 = vlaneseq
        %v3066 = vshrl.u32 %v3065, 7
        %v3067 = vsub.s32 %v3064, %v3066
        %v3068 = vrot.slane %v3040, %v3067
        %v3069 = vcombine.high %v3047, %v3047
        %v3070 = vcombine.high %v3054, %v3054
        %v3071 = vcombine.high %v3061, %v3061
        %v3072 = vcombine.high %v3068, %v3068
        %v3073 = vcombine.high %v3021, %v3021
        %v3075 = vunpack.c.l.s4 1966171168
        %v3076 = vunpack.c.0.s8 %v3075
        %v3077 = vlaneseq
        %v3078 = vshrl.u32 %v3077, 7
        %v3079 = vsub.s32 %v3076, %v3078
        %v3080 = vrot.slane %v3021, %v3079
        %v3082 = vunpack.c.l.s4 1966171168
        %v3083 = vunpack.c.0.s8 %v3082
        %v3084 = vlaneseq
        %v3085 = vshrl.u32 %v3084, 7
        %v3086 = vsub.s32 %v3083, %v3085
        %v3087 = vrot.slane %v3073, %v3086
        %v3088 = vcombine.high %v3080, %v3080
        %v3089 = vcombine.high %v3087, %v3087
        %v3091 = vunpack.c.l.s4 1966171168
        %v3092 = vunpack.c.0.s8 %v3091
        %v3093 = vlaneseq
        %v3094 = vshrl.u32 %v3093, 7
        %v3095 = vsub.s32 %v3092, %v3094
        %v3096 = vrot.slane %v3080, %v3095
        %v3098 = vunpack.c.l.s4 1966171168
        %v3099 = vunpack.c.0.s8 %v3098
        %v3100 = vlaneseq
        %v3101 = vshrl.u32 %v3100, 7
        %v3102 = vsub.s32 %v3099, %v3101
        %v3103 = vrot.slane %v3087, %v3102
        %v3105 = vunpack.c.l.s4 1966171168
        %v3106 = vunpack.c.0.s8 %v3105
        %v3107 = vlaneseq
        %v3108 = vshrl.u32 %v3107, 7
        %v3109 = vsub.s32 %v3106, %v3108
        %v3110 = vrot.slane %v3088, %v3109
        %v3112 = vunpack.c.l.s4 1966171168
        %v3113 = vunpack.c.0.s8 %v3112
        %v3114 = vlaneseq
        %v3115 = vshrl.u32 %v3114, 7
        %v3116 = vsub.s32 %v3113, %v3115
        %v3117 = vrot.slane %v3089, %v3116
        %v3118 = vcombine.high %v3096, %v3096
        %v3119 = vcombine.high %v3103, %v3103
        %v3120 = vcombine.high %v3110, %v3110
        %v3121 = vcombine.high %v3117, %v3117
        %v3122 = vlaneseq
        %v3123 = vshrl.u32 %v3122, 7
        %v3124 = vsub.s32 0, %v3123
        %v3125 = vrot.slane %v3047, %v3124
        %v3126 = vlaneseq
        %v3127 = vshrl.u32 %v3126, 7
        %v3128 = vsub.s32 0, %v3127
        %v3129 = vrot.slane %v3061, %v3128
        %v3130 = vlaneseq
        %v3131 = vshrl.u32 %v3130, 7
        %v3132 = vsub.s32 0, %v3131
        %v3133 = vrot.slane %v3069, %v3132
        %v3134 = vlaneseq
        %v3135 = vshrl.u32 %v3134, 7
        %v3136 = vsub.s32 0, %v3135
        %v3137 = vrot.slane %v3071, %v3136
        %v3138 = vlaneseq
        %v3139 = vshrl.u32 %v3138, 7
        %v3140 = vsub.s32 0, %v3139
        %v3141 = vrot.slane %v3054, %v3140
        %v3142 = vlaneseq
        %v3143 = vshrl.u32 %v3142, 7
        %v3144 = vsub.s32 0, %v3143
        %v3145 = vrot.slane %v3068, %v3144
        %v3146 = vlaneseq
        %v3147 = vshrl.u32 %v3146, 7
        %v3148 = vsub.s32 0, %v3147
        %v3149 = vrot.slane %v3070, %v3148
        %v3150 = vlaneseq
        %v3151 = vshrl.u32 %v3150, 7
        %v3152 = vsub.s32 0, %v3151
        %v3153 = vrot.slane %v3072, %v3152
        %v3154 = vlaneseq
        %v3155 = vshrl.u32 %v3154, 7
        %v3156 = vsub.s32 0, %v3155
        %v3157 = vrot.slane %v3096, %v3156
        %v3158 = vlaneseq
        %v3159 = vshrl.u32 %v3158, 7
        %v3160 = vsub.s32 0, %v3159
        %v3161 = vrot.slane %v3110, %v3160
        %v3162 = vlaneseq
        %v3163 = vshrl.u32 %v3162, 7
        %v3164 = vsub.s32 0, %v3163
        %v3165 = vrot.slane %v3118, %v3164
        %v3166 = vlaneseq
        %v3167 = vshrl.u32 %v3166, 7
        %v3168 = vsub.s32 0, %v3167
        %v3169 = vrot.slane %v3120, %v3168
        %v3170 = vlaneseq
        %v3171 = vshrl.u32 %v3170, 7
        %v3172 = vsub.s32 0, %v3171
        %v3173 = vrot.slane %v3103, %v3172
        %v3174 = vlaneseq
        %v3175 = vshrl.u32 %v3174, 7
        %v3176 = vsub.s32 0, %v3175
        %v3177 = vrot.slane %v3117, %v3176
        %v3178 = vlaneseq
        %v3179 = vshrl.u32 %v3178, 7
        %v3180 = vsub.s32 0, %v3179
        %v3181 = vrot.slane %v3119, %v3180
        %v3182 = vlaneseq
        %v3183 = vshrl.u32 %v3182, 7
        %v3184 = vsub.s32 0, %v3183
        %v3185 = vrot.slane %v3121, %v3184
        %3186 = vrot.lane.b32.xlu0 %v3125, 88
        %v3187 = vpop.permute.xlu0 %3186
        %3188 = vrot.lane.b32.xlu0 %v3129, 88
        %v3189 = vpop.permute.xlu0 %3188
        %3190 = vrot.lane.b32.xlu0 %v3133, 88
        %v3191 = vpop.permute.xlu0 %3190
        %3192 = vrot.lane.b32.xlu0 %v3137, 88
        %v3193 = vpop.permute.xlu0 %3192
        %3194 = vrot.lane.b32.xlu0 %v3141, 88
        %v3195 = vpop.permute.xlu0 %3194
        %3196 = vrot.lane.b32.xlu0 %v3145, 88
        %v3197 = vpop.permute.xlu0 %3196
        %3198 = vrot.lane.b32.xlu0 %v3149, 88
        %v3199 = vpop.permute.xlu0 %3198
        %3200 = vrot.lane.b32.xlu0 %v3153, 88
        %v3201 = vpop.permute.xlu0 %3200
        %3202 = vrot.lane.b32.xlu0 %v3157, 88
        %v3203 = vpop.permute.xlu0 %3202
        %3204 = vrot.lane.b32.xlu0 %v3161, 88
        %v3205 = vpop.permute.xlu0 %3204
        %3206 = vrot.lane.b32.xlu0 %v3165, 88
        %v3207 = vpop.permute.xlu0 %3206
        %3208 = vrot.lane.b32.xlu0 %v3169, 88
        %v3209 = vpop.permute.xlu0 %3208
        %3210 = vrot.lane.b32.xlu0 %v3173, 88
        %v3211 = vpop.permute.xlu0 %3210
        %3212 = vrot.lane.b32.xlu0 %v3177, 88
        %v3213 = vpop.permute.xlu0 %3212
        %3214 = vrot.lane.b32.xlu0 %v3181, 88
        %v3215 = vpop.permute.xlu0 %3214
        %3216 = vrot.lane.b32.xlu0 %v3185, 88
        %v3217 = vpop.permute.xlu0 %3216
        %3234 = vst.msk [vmem:[#allocation2 + $0x7] sm:$0x1] %vm1504, %v3187
        %3235 = vst.msk [vmem:[#allocation2 + $0xf] sm:$0x1] %vm1504, %v3189
        %3236 = vst.msk [vmem:[#allocation2 + $0x17] sm:$0x1] %vm1504, %v3191
        %3237 = vst.msk [vmem:[#allocation2 + $0x1f] sm:$0x1] %vm1504, %v3193
        %3238 = vst.msk [vmem:[#allocation2 + $0x27] sm:$0x1] %vm1504, %v3195
        %3239 = vst.msk [vmem:[#allocation2 + $0x2f] sm:$0x1] %vm1504, %v3197
        %3240 = vst.msk [vmem:[#allocation2 + $0x37] sm:$0x1] %vm1504, %v3199
        %3241 = vst.msk [vmem:[#allocation2 + $0x3f] sm:$0x1] %vm1504, %v3201
        %3242 = vst.msk [vmem:[#allocation2 + $0x47] sm:$0x1] %vm1504, %v3203
        %3243 = vst.msk [vmem:[#allocation2 + $0x4f] sm:$0x1] %vm1504, %v3205
        %3244 = vst.msk [vmem:[#allocation2 + $0x57] sm:$0x1] %vm1504, %v3207
        %3245 = vst.msk [vmem:[#allocation2 + $0x5f] sm:$0x1] %vm1504, %v3209
        %3246 = vst.msk [vmem:[#allocation2 + $0x67] sm:$0x1] %vm1504, %v3211
        %3247 = vst.msk [vmem:[#allocation2 + $0x6f] sm:$0x1] %vm1504, %v3213
        %3248 = vst.msk [vmem:[#allocation2 + $0x77] sm:$0x1] %vm1504, %v3215
        %3249 = vst.msk [vmem:[#allocation2 + $0x7f] sm:$0x1] %vm1504, %v3217
        %v3250 = vld [vmem:[#allocation2] sm:$0xff]
        %v3251 = vld [vmem:[#allocation2 + $0x8] sm:$0xff]
        %v3252 = vld [vmem:[#allocation2 + $0x10] sm:$0xff]
        %v3253 = vld [vmem:[#allocation2 + $0x18] sm:$0xff]
        %3254 = vxpose.xlu0.b32.start [1/16] %v3250, 128
        %3255 = vxpose.xlu0.b32.cont [2/16] %v3251, 128
        %3256 = vxpose.xlu0.b32.cont [3/16] %v3252, 128
        %3257 = vxpose.xlu0.b32.cont [4/16] %v3253, 128
        %3258 = vxpose.xlu0.b32.cont [5/16] 0.0, 128
        %3259 = vxpose.xlu0.b32.cont [6/16] 0.0, 128
        %3260 = vxpose.xlu0.b32.cont [7/16] 0.0, 128
        %3261 = vxpose.xlu0.b32.cont [8/16] 0.0, 128
        %3262 = vxpose.xlu0.b32.cont [9/16] 0.0, 128
        %3263 = vxpose.xlu0.b32.cont [10/16] 0.0, 128
        %3264 = vxpose.xlu0.b32.cont [11/16] 0.0, 128
        %3265 = vxpose.xlu0.b32.cont [12/16] 0.0, 128
        %3266 = vxpose.xlu0.b32.cont [13/16] 0.0, 128
        %3267 = vxpose.xlu0.b32.cont [14/16] 0.0, 128
        %3268 = vxpose.xlu0.b32.cont [15/16] 0.0, 128
        %3269 = vxpose.xlu0.b32.end [16/16] 0.0, 128
        %v3270 = vpop.trf.xlu0
        %v3271 = vpop.trf.xlu0
        %v3272 = vpop.trf.xlu0
        %v3273 = vpop.trf.xlu0
        %v3274 = vpop.trf.xlu0
        %v3275 = vpop.trf.xlu0
        %v3276 = vpop.trf.xlu0
        %v3277 = vpop.trf.xlu0
        %v3278 = vpop.trf.xlu0
        %v3279 = vpop.trf.xlu0
        %v3280 = vpop.trf.xlu0
        %v3281 = vpop.trf.xlu0
        %v3282 = vpop.trf.xlu0
        %v3283 = vpop.trf.xlu0
        %v3284 = vpop.trf.xlu0
        %v3285 = vpop.trf.xlu0
        %v3286 = vld [vmem:[%s454] sm:$0xff]
        %v3287 = vld [vmem:[%s454 + $0x8] sm:$0xff]
        %v3288 = vld [vmem:[%s454 + $0x10] sm:$0xff]
        %v3289 = vld [vmem:[%s454 + $0x18] sm:$0xff]
        %3290 = vxpose.xlu0.b32.start [1/16] %v3286, 128
        %3291 = vxpose.xlu0.b32.cont [2/16] %v3287, 128
        %3292 = vxpose.xlu0.b32.cont [3/16] %v3288, 128
        %3293 = vxpose.xlu0.b32.cont [4/16] %v3289, 128
        %3294 = vxpose.xlu0.b32.cont [5/16] 0.0, 128
        %3295 = vxpose.xlu0.b32.cont [6/16] 0.0, 128
        %3296 = vxpose.xlu0.b32.cont [7/16] 0.0, 128
        %3297 = vxpose.xlu0.b32.cont [8/16] 0.0, 128
        %3298 = vxpose.xlu0.b32.cont [9/16] 0.0, 128
        %3299 = vxpose.xlu0.b32.cont [10/16] 0.0, 128
        %3300 = vxpose.xlu0.b32.cont [11/16] 0.0, 128
        %3301 = vxpose.xlu0.b32.cont [12/16] 0.0, 128
        %3302 = vxpose.xlu0.b32.cont [13/16] 0.0, 128
        %3303 = vxpose.xlu0.b32.cont [14/16] 0.0, 128
        %3304 = vxpose.xlu0.b32.cont [15/16] 0.0, 128
        %3305 = vxpose.xlu0.b32.end [16/16] 0.0, 128
        %v3306 = vpop.trf.xlu0
        %v3307 = vpop.trf.xlu0
        %v3308 = vpop.trf.xlu0
        %v3309 = vpop.trf.xlu0
        %v3310 = vpop.trf.xlu0
        %v3311 = vpop.trf.xlu0
        %v3312 = vpop.trf.xlu0
        %v3313 = vpop.trf.xlu0
        %v3314 = vpop.trf.xlu0
        %v3315 = vpop.trf.xlu0
        %v3316 = vpop.trf.xlu0
        %v3317 = vpop.trf.xlu0
        %v3318 = vpop.trf.xlu0
        %v3319 = vpop.trf.xlu0
        %v3320 = vpop.trf.xlu0
        %v3321 = vpop.trf.xlu0
        %v3322 = vld [vmem:[%s494] sm:$0xff]
        %v3323 = vld [vmem:[%s494 + $0x8] sm:$0xff]
        %v3324 = vld [vmem:[%s494 + $0x10] sm:$0xff]
        %v3325 = vld [vmem:[%s494 + $0x18] sm:$0xff]
        %3326 = vxpose.xlu0.b32.start [1/16] %v3322, 128
        %3327 = vxpose.xlu0.b32.cont [2/16] %v3323, 128
        %3328 = vxpose.xlu0.b32.cont [3/16] %v3324, 128
        %3329 = vxpose.xlu0.b32.cont [4/16] %v3325, 128
        %3330 = vxpose.xlu0.b32.cont [5/16] 0.0, 128
        %3331 = vxpose.xlu0.b32.cont [6/16] 0.0, 128
        %3332 = vxpose.xlu0.b32.cont [7/16] 0.0, 128
        %3333 = vxpose.xlu0.b32.cont [8/16] 0.0, 128
        %3334 = vxpose.xlu0.b32.cont [9/16] 0.0, 128
        %3335 = vxpose.xlu0.b32.cont [10/16] 0.0, 128
        %3336 = vxpose.xlu0.b32.cont [11/16] 0.0, 128
        %3337 = vxpose.xlu0.b32.cont [12/16] 0.0, 128
        %3338 = vxpose.xlu0.b32.cont [13/16] 0.0, 128
        %3339 = vxpose.xlu0.b32.cont [14/16] 0.0, 128
        %3340 = vxpose.xlu0.b32.cont [15/16] 0.0, 128
        %3341 = vxpose.xlu0.b32.end [16/16] 0.0, 128
        %v3342 = vpop.trf.xlu0
        %v3343 = vpop.trf.xlu0
        %v3344 = vpop.trf.xlu0
        %v3345 = vpop.trf.xlu0
        %v3346 = vpop.trf.xlu0
        %v3347 = vpop.trf.xlu0
        %v3348 = vpop.trf.xlu0
        %v3349 = vpop.trf.xlu0
        %v3350 = vpop.trf.xlu0
        %v3351 = vpop.trf.xlu0
        %v3352 = vpop.trf.xlu0
        %v3353 = vpop.trf.xlu0
        %v3354 = vpop.trf.xlu0
        %v3355 = vpop.trf.xlu0
        %v3356 = vpop.trf.xlu0
        %v3357 = vpop.trf.xlu0
        %v3358 = vld [vmem:[%s534] sm:$0xff]
        %v3359 = vld [vmem:[%s534 + $0x8] sm:$0xff]
        %v3360 = vld [vmem:[%s534 + $0x10] sm:$0xff]
        %v3361 = vld [vmem:[%s534 + $0x18] sm:$0xff]
        %3362 = vxpose.xlu0.b32.start [1/16] %v3358, 128
        %3363 = vxpose.xlu0.b32.cont [2/16] %v3359, 128
        %3364 = vxpose.xlu0.b32.cont [3/16] %v3360, 128
        %3365 = vxpose.xlu0.b32.cont [4/16] %v3361, 128
        %3366 = vxpose.xlu0.b32.cont [5/16] 0.0, 128
        %3367 = vxpose.xlu0.b32.cont [6/16] 0.0, 128
        %3368 = vxpose.xlu0.b32.cont [7/16] 0.0, 128
        %3369 = vxpose.xlu0.b32.cont [8/16] 0.0, 128
        %3370 = vxpose.xlu0.b32.cont [9/16] 0.0, 128
        %3371 = vxpose.xlu0.b32.cont [10/16] 0.0, 128
        %3372 = vxpose.xlu0.b32.cont [11/16] 0.0, 128
        %3373 = vxpose.xlu0.b32.cont [12/16] 0.0, 128
        %3374 = vxpose.xlu0.b32.cont [13/16] 0.0, 128
        %3375 = vxpose.xlu0.b32.cont [14/16] 0.0, 128
        %3376 = vxpose.xlu0.b32.cont [15/16] 0.0, 128
        %3377 = vxpose.xlu0.b32.end [16/16] 0.0, 128
        %v3378 = vpop.trf.xlu0
        %v3379 = vpop.trf.xlu0
        %v3380 = vpop.trf.xlu0
        %v3381 = vpop.trf.xlu0
        %v3382 = vpop.trf.xlu0
        %v3383 = vpop.trf.xlu0
        %v3384 = vpop.trf.xlu0
        %v3385 = vpop.trf.xlu0
        %v3386 = vpop.trf.xlu0
        %v3387 = vpop.trf.xlu0
        %v3388 = vpop.trf.xlu0
        %v3389 = vpop.trf.xlu0
        %v3390 = vpop.trf.xlu0
        %v3391 = vpop.trf.xlu0
        %v3392 = vpop.trf.xlu0
        %v3393 = vpop.trf.xlu0
        %3394 = vst.msk [vmem:[%s346] sm:$0xff] %vm1270, %v3270
        %3395 = vst.msk [vmem:[%s346 + $0x8] sm:$0xff] %vm1270, %v3306
        %3396 = vst.msk [vmem:[%s346 + $0x10] sm:$0xff] %vm1270, %v3342
        %3397 = vst.msk [vmem:[%s346 + $0x18] sm:$0xff] %vm1270, %v3378
        %3398 = vst.msk [vmem:[%s346 + $0x20] sm:$0xff] %vm1270, %v3271
        %3399 = vst.msk [vmem:[%s346 + $0x28] sm:$0xff] %vm1270, %v3307
        %3400 = vst.msk [vmem:[%s346 + $0x30] sm:$0xff] %vm1270, %v3343
        %3401 = vst.msk [vmem:[%s346 + $0x38] sm:$0xff] %vm1270, %v3379
        %3402 = vst.msk [vmem:[%s346 + $0x40] sm:$0xff] %vm1270, %v3272
        %3403 = vst.msk [vmem:[%s346 + $0x48] sm:$0xff] %vm1270, %v3308
        %3404 = vst.msk [vmem:[%s346 + $0x50] sm:$0xff] %vm1270, %v3344
        %3405 = vst.msk [vmem:[%s346 + $0x58] sm:$0xff] %vm1270, %v3380
        %s3406 = sand.u32 %s206, 1
        %s3407 = scalar_lea.sflag [#allocation5], %s3406
        %s3408 = sand.u32 %s206, 1
        %s3409 = smul.addr %s3408, 96
        %s3410 = scalar_lea.vmem [#allocation4], %s3409
        %p3411 = scmp.lt.s32.totalorder %s27, 1
        %s3412 = scalar_select %p3411, %s27, 1
        %p3413 = scmp.lt.s32.totalorder %s28, 0
        %s3414 = scalar_select %p3413, %s28, 0
        %s3415 = sadd.s32 %s3414, %s3412
        %s3416 = scalar_lea.vmem %s8, %s3415
        // Predicated region
        $region49: #{mim_forward.1} parent=47 // pred_check
          %p3417 = pneg %p216
        $region50: #{mim_forward.1} parent=47 // pred_check_branch
          %3419 = sbr.rel (%p3417) target = $region52
        $region51: #{mim_forward.1} parent=47 // pred_region
          %s3420 = smul.u32 4, %s28
          %s3422 = ssub.s32 1536, 1536
          %3423 = vsyncadd %s3407, %s3422
          %s3424 = smul.addr %s27, 12
          %s3425 = sadd.s32 %s3420, %s3424
          %s3426 = smul.addr %s3425, 128
          %s3427 = scalar_lea.hbm %s7, %s3426
          %s3428 = sshll.u32 %s3410, 4
          %s3429 = int_to_ptr.vmem [resolvable:$true] %s3428
          %3434 = dma.vmem_to_hbm [thread:$0]  %s3429, 1536, %s3427, %s3407, 128, 128, 8
        $region52: #{mim_forward.1} parent=47 // pred_fallthru
          _
        // Predicated region
        $region53: #{mim_forward.1} parent=47 // pred_check
          %p3435 = pneg %p244
        $region54: #{mim_forward.1} parent=47 // pred_check_branch
          %3437 = sbr.rel (%p3435) target = $region56
        $region55: #{mim_forward.1} parent=47 // pred_region
          _
        $region56: #{mim_forward.1} parent=47 // pred_fallthru
          _
      $region48: #{mim_forward.1} parent=5 // pred_fallthru
        _
      %p3438 = scmp.le.s32.totalorder 2, %s18
      // Predicated region
      $region57: #{mim_forward.1} parent=5 // pred_check
        %p3439 = pneg %p3438
      $region58: #{mim_forward.1} parent=5 // pred_check_branch
        %3441 = sbr.rel (%p3439) target = $region60
      $region59: #{mim_forward.1} parent=5 // pred_region
        %s3442 = ssub.s32 %s18, 2
        // Predicated region
        $region61: #{mim_forward.1} parent=59 // pred_check
          %p3443 = pneg %p222
        $region62: #{mim_forward.1} parent=59 // pred_check_branch
          %3445 = sbr.rel (%p3443) target = $region64
        $region63: #{mim_forward.1} parent=59 // pred_region
          %s3446 = sand.u32 %s207, 1
          %s3447 = scalar_lea.sflag [#allocation5], %s3446
          %s3448 = sand.u32 %s207, 1
          %s3449 = smul.addr %s3448, 96
          %s3450 = scalar_lea.vmem [#allocation4], %s3449
          %3451 = dma.done %s3447, 1536
        $region64: #{mim_forward.1} parent=59 // pred_fallthru
          _
        // Predicated region
        $region65: #{mim_forward.1} parent=59 // pred_check
          %p3452 = pneg %p250
        $region66: #{mim_forward.1} parent=59 // pred_check_branch
          %3454 = sbr.rel (%p3452) target = $region68
        $region67: #{mim_forward.1} parent=59 // pred_region
          %p3455 = scmp.lt.s32.totalorder %s29, 1
          %s3456 = scalar_select %p3455, %s29, 1
          %p3457 = scmp.lt.s32.totalorder %s30, 0
          %s3458 = scalar_select %p3457, %s30, 0
          %s3459 = sadd.s32 %s3458, %s3456
          %s3460 = scalar_lea.vmem %s8, %s3459
        $region68: #{mim_forward.1} parent=59 // pred_fallthru
          _
      $region60: #{mim_forward.1} parent=5 // pred_fallthru
        _
    $region6: #{mim_forward.1} parent=1 // loop_footer
      %s22 = sadd.s32 1, %s18
    $region7: #{mim_forward.1} parent=1 // loop_footer_branch
      %17 = sbr.rel target = $region3
    $region8: #{mim_forward.1} parent=1 // loop_exit
      _
    %3461 = vsyncpa [#allocation5], 1
    %s3462 = scalar_lea.sflag [#allocation5], 1
    %3463 = vsyncpa %s3462, 1

</llo_original>
